<compile_context>
chip_gen: v7x
topology: tpu7x:2x2x1
jax: 0.10.0
libtpu: 0.0.40
codegen_flags: <defaults>
</compile_context>

<pallas_src>
import functools

import jax
import jax.numpy as jnp
from jax.experimental import pallas as pl
from jax.experimental.pallas import tpu as pltpu


def _funnel_block_kernel(
    x_ref,      # (1, S, E)    one batch element
    wq_ref,     # (E, E)       block-diag kron(I_H, Wq^T)
    wk_ref,     # (E, E)
    wv_ref,     # (E, E)
    hmask_ref,  # (H, E)       0/1 head-selector rows
    wo_ref,     # (E, E)       fc_out.weight^T
    bo_ref,     # (1, E)       fc_out.bias
    gamma_ref,  # (1, E)       LayerNorm weight
    beta_ref,   # (1, E)       LayerNorm bias
    wt_ref,     # (E, FE)      transition.weight^T
    bt_ref,     # (1, FE)      transition.bias
    pool_ref,   # (S//P, S)    average-pooling matrix (rows of 1/P)
    out_ref,    # (1, S//P, FE)
    *,
    scale,
    eps,
):
    x = x_ref[0].astype(jnp.float32)                          # (S, E)

    # --- multi-head attention (block-diagonal projections, head masks) ----
    q = jnp.dot(x, wq_ref[...], preferred_element_type=jnp.float32)
    k = jnp.dot(x, wk_ref[...], preferred_element_type=jnp.float32)
    v = jnp.dot(x, wv_ref[...], preferred_element_type=jnp.float32)

    m = hmask_ref[...][:, None, :]                            # (H, 1, E)
    qm = q[None, :, :] * m                                    # (H, S, E)
    km = k[None, :, :] * m
    vm = v[None, :, :] * m

    energy = jnp.einsum("hqe,hke->hqk", qm, km,
                        preferred_element_type=jnp.float32) * scale
    e_max = jnp.max(energy, axis=-1, keepdims=True)
    p = jnp.exp(energy - e_max)
    attn = p / jnp.sum(p, axis=-1, keepdims=True)             # (H, S, S)

    ctx_h = jnp.einsum("hqk,hke->hqe", attn, vm,
                       preferred_element_type=jnp.float32)    # (H, S, E)
    ctx = jnp.sum(ctx_h, axis=0)                              # (S, E) head concat

    att_out = jnp.dot(ctx, wo_ref[...],
                      preferred_element_type=jnp.float32) + bo_ref[...]

    # --- residual + LayerNorm (dropout = identity at inference) -----------
    res = att_out + x
    mu = jnp.mean(res, axis=-1, keepdims=True)
    var = jnp.mean((res - mu) ** 2, axis=-1, keepdims=True)
    ln = (res - mu) * jax.lax.rsqrt(var + eps) * gamma_ref[...] + beta_ref[...]

    # --- transition + AvgPool1d(pool_size, stride=pool_size) over seq -----
    trans = jnp.dot(ln, wt_ref[...],
                    preferred_element_type=jnp.float32) + bt_ref[...]
    pooled = jnp.dot(pool_ref[...], trans,
                     preferred_element_type=jnp.float32)      # (S//P, FE)

    out_ref[0] = pooled.astype(out_ref.dtype)


def _funnel_block_forward(x, layer, pool_size):
    """One FunnelAttentionBlock: (B, S, E) -> (B, S//pool_size, FE)."""
    B, S, E = x.shape
    FE = layer["wt_t"].shape[1]
    H = layer["hmask"].shape[0]
    P = pool_size
    assert S % P == 0, "sequence length must be divisible by pool_size"
    S_out = S // P

    # AvgPool1d(kernel=P, stride=P) as a matmul matrix (rows of 1/P).
    pool_mat = jnp.kron(jnp.eye(S_out, dtype=jnp.float32),
                        jnp.full((1, P), 1.0 / P, jnp.float32))  # (S_out, S)

    kernel = functools.partial(_funnel_block_kernel,
                               scale=1.0 / (E ** 0.5), eps=1e-5)
    inv = lambda b: (0, 0)  # grid-invariant parameter blocks

    return pl.pallas_call(
        kernel,
        out_shape=jax.ShapeDtypeStruct((B, S_out, FE), x.dtype),
        grid_spec=pltpu.PrefetchScalarGridSpec(
            num_scalar_prefetch=0,
            grid=(B,),
            in_specs=[
                pl.BlockSpec((1, S, E), lambda b: (b, 0, 0)),   # x
                pl.BlockSpec((E, E), inv),                      # Wq block-diag
                pl.BlockSpec((E, E), inv),                      # Wk block-diag
                pl.BlockSpec((E, E), inv),                      # Wv block-diag
                pl.BlockSpec((H, E), inv),                      # head mask
                pl.BlockSpec((E, E), inv),                      # fc_out W^T
                pl.BlockSpec((1, E), inv),                      # fc_out b
                pl.BlockSpec((1, E), inv),                      # LN gamma
                pl.BlockSpec((1, E), inv),                      # LN beta
                pl.BlockSpec((E, FE), inv),                     # transition W^T
                pl.BlockSpec((1, FE), inv),                     # transition b
                pl.BlockSpec((S_out, S), inv),                  # pooling matrix
            ],
            out_specs=pl.BlockSpec((1, S_out, FE), lambda b: (b, 0, 0)),
        ),
        compiler_params=pltpu.CompilerParams(
            dimension_semantics=("parallel",),  # batch axis -> megacore sharding
        ),
    )(x, layer["wq_blk"], layer["wk_blk"], layer["wv_blk"], layer["hmask"],
      layer["wo_t"], layer["bo"], layer["gamma"], layer["beta"],
      layer["wt_t"], layer["bt"], pool_mat)


def funnel_transformer_forward(x, kernel_layers, pool_size, mask=None):
    """FunnelTransformerLayer.forward. `mask` ignored (treated as all-valid)."""
    del mask
    for layer in kernel_layers:
        x = _funnel_block_forward(x, layer, pool_size)
    return x


# ---------------------------------------------------------------------------
# Parameter construction + pure-JAX reference (PyTorch semantics).
# ---------------------------------------------------------------------------
def make_params(key, embed_size, num_heads, num_layers, forward_expansion):
    D = embed_size // num_heads
    FE = forward_expansion * embed_size
    eye_h = jnp.eye(num_heads, dtype=jnp.float32)
    hmask = jnp.kron(eye_h, jnp.ones((1, D), jnp.float32))       # (H, E)

    raw_layers, kernel_layers = [], []
    for _ in range(num_layers):
        key, *ks = jax.random.split(key, 10)

        def u(k, shape, fan_in):
            b = 1.0 / (fan_in ** 0.5)
            return jax.random.uniform(k, shape, jnp.float32, -b, b)

        Wq = u(ks[0], (D, D), D)
        Wk = u(ks[1], (D, D), D)
        Wv = u(ks[2], (D, D), D)
        Wo = u(ks[3], (embed_size, embed_size), embed_size)
        bo = u(ks[4], (embed_size,), embed_size)
        gamma = 1.0 + 0.1 * jax.random.normal(ks[5], (embed_size,), jnp.float32)
        beta = 0.1 * jax.random.normal(ks[6], (embed_size,), jnp.float32)
        Wt = u(ks[7], (FE, embed_size), embed_size)
        bt = u(ks[8], (FE,), embed_size)

        raw_layers.append(dict(Wq=Wq, Wk=Wk, Wv=Wv, Wo=Wo, bo=bo,
                               gamma=gamma, beta=beta, Wt=Wt, bt=bt))
        kernel_layers.append(dict(
            wq_blk=jnp.kron(eye_h, Wq.T),          # (E, E) block-diagonal
            wk_blk=jnp.kron(eye_h, Wk.T),
            wv_blk=jnp.kron(eye_h, Wv.T),
            hmask=hmask,
            wo_t=Wo.T,
            bo=bo.reshape(1, -1),
            gamma=gamma.reshape(1, -1),
            beta=beta.reshape(1, -1),
            wt_t=Wt.T,
            bt=bt.reshape(1, -1),
        ))
    return raw_layers, kernel_layers


def _reference_forward(x, raw_layers, num_heads, pool_size, eps=1e-5):
    for p in raw_layers:
        B, S, E = x.shape
        D = E // num_heads
        xh = x.reshape(B, S, num_heads, D)
        q = xh @ p["Wq"].T
        k = xh @ p["Wk"].T
        v = xh @ p["Wv"].T
        energy = jnp.einsum("bqhd,bkhd->bhqk", q, k)
        attn = jax.nn.softmax(energy / (E ** 0.5), axis=-1)
        ctx = jnp.einsum("bhqk,bkhd->bqhd", attn, v).reshape(B, S, E)
        att_out = ctx @ p["Wo"].T + p["bo"]
        res = att_out + x
        mu = res.mean(-1, keepdims=True)
        var = ((res - mu) ** 2).mean(-1, keepdims=True)
        ln = (res - mu) / jnp.sqrt(var + eps) * p["gamma"] + p["beta"]
        trans = ln @ p["Wt"].T + p["bt"]
        S_out = S // pool_size
        x = trans.reshape(B, S_out, pool_size, trans.shape[-1]).mean(axis=2)
    return x


if __name__ == "__main__":
    # Small shapes consistent with the module's globals (num_heads=8, 4 layers).
    embed_size = 128          # lane-dense (multiple of 128), head_dim = 16
    num_heads = 8
    num_layers = 4
    pool_size = 2
    forward_expansion = 1     # required for num_layers > 1 to be shape-consistent
    B, S = 2, 32              # S divisible by pool_size ** num_layers = 16

    key = jax.random.PRNGKey(0)
    key, kx = jax.random.split(key)
    x = jax.random.normal(kx, (B, S, embed_size), jnp.float32)

    raw_layers, kernel_layers = make_params(
        key, embed_size, num_heads, num_layers, forward_expansion)

    out = funnel_transformer_forward(x, kernel_layers, pool_size, mask=None)
    out = jax.block_until_ready(out)

    ref = _reference_forward(x, raw_layers, num_heads, pool_size)
    expected_shape = (B, S // pool_size ** num_layers,
                      forward_expansion * embed_size)
    assert out.shape == expected_shape, (out.shape, expected_shape)
    assert jnp.allclose(out, ref, atol=1e-3, rtol=1e-3), (
        "mismatch vs reference: max abs diff = %g"
        % float(jnp.max(jnp.abs(out - ref))))

    print("KERNEL_OK")
</pallas_src>

<mosaic_0001>
module attributes {stable_mosaic.version = 11 : i64} {
  func.func @_funnel_block_kernel(%arg0: i32, %arg1: memref<1x32x128xf32, #tpu.memory_space<vmem>>, %arg2: memref<128x128xf32, #tpu.memory_space<vmem>>, %arg3: memref<128x128xf32, #tpu.memory_space<vmem>>, %arg4: memref<128x128xf32, #tpu.memory_space<vmem>>, %arg5: memref<8x128xf32, #tpu.memory_space<vmem>>, %arg6: memref<128x128xf32, #tpu.memory_space<vmem>>, %arg7: memref<1x128xf32, #tpu.memory_space<vmem>>, %arg8: memref<1x128xf32, #tpu.memory_space<vmem>>, %arg9: memref<1x128xf32, #tpu.memory_space<vmem>>, %arg10: memref<128x128xf32, #tpu.memory_space<vmem>>, %arg11: memref<1x128xf32, #tpu.memory_space<vmem>>, %arg12: memref<16x32xf32, #tpu.memory_space<vmem>>, %arg13: memref<1x16x128xf32, #tpu.memory_space<vmem>>) attributes {dimension_semantics = [#tpu.dimension_semantics<parallel>], iteration_bounds = array<i64: 2>, scalar_prefetch = 0 : i64, scratch_operands = 0 : i64, tpu.core_type = #tpu.core_type<tc>, window_params = [{transform_indices = @transform_0, window_bounds = array<i64: 1, 32, 128>}, {pipeline_mode = #tpu.pipeline_mode<synchronous>, transform_indices = @transform_1, window_bounds = array<i64: 128, 128>}, {pipeline_mode = #tpu.pipeline_mode<synchronous>, transform_indices = @transform_2, window_bounds = array<i64: 128, 128>}, {pipeline_mode = #tpu.pipeline_mode<synchronous>, transform_indices = @transform_3, window_bounds = array<i64: 128, 128>}, {pipeline_mode = #tpu.pipeline_mode<synchronous>, transform_indices = @transform_4, window_bounds = array<i64: 8, 128>}, {pipeline_mode = #tpu.pipeline_mode<synchronous>, transform_indices = @transform_5, window_bounds = array<i64: 128, 128>}, {pipeline_mode = #tpu.pipeline_mode<synchronous>, transform_indices = @transform_6, window_bounds = array<i64: 1, 128>}, {pipeline_mode = #tpu.pipeline_mode<synchronous>, transform_indices = @transform_7, window_bounds = array<i64: 1, 128>}, {pipeline_mode = #tpu.pipeline_mode<synchronous>, transform_indices = @transform_8, window_bounds = array<i64: 1, 128>}, {pipeline_mode = #tpu.pipeline_mode<synchronous>, transform_indices = @transform_9, window_bounds = array<i64: 128, 128>}, {pipeline_mode = #tpu.pipeline_mode<synchronous>, transform_indices = @transform_10, window_bounds = array<i64: 1, 128>}, {pipeline_mode = #tpu.pipeline_mode<synchronous>, transform_indices = @transform_11, window_bounds = array<i64: 16, 32>}, {transform_indices = @transform_12, window_bounds = array<i64: 1, 16, 128>}]} {
    %c0 = arith.constant 0 : index
    %c0_0 = arith.constant 0 : index
    %c0_1 = arith.constant 0 : index
    %0 = vector.load %arg1[%c0, %c0_0, %c0_1] : memref<1x32x128xf32, #tpu.memory_space<vmem>>, vector<1x32x128xf32>
    %1 = vector.shape_cast %0 : vector<1x32x128xf32> to vector<32x128xf32>
    %c0_2 = arith.constant 0 : index
    %c0_3 = arith.constant 0 : index
    %2 = vector.load %arg2[%c0_2, %c0_3] : memref<128x128xf32, #tpu.memory_space<vmem>>, vector<128x128xf32>
    %cst = arith.constant dense<0.000000e+00> : vector<32x128xf32>
    %3 = tpu.matmul %1, %2, %cst {dimension_numbers = #tpu.dot_dimension_numbers<[1], [0], [0], [1], [0, 0, 1, 1], [], []>} : vector<32x128xf32>, vector<128x128xf32>, vector<32x128xf32> -> vector<32x128xf32>
    %c0_4 = arith.constant 0 : index
    %c0_5 = arith.constant 0 : index
    %4 = vector.load %arg3[%c0_4, %c0_5] : memref<128x128xf32, #tpu.memory_space<vmem>>, vector<128x128xf32>
    %cst_6 = arith.constant dense<0.000000e+00> : vector<32x128xf32>
    %5 = tpu.matmul %1, %4, %cst_6 {dimension_numbers = #tpu.dot_dimension_numbers<[1], [0], [0], [1], [0, 0, 1, 1], [], []>} : vector<32x128xf32>, vector<128x128xf32>, vector<32x128xf32> -> vector<32x128xf32>
    %c0_7 = arith.constant 0 : index
    %c0_8 = arith.constant 0 : index
    %6 = vector.load %arg4[%c0_7, %c0_8] : memref<128x128xf32, #tpu.memory_space<vmem>>, vector<128x128xf32>
    %cst_9 = arith.constant dense<0.000000e+00> : vector<32x128xf32>
    %7 = tpu.matmul %1, %6, %cst_9 {dimension_numbers = #tpu.dot_dimension_numbers<[1], [0], [0], [1], [0, 0, 1, 1], [], []>} : vector<32x128xf32>, vector<128x128xf32>, vector<32x128xf32> -> vector<32x128xf32>
    %c0_10 = arith.constant 0 : index
    %c0_11 = arith.constant 0 : index
    %8 = vector.load %arg5[%c0_10, %c0_11] : memref<8x128xf32, #tpu.memory_space<vmem>>, vector<8x128xf32>
    %9 = vector.shape_cast %8 : vector<8x128xf32> to vector<8x1x128xf32>
    %10 = vector.shape_cast %3 : vector<32x128xf32> to vector<1x32x128xf32>
    %11 = vector.broadcast %10 : vector<1x32x128xf32> to vector<8x32x128xf32>
    %12 = vector.broadcast %9 : vector<8x1x128xf32> to vector<8x32x128xf32>
    %13 = arith.mulf %11, %12 : vector<8x32x128xf32>
    %14 = vector.shape_cast %5 : vector<32x128xf32> to vector<1x32x128xf32>
    %15 = vector.broadcast %14 : vector<1x32x128xf32> to vector<8x32x128xf32>
    %16 = vector.broadcast %9 : vector<8x1x128xf32> to vector<8x32x128xf32>
    %17 = arith.mulf %15, %16 : vector<8x32x128xf32>
    %18 = vector.shape_cast %7 : vector<32x128xf32> to vector<1x32x128xf32>
    %19 = vector.broadcast %18 : vector<1x32x128xf32> to vector<8x32x128xf32>
    %20 = vector.broadcast %9 : vector<8x1x128xf32> to vector<8x32x128xf32>
    %21 = arith.mulf %19, %20 : vector<8x32x128xf32>
    "tpu.trace_start"() <{level = 10 : i32, message = "hqe,hke->hqk"}> : () -> ()
    %cst_12 = arith.constant dense<0.000000e+00> : vector<8x32x32xf32>
    %22 = tpu.matmul %13, %17, %cst_12 {dimension_numbers = #tpu.dot_dimension_numbers<[2], [2], [1], [1], [0, 0, 0, 1, 1, 1], [0], [0]>} : vector<8x32x128xf32>, vector<8x32x128xf32>, vector<8x32x32xf32> -> vector<8x32x32xf32>
    "tpu.trace_stop"() : () -> ()
    %cst_13 = arith.constant 0.0883883461 : f32
    %23 = vector.broadcast %cst_13 : f32 to vector<8x32x32xf32>
    %24 = arith.mulf %22, %23 : vector<8x32x32xf32>
    %cst_14 = arith.constant dense<0xFF800000> : vector<8x32xf32>
    %25 = vector.multi_reduction <maximumf>, %24, %cst_14 [2] : vector<8x32x32xf32> to vector<8x32xf32>
    %26 = vector.shape_cast %25 : vector<8x32xf32> to vector<8x32x1xf32>
    %27 = vector.broadcast %26 : vector<8x32x1xf32> to vector<8x32x32xf32>
    %28 = arith.subf %24, %27 : vector<8x32x32xf32>
    %29 = math.exp %28 : vector<8x32x32xf32>
    %cst_15 = arith.constant dense<0.000000e+00> : vector<8x32xf32>
    %30 = vector.multi_reduction <add>, %29, %cst_15 [2] : vector<8x32x32xf32> to vector<8x32xf32>
    %31 = vector.shape_cast %30 : vector<8x32xf32> to vector<8x32x1xf32>
    %32 = vector.broadcast %31 : vector<8x32x1xf32> to vector<8x32x32xf32>
    %33 = arith.divf %29, %32 : vector<8x32x32xf32>
    "tpu.trace_start"() <{level = 10 : i32, message = "hqk,hke->hqe"}> : () -> ()
    %cst_16 = arith.constant dense<0.000000e+00> : vector<8x32x128xf32>
    %34 = tpu.matmul %33, %21, %cst_16 {dimension_numbers = #tpu.dot_dimension_numbers<[2], [1], [1], [2], [0, 0, 0, 1, 1, 2], [0], [0]>} : vector<8x32x32xf32>, vector<8x32x128xf32>, vector<8x32x128xf32> -> vector<8x32x128xf32>
    "tpu.trace_stop"() : () -> ()
    %cst_17 = arith.constant dense<0.000000e+00> : vector<32x128xf32>
    %35 = vector.multi_reduction <add>, %34, %cst_17 [0] : vector<8x32x128xf32> to vector<32x128xf32>
    %c0_18 = arith.constant 0 : index
    %c0_19 = arith.constant 0 : index
    %36 = vector.load %arg6[%c0_18, %c0_19] : memref<128x128xf32, #tpu.memory_space<vmem>>, vector<128x128xf32>
    %cst_20 = arith.constant dense<0.000000e+00> : vector<32x128xf32>
    %37 = tpu.matmul %35, %36, %cst_20 {dimension_numbers = #tpu.dot_dimension_numbers<[1], [0], [0], [1], [0, 0, 1, 1], [], []>} : vector<32x128xf32>, vector<128x128xf32>, vector<32x128xf32> -> vector<32x128xf32>
    %c0_21 = arith.constant 0 : index
    %c0_22 = arith.constant 0 : index
    %38 = vector.load %arg7[%c0_21, %c0_22] : memref<1x128xf32, #tpu.memory_space<vmem>>, vector<1x128xf32>
    %39 = vector.broadcast %38 : vector<1x128xf32> to vector<32x128xf32>
    %40 = arith.addf %37, %39 : vector<32x128xf32>
    %41 = arith.addf %40, %1 : vector<32x128xf32>
    %cst_23 = arith.constant dense<0.000000e+00> : vector<32xf32>
    %42 = vector.multi_reduction <add>, %41, %cst_23 [1] : vector<32x128xf32> to vector<32xf32>
    %43 = vector.shape_cast %42 : vector<32xf32> to vector<32x1xf32>
    %cst_24 = arith.constant 1.280000e+02 : f32
    %44 = vector.broadcast %cst_24 : f32 to vector<32x1xf32>
    %45 = arith.divf %43, %44 : vector<32x1xf32>
    %46 = vector.broadcast %45 : vector<32x1xf32> to vector<32x128xf32>
    %47 = arith.subf %41, %46 : vector<32x128xf32>
    %48 = arith.mulf %47, %47 : vector<32x128xf32>
    %cst_25 = arith.constant dense<0.000000e+00> : vector<32xf32>
    %49 = vector.multi_reduction <add>, %48, %cst_25 [1] : vector<32x128xf32> to vector<32xf32>
    %50 = vector.shape_cast %49 : vector<32xf32> to vector<32x1xf32>
    %cst_26 = arith.constant 1.280000e+02 : f32
    %51 = vector.broadcast %cst_26 : f32 to vector<32x1xf32>
    %52 = arith.divf %50, %51 : vector<32x1xf32>
    %53 = vector.broadcast %45 : vector<32x1xf32> to vector<32x128xf32>
    %54 = arith.subf %41, %53 : vector<32x128xf32>
    %cst_27 = arith.constant 9.99999974E-6 : f32
    %55 = vector.broadcast %cst_27 : f32 to vector<32x1xf32>
    %56 = arith.addf %52, %55 : vector<32x1xf32>
    %57 = math.rsqrt %56 : vector<32x1xf32>
    %58 = vector.broadcast %57 : vector<32x1xf32> to vector<32x128xf32>
    %59 = arith.mulf %54, %58 : vector<32x128xf32>
    %c0_28 = arith.constant 0 : index
    %c0_29 = arith.constant 0 : index
    %60 = vector.load %arg8[%c0_28, %c0_29] : memref<1x128xf32, #tpu.memory_space<vmem>>, vector<1x128xf32>
    %61 = vector.broadcast %60 : vector<1x128xf32> to vector<32x128xf32>
    %62 = arith.mulf %59, %61 : vector<32x128xf32>
    %c0_30 = arith.constant 0 : index
    %c0_31 = arith.constant 0 : index
    %63 = vector.load %arg9[%c0_30, %c0_31] : memref<1x128xf32, #tpu.memory_space<vmem>>, vector<1x128xf32>
    %64 = vector.broadcast %63 : vector<1x128xf32> to vector<32x128xf32>
    %65 = arith.addf %62, %64 : vector<32x128xf32>
    %c0_32 = arith.constant 0 : index
    %c0_33 = arith.constant 0 : index
    %66 = vector.load %arg10[%c0_32, %c0_33] : memref<128x128xf32, #tpu.memory_space<vmem>>, vector<128x128xf32>
    %cst_34 = arith.constant dense<0.000000e+00> : vector<32x128xf32>
    %67 = tpu.matmul %65, %66, %cst_34 {dimension_numbers = #tpu.dot_dimension_numbers<[1], [0], [0], [1], [0, 0, 1, 1], [], []>} : vector<32x128xf32>, vector<128x128xf32>, vector<32x128xf32> -> vector<32x128xf32>
    %c0_35 = arith.constant 0 : index
    %c0_36 = arith.constant 0 : index
    %68 = vector.load %arg11[%c0_35, %c0_36] : memref<1x128xf32, #tpu.memory_space<vmem>>, vector<1x128xf32>
    %69 = vector.broadcast %68 : vector<1x128xf32> to vector<32x128xf32>
    %70 = arith.addf %67, %69 : vector<32x128xf32>
    %c0_37 = arith.constant 0 : index
    %c0_38 = arith.constant 0 : index
    %71 = vector.load %arg12[%c0_37, %c0_38] : memref<16x32xf32, #tpu.memory_space<vmem>>, vector<16x32xf32>
    %cst_39 = arith.constant dense<0.000000e+00> : vector<16x128xf32>
    %72 = tpu.matmul %71, %70, %cst_39 {dimension_numbers = #tpu.dot_dimension_numbers<[1], [0], [0], [1], [0, 0, 1, 1], [], []>} : vector<16x32xf32>, vector<32x128xf32>, vector<16x128xf32> -> vector<16x128xf32>
    %c0_40 = arith.constant 0 : index
    %c0_41 = arith.constant 0 : index
    %c0_42 = arith.constant 0 : index
    %73 = vector.load %arg13[%c0_40, %c0_41, %c0_42] : memref<1x16x128xf32, #tpu.memory_space<vmem>>, vector<1x16x128xf32>
    %74 = vector.shape_cast %73 : vector<1x16x128xf32> to vector<16x128xf32>
    %75 = vector.shape_cast %72 : vector<16x128xf32> to vector<1x16x128xf32>
    tpu.vector_store %arg13[%c0_40, %c0_41, %c0_42], %75 {strides = array<i32>} : memref<1x16x128xf32, #tpu.memory_space<vmem>>, vector<1x16x128xf32>,
    return
  }
  func.func @transform_0(%arg0: i32) -> (i32, i32, i32) {
    %c0_i32 = arith.constant 0 : i32
    %c0_i32_0 = arith.constant 0 : i32
    %c0_i32_1 = arith.constant 0 : i32
    return %arg0, %c0_i32, %c0_i32_0 : i32, i32, i32
  }
  func.func @transform_1(%arg0: i32) -> (i32, i32) {
    %c0_i32 = arith.constant 0 : i32
    %c0_i32_0 = arith.constant 0 : i32
    %c0_i32_1 = arith.constant 0 : i32
    return %c0_i32, %c0_i32_0 : i32, i32
  }
  func.func @transform_2(%arg0: i32) -> (i32, i32) {
    %c0_i32 = arith.constant 0 : i32
    %c0_i32_0 = arith.constant 0 : i32
    %c0_i32_1 = arith.constant 0 : i32
    return %c0_i32, %c0_i32_0 : i32, i32
  }
  func.func @transform_3(%arg0: i32) -> (i32, i32) {
    %c0_i32 = arith.constant 0 : i32
    %c0_i32_0 = arith.constant 0 : i32
    %c0_i32_1 = arith.constant 0 : i32
    return %c0_i32, %c0_i32_0 : i32, i32
  }
  func.func @transform_4(%arg0: i32) -> (i32, i32) {
    %c0_i32 = arith.constant 0 : i32
    %c0_i32_0 = arith.constant 0 : i32
    %c0_i32_1 = arith.constant 0 : i32
    return %c0_i32, %c0_i32_0 : i32, i32
  }
  func.func @transform_5(%arg0: i32) -> (i32, i32) {
    %c0_i32 = arith.constant 0 : i32
    %c0_i32_0 = arith.constant 0 : i32
    %c0_i32_1 = arith.constant 0 : i32
    return %c0_i32, %c0_i32_0 : i32, i32
  }
  func.func @transform_6(%arg0: i32) -> (i32, i32) {
    %c0_i32 = arith.constant 0 : i32
    %c0_i32_0 = arith.constant 0 : i32
    %c0_i32_1 = arith.constant 0 : i32
    return %c0_i32, %c0_i32_0 : i32, i32
  }
  func.func @transform_7(%arg0: i32) -> (i32, i32) {
    %c0_i32 = arith.constant 0 : i32
    %c0_i32_0 = arith.constant 0 : i32
    %c0_i32_1 = arith.constant 0 : i32
    return %c0_i32, %c0_i32_0 : i32, i32
  }
  func.func @transform_8(%arg0: i32) -> (i32, i32) {
    %c0_i32 = arith.constant 0 : i32
    %c0_i32_0 = arith.constant 0 : i32
    %c0_i32_1 = arith.constant 0 : i32
    return %c0_i32, %c0_i32_0 : i32, i32
  }
  func.func @transform_9(%arg0: i32) -> (i32, i32) {
    %c0_i32 = arith.constant 0 : i32
    %c0_i32_0 = arith.constant 0 : i32
    %c0_i32_1 = arith.constant 0 : i32
    return %c0_i32, %c0_i32_0 : i32, i32
  }
  func.func @transform_10(%arg0: i32) -> (i32, i32) {
    %c0_i32 = arith.constant 0 : i32
    %c0_i32_0 = arith.constant 0 : i32
    %c0_i32_1 = arith.constant 0 : i32
    return %c0_i32, %c0_i32_0 : i32, i32
  }
  func.func @transform_11(%arg0: i32) -> (i32, i32) {
    %c0_i32 = arith.constant 0 : i32
    %c0_i32_0 = arith.constant 0 : i32
    %c0_i32_1 = arith.constant 0 : i32
    return %c0_i32, %c0_i32_0 : i32, i32
  }
  func.func @transform_12(%arg0: i32) -> (i32, i32, i32) {
    %c0_i32 = arith.constant 0 : i32
    %c0_i32_0 = arith.constant 0 : i32
    %c0_i32_1 = arith.constant 0 : i32
    return %arg0, %c0_i32, %c0_i32_0 : i32, i32, i32
  }
}

</mosaic_0001>

<llo_original>
// kernel: tpu_custom_call.1
$region0: #{tpu_custom_call.1}
  #allocation0 [shape = 'u32[]', space=smem, size = 0x4, offset = 0x4, fixed_abs, tag = 'smem constant byte address 0x4 - core index']
  #allocation1 [shape = 'u32[144,128]{1,0:T(1,128)}', space=vmem, size = 0x12000, scoped, tag = 'internal scratch']
  %s0 = inlined_call_operand.hbm [shape: f32[2,32,128], index: 0, kind: input, shape index: {}]
  %s1 = inlined_call_operand.hbm [shape: f32[128,128], index: 1, kind: input, shape index: {}]
  %s2 = inlined_call_operand.hbm [shape: f32[128,128], index: 2, kind: input, shape index: {}]
  %s3 = inlined_call_operand.hbm [shape: f32[128,128], index: 3, kind: input, shape index: {}]
  %s4 = inlined_call_operand.vmem [shape: f32[8,128], index: 4, kind: input, shape index: {}]
  %s5 = inlined_call_operand.hbm [shape: f32[128,128], index: 5, kind: input, shape index: {}]
  %s6 = inlined_call_operand.vmem [shape: f32[1,128], index: 6, kind: input, shape index: {}]
  %s7 = inlined_call_operand.vmem [shape: f32[1,128], index: 7, kind: input, shape index: {}]
  %s8 = inlined_call_operand.vmem [shape: f32[1,128], index: 8, kind: input, shape index: {}]
  %s9 = inlined_call_operand.hbm [shape: f32[128,128], index: 9, kind: input, shape index: {}]
  %s10 = inlined_call_operand.vmem [shape: f32[1,128], index: 10, kind: input, shape index: {}]
  %s11 = inlined_call_operand.vmem [shape: f32[16,32], index: 11, kind: input, shape index: {}]
  %s12 = inlined_call_operand.hbm [shape: f32[2,16,128], index: 12, kind: output, shape index: {}]
  %s13 = sld [smem:[#allocation0]]
  $region105: #{tpu_custom_call.1} parent=0
    _
  %s15 = ssub.s32 1, %s13
  %s16 = scalar_select 0, %s15, %s13
  $region1: #{tpu_custom_call.1} parent=0
    #allocation2 [shape = 'u8[32768]{0}', space=vmem, size = 0x8000, scoped, tag = 'input window, operand 0']
    #allocation3 [shape = 's32[2]{0}', space=sflag, size = 0x8, scoped, tag = 'scoped memory for tpu_custom_call.1']
    #allocation4 [shape = 's32[2]{0}', space=sflag, size = 0x8, scoped, tag = 'scoped memory for tpu_custom_call.1']
    #allocation5 [shape = 'u8[65536]{0}', space=vmem, size = 0x10000, scoped, tag = 'input window, operand 1, single buffered']
    #allocation6 [shape = 's32[1]{0}', space=sflag, size = 0x4, scoped, tag = 'scoped memory for tpu_custom_call.1']
    #allocation7 [shape = 'u8[65536]{0}', space=vmem, size = 0x10000, scoped, tag = 'input window, operand 2, single buffered']
    #allocation8 [shape = 'u8[65536]{0}', space=vmem, size = 0x10000, scoped, tag = 'input window, operand 3, single buffered']
    #allocation9 [shape = 's32[1]{0}', space=sflag, size = 0x4, scoped, tag = 'scoped memory for tpu_custom_call.1']
    #allocation10 [shape = 'u8[65536]{0}', space=vmem, size = 0x10000, scoped, tag = 'input window, operand 5, single buffered']
    #allocation11 [shape = 'u8[65536]{0}', space=vmem, size = 0x10000, scoped, tag = 'input window, operand 9, single buffered']
    #allocation12 [shape = 's32[1]{0}', space=sflag, size = 0x4, scoped, tag = 'scoped memory for tpu_custom_call.1']
    #allocation13 [shape = 'u8[16384]{0}', space=vmem, size = 0x4000, scoped, tag = 'output window, operand 0']
    %17 = vsyncpa [#allocation3], 0
    %s18 = scalar_lea.sflag [#allocation3], 1
    %19 = vsyncpa %s18, 0
    %20 = vsyncpa [#allocation6], 0
    %21 = vsyncpa [#allocation9], 0
    %22 = vsyncpa [#allocation12], 0
    %23 = vsyncpa [#allocation4], 0
    %s24 = scalar_lea.sflag [#allocation4], 1
    %25 = vsyncpa %s24, 0
    loop: start=0, step=1, limit=4
    $region2: #{tpu_custom_call.1} parent=1 // loop_pre_header
      _
    $region3: #{tpu_custom_call.1} parent=1 // loop_header
      %s27 = sphi 0, %s31
      %p28 = scmp.ge.s32.totalorder %s27, 4
      %s37 = sphi 0, %s39
      %s40 = sphi 0, %s37
      %s41 = sphi 0, %s40
      %s57 = sphi 0, %s41
      %s61 = sphi 0, %s61
      %s63 = sphi 0, %s61
      %s64 = sphi 0, %s63
      %s78 = sphi 0, %s64
      %s82 = sphi 0, %s82
      %s84 = sphi 0, %s82
      %s85 = sphi 0, %s84
      %s99 = sphi 0, %s85
      %s103 = sphi 0, %s103
      %s105 = sphi 0, %s103
      %s106 = sphi 0, %s105
      %s120 = sphi 0, %s106
      %s124 = sphi 0, %s124
      %s126 = sphi 0, %s124
      %s127 = sphi 0, %s126
      %s141 = sphi 0, %s127
      %s145 = sphi 0, %s145
      %s147 = sphi 0, %s145
      %s148 = sphi 0, %s147
      %s162 = sphi 0, %s148
      %s166 = sphi 0, %s166
      %s168 = sphi 0, %s166
      %s169 = sphi 0, %s168
      %s183 = sphi 0, %s169
      %s187 = sphi 0, %s187
      %s189 = sphi 0, %s187
      %s190 = sphi 0, %s189
      %s204 = sphi 0, %s190
      %s208 = sphi 0, %s208
      %s210 = sphi 0, %s208
      %s211 = sphi 0, %s210
      %s225 = sphi 0, %s211
      %s229 = sphi 0, %s229
      %s231 = sphi 0, %s229
      %s232 = sphi 0, %s231
      %s246 = sphi 0, %s232
      %s250 = sphi 0, %s250
      %s252 = sphi 0, %s250
      %s253 = sphi 0, %s252
      %s267 = sphi 0, %s253
      %s271 = sphi 0, %s271
      %s273 = sphi 0, %s271
      %s274 = sphi 0, %s273
      %s288 = sphi 0, %s274
      %s294 = sphi 0, %s296
      %s297 = sphi 0, %s294
      %s298 = sphi 0, %s297
      %s314 = sphi 0, %s298
    $region4: #{tpu_custom_call.1} parent=1 // loop_header_branch
      %30 = sbr.rel (%p28) target = $region8
    $region5: #{tpu_custom_call.1} parent=1 // loop_body
      %s32 = ssub.s32 %s27, 1
      %s33 = ssub.s32 %s27, 2
      %s34 = sadd.s32 %s27, 1
      %s35 = ssub.s32 %s27, %s34
      %p36 = scmp.eq.s32.totalorder %s35, 0
      %s38 = sadd.s32 %s37, 1
      %s39 = scalar_select %p36, %s37, %s38
      %p42 = pneg %p36
      %p43 = scmp.eq.s32.totalorder %s27, 1
      %p44 = por %p42, %p43
      %p45 = scmp.ne.s32.totalorder %s37, %s40
      %p46 = scmp.eq.s32.totalorder %s27, 0
      %p47 = por %p45, %p46
      %p48 = scmp.ne.s32.totalorder %s37, %s40
      %p49 = scmp.eq.s32.totalorder %s32, 1
      %p50 = por %p48, %p49
      %p51 = scmp.ne.s32.totalorder %s40, %s41
      %p52 = scmp.eq.s32.totalorder %s32, 0
      %p53 = por %p51, %p52
      %p54 = scmp.ne.s32.totalorder %s40, %s41
      %p55 = scmp.eq.s32.totalorder %s33, 1
      %p56 = por %p54, %p55
      %p58 = scmp.ne.s32.totalorder %s41, %s57
      %p59 = scmp.eq.s32.totalorder %s33, 0
      %p60 = por %p58, %p59
      %s62 = sadd.s32 %s61, 1
      %p65 = scmp.eq.s32.totalorder %s27, 1
      %p66 = scmp.ne.s32.totalorder %s61, %s63
      %p67 = scmp.eq.s32.totalorder %s27, 0
      %p68 = por %p66, %p67
      %p69 = scmp.ne.s32.totalorder %s61, %s63
      %p70 = scmp.eq.s32.totalorder %s32, 1
      %p71 = por %p69, %p70
      %p72 = scmp.ne.s32.totalorder %s63, %s64
      %p73 = scmp.eq.s32.totalorder %s32, 0
      %p74 = por %p72, %p73
      %p75 = scmp.ne.s32.totalorder %s63, %s64
      %p76 = scmp.eq.s32.totalorder %s33, 1
      %p77 = por %p75, %p76
      %p79 = scmp.ne.s32.totalorder %s64, %s78
      %p80 = scmp.eq.s32.totalorder %s33, 0
      %p81 = por %p79, %p80
      %s83 = sadd.s32 %s82, 1
      %p86 = scmp.eq.s32.totalorder %s27, 1
      %p87 = scmp.ne.s32.totalorder %s82, %s84
      %p88 = scmp.eq.s32.totalorder %s27, 0
      %p89 = por %p87, %p88
      %p90 = scmp.ne.s32.totalorder %s82, %s84
      %p91 = scmp.eq.s32.totalorder %s32, 1
      %p92 = por %p90, %p91
      %p93 = scmp.ne.s32.totalorder %s84, %s85
      %p94 = scmp.eq.s32.totalorder %s32, 0
      %p95 = por %p93, %p94
      %p96 = scmp.ne.s32.totalorder %s84, %s85
      %p97 = scmp.eq.s32.totalorder %s33, 1
      %p98 = por %p96, %p97
      %p100 = scmp.ne.s32.totalorder %s85, %s99
      %p101 = scmp.eq.s32.totalorder %s33, 0
      %p102 = por %p100, %p101
      %s104 = sadd.s32 %s103, 1
      %p107 = scmp.eq.s32.totalorder %s27, 1
      %p108 = scmp.ne.s32.totalorder %s103, %s105
      %p109 = scmp.eq.s32.totalorder %s27, 0
      %p110 = por %p108, %p109
      %p111 = scmp.ne.s32.totalorder %s103, %s105
      %p112 = scmp.eq.s32.totalorder %s32, 1
      %p113 = por %p111, %p112
      %p114 = scmp.ne.s32.totalorder %s105, %s106
      %p115 = scmp.eq.s32.totalorder %s32, 0
      %p116 = por %p114, %p115
      %p117 = scmp.ne.s32.totalorder %s105, %s106
      %p118 = scmp.eq.s32.totalorder %s33, 1
      %p119 = por %p117, %p118
      %p121 = scmp.ne.s32.totalorder %s106, %s120
      %p122 = scmp.eq.s32.totalorder %s33, 0
      %p123 = por %p121, %p122
      %s125 = sadd.s32 %s124, 1
      %p128 = scmp.eq.s32.totalorder %s27, 1
      %p129 = scmp.ne.s32.totalorder %s124, %s126
      %p130 = scmp.eq.s32.totalorder %s27, 0
      %p131 = por %p129, %p130
      %p132 = scmp.ne.s32.totalorder %s124, %s126
      %p133 = scmp.eq.s32.totalorder %s32, 1
      %p134 = por %p132, %p133
      %p135 = scmp.ne.s32.totalorder %s126, %s127
      %p136 = scmp.eq.s32.totalorder %s32, 0
      %p137 = por %p135, %p136
      %p138 = scmp.ne.s32.totalorder %s126, %s127
      %p139 = scmp.eq.s32.totalorder %s33, 1
      %p140 = por %p138, %p139
      %p142 = scmp.ne.s32.totalorder %s127, %s141
      %p143 = scmp.eq.s32.totalorder %s33, 0
      %p144 = por %p142, %p143
      %s146 = sadd.s32 %s145, 1
      %p149 = scmp.eq.s32.totalorder %s27, 1
      %p150 = scmp.ne.s32.totalorder %s145, %s147
      %p151 = scmp.eq.s32.totalorder %s27, 0
      %p152 = por %p150, %p151
      %p153 = scmp.ne.s32.totalorder %s145, %s147
      %p154 = scmp.eq.s32.totalorder %s32, 1
      %p155 = por %p153, %p154
      %p156 = scmp.ne.s32.totalorder %s147, %s148
      %p157 = scmp.eq.s32.totalorder %s32, 0
      %p158 = por %p156, %p157
      %p159 = scmp.ne.s32.totalorder %s147, %s148
      %p160 = scmp.eq.s32.totalorder %s33, 1
      %p161 = por %p159, %p160
      %p163 = scmp.ne.s32.totalorder %s148, %s162
      %p164 = scmp.eq.s32.totalorder %s33, 0
      %p165 = por %p163, %p164
      %s167 = sadd.s32 %s166, 1
      %p170 = scmp.eq.s32.totalorder %s27, 1
      %p171 = scmp.ne.s32.totalorder %s166, %s168
      %p172 = scmp.eq.s32.totalorder %s27, 0
      %p173 = por %p171, %p172
      %p174 = scmp.ne.s32.totalorder %s166, %s168
      %p175 = scmp.eq.s32.totalorder %s32, 1
      %p176 = por %p174, %p175
      %p177 = scmp.ne.s32.totalorder %s168, %s169
      %p178 = scmp.eq.s32.totalorder %s32, 0
      %p179 = por %p177, %p178
      %p180 = scmp.ne.s32.totalorder %s168, %s169
      %p181 = scmp.eq.s32.totalorder %s33, 1
      %p182 = por %p180, %p181
      %p184 = scmp.ne.s32.totalorder %s169, %s183
      %p185 = scmp.eq.s32.totalorder %s33, 0
      %p186 = por %p184, %p185
      %s188 = sadd.s32 %s187, 1
      %p191 = scmp.eq.s32.totalorder %s27, 1
      %p192 = scmp.ne.s32.totalorder %s187, %s189
      %p193 = scmp.eq.s32.totalorder %s27, 0
      %p194 = por %p192, %p193
      %p195 = scmp.ne.s32.totalorder %s187, %s189
      %p196 = scmp.eq.s32.totalorder %s32, 1
      %p197 = por %p195, %p196
      %p198 = scmp.ne.s32.totalorder %s189, %s190
      %p199 = scmp.eq.s32.totalorder %s32, 0
      %p200 = por %p198, %p199
      %p201 = scmp.ne.s32.totalorder %s189, %s190
      %p202 = scmp.eq.s32.totalorder %s33, 1
      %p203 = por %p201, %p202
      %p205 = scmp.ne.s32.totalorder %s190, %s204
      %p206 = scmp.eq.s32.totalorder %s33, 0
      %p207 = por %p205, %p206
      %s209 = sadd.s32 %s208, 1
      %p212 = scmp.eq.s32.totalorder %s27, 1
      %p213 = scmp.ne.s32.totalorder %s208, %s210
      %p214 = scmp.eq.s32.totalorder %s27, 0
      %p215 = por %p213, %p214
      %p216 = scmp.ne.s32.totalorder %s208, %s210
      %p217 = scmp.eq.s32.totalorder %s32, 1
      %p218 = por %p216, %p217
      %p219 = scmp.ne.s32.totalorder %s210, %s211
      %p220 = scmp.eq.s32.totalorder %s32, 0
      %p221 = por %p219, %p220
      %p222 = scmp.ne.s32.totalorder %s210, %s211
      %p223 = scmp.eq.s32.totalorder %s33, 1
      %p224 = por %p222, %p223
      %p226 = scmp.ne.s32.totalorder %s211, %s225
      %p227 = scmp.eq.s32.totalorder %s33, 0
      %p228 = por %p226, %p227
      %s230 = sadd.s32 %s229, 1
      %p233 = scmp.eq.s32.totalorder %s27, 1
      %p234 = scmp.ne.s32.totalorder %s229, %s231
      %p235 = scmp.eq.s32.totalorder %s27, 0
      %p236 = por %p234, %p235
      %p237 = scmp.ne.s32.totalorder %s229, %s231
      %p238 = scmp.eq.s32.totalorder %s32, 1
      %p239 = por %p237, %p238
      %p240 = scmp.ne.s32.totalorder %s231, %s232
      %p241 = scmp.eq.s32.totalorder %s32, 0
      %p242 = por %p240, %p241
      %p243 = scmp.ne.s32.totalorder %s231, %s232
      %p244 = scmp.eq.s32.totalorder %s33, 1
      %p245 = por %p243, %p244
      %p247 = scmp.ne.s32.totalorder %s232, %s246
      %p248 = scmp.eq.s32.totalorder %s33, 0
      %p249 = por %p247, %p248
      %s251 = sadd.s32 %s250, 1
      %p254 = scmp.eq.s32.totalorder %s27, 1
      %p255 = scmp.ne.s32.totalorder %s250, %s252
      %p256 = scmp.eq.s32.totalorder %s27, 0
      %p257 = por %p255, %p256
      %p258 = scmp.ne.s32.totalorder %s250, %s252
      %p259 = scmp.eq.s32.totalorder %s32, 1
      %p260 = por %p258, %p259
      %p261 = scmp.ne.s32.totalorder %s252, %s253
      %p262 = scmp.eq.s32.totalorder %s32, 0
      %p263 = por %p261, %p262
      %p264 = scmp.ne.s32.totalorder %s252, %s253
      %p265 = scmp.eq.s32.totalorder %s33, 1
      %p266 = por %p264, %p265
      %p268 = scmp.ne.s32.totalorder %s253, %s267
      %p269 = scmp.eq.s32.totalorder %s33, 0
      %p270 = por %p268, %p269
      %s272 = sadd.s32 %s271, 1
      %p275 = scmp.eq.s32.totalorder %s27, 1
      %p276 = scmp.ne.s32.totalorder %s271, %s273
      %p277 = scmp.eq.s32.totalorder %s27, 0
      %p278 = por %p276, %p277
      %p279 = scmp.ne.s32.totalorder %s271, %s273
      %p280 = scmp.eq.s32.totalorder %s32, 1
      %p281 = por %p279, %p280
      %p282 = scmp.ne.s32.totalorder %s273, %s274
      %p283 = scmp.eq.s32.totalorder %s32, 0
      %p284 = por %p282, %p283
      %p285 = scmp.ne.s32.totalorder %s273, %s274
      %p286 = scmp.eq.s32.totalorder %s33, 1
      %p287 = por %p285, %p286
      %p289 = scmp.ne.s32.totalorder %s274, %s288
      %p290 = scmp.eq.s32.totalorder %s33, 0
      %p291 = por %p289, %p290
      %s292 = ssub.s32 %s27, %s34
      %p293 = scmp.eq.s32.totalorder %s292, 0
      %s295 = sadd.s32 %s294, 1
      %s296 = scalar_select %p293, %s294, %s295
      %p299 = pneg %p293
      %p300 = scmp.eq.s32.totalorder %s27, 1
      %p301 = por %p299, %p300
      %p302 = scmp.ne.s32.totalorder %s294, %s297
      %p303 = scmp.eq.s32.totalorder %s27, 0
      %p304 = por %p302, %p303
      %p305 = scmp.ne.s32.totalorder %s294, %s297
      %p306 = scmp.eq.s32.totalorder %s32, 1
      %p307 = por %p305, %p306
      %p308 = scmp.ne.s32.totalorder %s297, %s298
      %p309 = scmp.eq.s32.totalorder %s32, 0
      %p310 = por %p308, %p309
      %p311 = scmp.ne.s32.totalorder %s297, %s298
      %p312 = scmp.eq.s32.totalorder %s33, 1
      %p313 = por %p311, %p312
      %p315 = scmp.ne.s32.totalorder %s298, %s314
      %p316 = scmp.eq.s32.totalorder %s33, 0
      %p317 = por %p315, %p316
      %p318 = scmp.le.s32.totalorder 1, %s27
      %p319 = scmp.lt.s32.totalorder %s27, 3
      %p320 = pnand %p318, %p319
      %p321 = pneg %p320
      // Predicated region
      $region9: #{tpu_custom_call.1} parent=5 // pred_check
        _
      $region10: #{tpu_custom_call.1} parent=5 // pred_check_branch
        %323 = sbr.rel (%p320) target = $region12
      $region11: #{tpu_custom_call.1} parent=5 // pred_region
        %s324 = ssub.s32 %s27, 1
        // Predicated region
        $region13: #{tpu_custom_call.1} parent=11 // pred_check
          %p325 = pneg %p74
        $region14: #{tpu_custom_call.1} parent=11 // pred_check_branch
          %327 = sbr.rel (%p325) target = $region16
        $region15: #{tpu_custom_call.1} parent=11 // pred_region
          %s329 = ssub.s32 2048, 2048
          %330 = vsyncadd [#allocation6], %s329
          %s331 = sshll.u32 [#allocation5], 4
          %s332 = int_to_ptr.vmem [resolvable:$true] %s331
          %337 = dma.hbm_to_vmem [thread:$0]  %s1, 2048, %s332, [#allocation6], 128, 128, 8
        $region16: #{tpu_custom_call.1} parent=11 // pred_fallthru
          _
        // Predicated region
        $region17: #{tpu_custom_call.1} parent=11 // pred_check
          %p338 = pneg %p95
        $region18: #{tpu_custom_call.1} parent=11 // pred_check_branch
          %340 = sbr.rel (%p338) target = $region20
        $region19: #{tpu_custom_call.1} parent=11 // pred_region
          %s342 = ssub.s32 2048, 2048
          %343 = vsyncadd [#allocation6], %s342
          %s344 = sshll.u32 [#allocation7], 4
          %s345 = int_to_ptr.vmem [resolvable:$true] %s344
          %350 = dma.hbm_to_vmem [thread:$0]  %s2, 2048, %s345, [#allocation6], 128, 128, 8
        $region20: #{tpu_custom_call.1} parent=11 // pred_fallthru
          _
        // Predicated region
        $region21: #{tpu_custom_call.1} parent=11 // pred_check
          %p351 = pneg %p116
        $region22: #{tpu_custom_call.1} parent=11 // pred_check_branch
          %353 = sbr.rel (%p351) target = $region24
        $region23: #{tpu_custom_call.1} parent=11 // pred_region
          %s355 = ssub.s32 2048, 2048
          %356 = vsyncadd [#allocation9], %s355
          %s357 = sshll.u32 [#allocation8], 4
          %s358 = int_to_ptr.vmem [resolvable:$true] %s357
          %363 = dma.hbm_to_vmem [thread:$0]  %s3, 2048, %s358, [#allocation9], 128, 128, 8
        $region24: #{tpu_custom_call.1} parent=11 // pred_fallthru
          _
        // Predicated region
        $region25: #{tpu_custom_call.1} parent=11 // pred_check
          %p364 = pneg %p137
        $region26: #{tpu_custom_call.1} parent=11 // pred_check_branch
          %366 = sbr.rel (%p364) target = $region28
        $region27: #{tpu_custom_call.1} parent=11 // pred_region
          _
        $region28: #{tpu_custom_call.1} parent=11 // pred_fallthru
          _
        // Predicated region
        $region29: #{tpu_custom_call.1} parent=11 // pred_check
          %p367 = pneg %p158
        $region30: #{tpu_custom_call.1} parent=11 // pred_check_branch
          %369 = sbr.rel (%p367) target = $region32
        $region31: #{tpu_custom_call.1} parent=11 // pred_region
          %s371 = ssub.s32 2048, 2048
          %372 = vsyncadd [#allocation9], %s371
          %s373 = sshll.u32 [#allocation10], 4
          %s374 = int_to_ptr.vmem [resolvable:$true] %s373
          %379 = dma.hbm_to_vmem [thread:$0]  %s5, 2048, %s374, [#allocation9], 128, 128, 8
        $region32: #{tpu_custom_call.1} parent=11 // pred_fallthru
          _
        // Predicated region
        $region33: #{tpu_custom_call.1} parent=11 // pred_check
          %p380 = pneg %p179
        $region34: #{tpu_custom_call.1} parent=11 // pred_check_branch
          %382 = sbr.rel (%p380) target = $region36
        $region35: #{tpu_custom_call.1} parent=11 // pred_region
          _
        $region36: #{tpu_custom_call.1} parent=11 // pred_fallthru
          _
        // Predicated region
        $region37: #{tpu_custom_call.1} parent=11 // pred_check
          %p383 = pneg %p200
        $region38: #{tpu_custom_call.1} parent=11 // pred_check_branch
          %385 = sbr.rel (%p383) target = $region40
        $region39: #{tpu_custom_call.1} parent=11 // pred_region
          _
        $region40: #{tpu_custom_call.1} parent=11 // pred_fallthru
          _
        // Predicated region
        $region41: #{tpu_custom_call.1} parent=11 // pred_check
          %p386 = pneg %p221
        $region42: #{tpu_custom_call.1} parent=11 // pred_check_branch
          %388 = sbr.rel (%p386) target = $region44
        $region43: #{tpu_custom_call.1} parent=11 // pred_region
          _
        $region44: #{tpu_custom_call.1} parent=11 // pred_fallthru
          _
        // Predicated region
        $region45: #{tpu_custom_call.1} parent=11 // pred_check
          %p389 = pneg %p242
        $region46: #{tpu_custom_call.1} parent=11 // pred_check_branch
          %391 = sbr.rel (%p389) target = $region48
        $region47: #{tpu_custom_call.1} parent=11 // pred_region
          %s393 = ssub.s32 2048, 2048
          %394 = vsyncadd [#allocation12], %s393
          %s395 = sshll.u32 [#allocation11], 4
          %s396 = int_to_ptr.vmem [resolvable:$true] %s395
          %401 = dma.hbm_to_vmem [thread:$0]  %s9, 2048, %s396, [#allocation12], 128, 128, 8
        $region48: #{tpu_custom_call.1} parent=11 // pred_fallthru
          _
        // Predicated region
        $region49: #{tpu_custom_call.1} parent=11 // pred_check
          %p402 = pneg %p263
        $region50: #{tpu_custom_call.1} parent=11 // pred_check_branch
          %404 = sbr.rel (%p402) target = $region52
        $region51: #{tpu_custom_call.1} parent=11 // pred_region
          _
        $region52: #{tpu_custom_call.1} parent=11 // pred_fallthru
          _
        // Predicated region
        $region53: #{tpu_custom_call.1} parent=11 // pred_check
          %p405 = pneg %p284
        $region54: #{tpu_custom_call.1} parent=11 // pred_check_branch
          %407 = sbr.rel (%p405) target = $region56
        $region55: #{tpu_custom_call.1} parent=11 // pred_region
          _
        $region56: #{tpu_custom_call.1} parent=11 // pred_fallthru
          _
      $region12: #{tpu_custom_call.1} parent=5 // pred_fallthru
        _
      %p408 = scmp.lt.s32.totalorder %s27, 2
      // Predicated region
      $region57: #{tpu_custom_call.1} parent=5 // pred_check
        %p409 = pneg %p408
      $region58: #{tpu_custom_call.1} parent=5 // pred_check_branch
        %411 = sbr.rel (%p409) target = $region60
      $region59: #{tpu_custom_call.1} parent=5 // pred_region
        // Predicated region
        $region61: #{tpu_custom_call.1} parent=59 // pred_check
          %p412 = pneg %p47
        $region62: #{tpu_custom_call.1} parent=59 // pred_check_branch
          %414 = sbr.rel (%p412) target = $region64
        $region63: #{tpu_custom_call.1} parent=59 // pred_region
          %s415 = sand.u32 %s37, 1
          %s416 = scalar_lea.sflag [#allocation3], %s415
          %s417 = sand.u32 %s37, 1
          %s418 = smul.addr %s417, 32
          %s419 = scalar_lea.vmem [#allocation2], %s418
          %s421 = ssub.s32 512, 512
          %422 = vsyncadd %s416, %s421
          %s423 = smul.addr %s27, 4
          %s424 = smul.addr %s423, 128
          %s425 = scalar_lea.hbm %s0, %s424
          %s426 = sshll.u32 %s419, 4
          %s427 = int_to_ptr.vmem [resolvable:$true] %s426
          %432 = dma.hbm_to_vmem [thread:$0]  %s425, 512, %s427, %s416, 128, 128, 8
        $region64: #{tpu_custom_call.1} parent=59 // pred_fallthru
          _
      $region60: #{tpu_custom_call.1} parent=5 // pred_fallthru
        _
      %p433 = scmp.le.s32.totalorder 1, %s27
      %p434 = scmp.lt.s32.totalorder %s27, 3
      %p435 = pnand %p433, %p434
      %p436 = pneg %p435
      // Predicated region
      $region65: #{tpu_custom_call.1} parent=5 // pred_check
        _
      $region66: #{tpu_custom_call.1} parent=5 // pred_check_branch
        %438 = sbr.rel (%p435) target = $region68
      $region67: #{tpu_custom_call.1} parent=5 // pred_region
        %s439 = ssub.s32 %s27, 1
        %s440 = sand.u32 %s40, 1
        %s441 = scalar_lea.sflag [#allocation3], %s440
        %s442 = sand.u32 %s40, 1
        %s443 = smul.addr %s442, 32
        %s444 = scalar_lea.vmem [#allocation2], %s443
        // Predicated region
        $region69: #{tpu_custom_call.1} parent=67 // pred_check
          %p445 = pneg %p53
        $region70: #{tpu_custom_call.1} parent=67 // pred_check_branch
          %447 = sbr.rel (%p445) target = $region72
        $region71: #{tpu_custom_call.1} parent=67 // pred_region
          %448 = dma.done %s441, 512
        $region72: #{tpu_custom_call.1} parent=67 // pred_fallthru
          _
        // Predicated region
        $region73: #{tpu_custom_call.1} parent=67 // pred_check
          %p449 = pneg %p74
        $region74: #{tpu_custom_call.1} parent=67 // pred_check_branch
          %451 = sbr.rel (%p449) target = $region76
        $region75: #{tpu_custom_call.1} parent=67 // pred_region
          %452 = dma.done [#allocation6], 2048
        $region76: #{tpu_custom_call.1} parent=67 // pred_fallthru
          _
        // Predicated region
        $region77: #{tpu_custom_call.1} parent=67 // pred_check
          %p453 = pneg %p95
        $region78: #{tpu_custom_call.1} parent=67 // pred_check_branch
          %455 = sbr.rel (%p453) target = $region80
        $region79: #{tpu_custom_call.1} parent=67 // pred_region
          %456 = dma.done [#allocation6], 2048
        $region80: #{tpu_custom_call.1} parent=67 // pred_fallthru
          _
        // Predicated region
        $region81: #{tpu_custom_call.1} parent=67 // pred_check
          %p457 = pneg %p116
        $region82: #{tpu_custom_call.1} parent=67 // pred_check_branch
          %459 = sbr.rel (%p457) target = $region84
        $region83: #{tpu_custom_call.1} parent=67 // pred_region
          %460 = dma.done [#allocation9], 2048
        $region84: #{tpu_custom_call.1} parent=67 // pred_fallthru
          _
        // Predicated region
        $region85: #{tpu_custom_call.1} parent=67 // pred_check
          %p461 = pneg %p158
        $region86: #{tpu_custom_call.1} parent=67 // pred_check_branch
          %463 = sbr.rel (%p461) target = $region88
        $region87: #{tpu_custom_call.1} parent=67 // pred_region
          %464 = dma.done [#allocation9], 2048
        $region88: #{tpu_custom_call.1} parent=67 // pred_fallthru
          _
        // Predicated region
        $region89: #{tpu_custom_call.1} parent=67 // pred_check
          %p465 = pneg %p242
        $region90: #{tpu_custom_call.1} parent=67 // pred_check_branch
          %467 = sbr.rel (%p465) target = $region92
        $region91: #{tpu_custom_call.1} parent=67 // pred_region
          %468 = dma.done [#allocation12], 2048
        $region92: #{tpu_custom_call.1} parent=67 // pred_fallthru
          _
        %s469 = sand.u32 %s40, 1
        %s470 = scalar_lea.sflag [#allocation3], %s469
        %s471 = sand.u32 %s40, 1
        %s472 = smul.addr %s471, 32
        %s473 = scalar_lea.vmem [#allocation2], %s472
        %p474 = pneg %p53
        %p475 = pneg %p50
        %p476 = pneg %p74
        %p477 = pneg %p71
        %p478 = pneg %p95
        %p479 = pneg %p92
        %p480 = pneg %p116
        %p481 = pneg %p113
        %p482 = pneg %p137
        %p483 = pneg %p134
        %p484 = pneg %p158
        %p485 = pneg %p155
        %p486 = pneg %p179
        %p487 = pneg %p176
        %p488 = pneg %p200
        %p489 = pneg %p197
        %p490 = pneg %p221
        %p491 = pneg %p218
        %p492 = pneg %p242
        %p493 = pneg %p239
        %p494 = pneg %p263
        %p495 = pneg %p260
        %p496 = pneg %p284
        %p497 = pneg %p281
        %p498 = pneg %p310
        %p499 = pneg %p307
        %s500 = sand.u32 %s297, 1
        %s501 = scalar_lea.sflag [#allocation4], %s500
        %s502 = sand.u32 %s297, 1
        %s503 = smul.addr %s502, 16
        %s504 = scalar_lea.vmem [#allocation13], %s503
        %v505 = vld [vmem:[%s444] sm:$0xff]
        %v506 = vld [vmem:[%s444 + $0x8] sm:$0xff]
        %v507 = vld [vmem:[%s444 + $0x10] sm:$0xff]
        %v508 = vld [vmem:[%s444 + $0x18] sm:$0xff]
        %v509 = vld [vmem:[#allocation5] sm:$0xff]
        %v510 = vld [vmem:[#allocation5 + $0x8] sm:$0xff]
        %v511 = vld [vmem:[#allocation5 + $0x10] sm:$0xff]
        %v512 = vld [vmem:[#allocation5 + $0x18] sm:$0xff]
        %v513 = vld [vmem:[#allocation5 + $0x20] sm:$0xff]
        %v514 = vld [vmem:[#allocation5 + $0x28] sm:$0xff]
        %v515 = vld [vmem:[#allocation5 + $0x30] sm:$0xff]
        %v516 = vld [vmem:[#allocation5 + $0x38] sm:$0xff]
        %v517 = vld [vmem:[#allocation5 + $0x40] sm:$0xff]
        %v518 = vld [vmem:[#allocation5 + $0x48] sm:$0xff]
        %v519 = vld [vmem:[#allocation5 + $0x50] sm:$0xff]
        %v520 = vld [vmem:[#allocation5 + $0x58] sm:$0xff]
        %v521 = vld [vmem:[#allocation5 + $0x60] sm:$0xff]
        %v522 = vld [vmem:[#allocation5 + $0x68] sm:$0xff]
        %v523 = vld [vmem:[#allocation5 + $0x70] sm:$0xff]
        %v524 = vld [vmem:[#allocation5 + $0x78] sm:$0xff]
        %525 = vmatprep.subr.mxu0 0.0
        %526 = vmatpush1.msra.mxu0 %v509
        %527 = vmatprep.subr.mxu0 0.0
        %528 = vmatpush1.msra.mxu0 %v510
        %529 = vmatprep.subr.mxu0 0.0
        %530 = vmatpush1.msra.mxu0 %v511
        %531 = vmatprep.subr.mxu0 0.0
        %532 = vmatpush1.msra.mxu0 %v512
        %533 = vmatprep.subr.mxu0 0.0
        %534 = vmatpush1.msra.mxu0 %v513
        %535 = vmatprep.subr.mxu0 0.0
        %536 = vmatpush1.msra.mxu0 %v514
        %537 = vmatprep.subr.mxu0 0.0
        %538 = vmatpush1.msra.mxu0 %v515
        %539 = vmatprep.subr.mxu0 0.0
        %540 = vmatpush1.msra.mxu0 %v516
        %541 = vmatprep.subr.mxu0 0.0
        %542 = vmatpush1.msra.mxu0 %v517
        %543 = vmatprep.subr.mxu0 0.0
        %544 = vmatpush1.msra.mxu0 %v518
        %545 = vmatprep.subr.mxu0 0.0
        %546 = vmatpush1.msra.mxu0 %v519
        %547 = vmatprep.subr.mxu0 0.0
        %548 = vmatpush1.msra.mxu0 %v520
        %549 = vmatprep.subr.mxu0 0.0
        %550 = vmatpush1.msra.mxu0 %v521
        %551 = vmatprep.subr.mxu0 0.0
        %552 = vmatpush1.msra.mxu0 %v522
        %553 = vmatprep.subr.mxu0 0.0
        %554 = vmatpush1.msra.mxu0 %v523
        %555 = vmatprep.subr.mxu0 0.0
        %556 = vmatpush1.msra.mxu0 %v524
        %557 = vmatprep.subr.mxu0 0.0
        %558 = vmatpush1.msra.mxu0 0.0
        %559 = vmatprep.subr.mxu0 0.0
        %560 = vmatpush1.msra.mxu0 0.0
        %561 = vmatprep.subr.mxu0 0.0
        %562 = vmatpush1.msra.mxu0 0.0
        %563 = vmatprep.subr.mxu0 0.0
        %564 = vmatpush1.msra.mxu0 0.0
        %565 = vmatprep.subr.mxu0 0.0
        %566 = vmatpush1.msra.mxu0 0.0
        %567 = vmatprep.subr.mxu0 0.0
        %568 = vmatpush1.msra.mxu0 0.0
        %569 = vmatprep.subr.mxu0 0.0
        %570 = vmatpush1.msra.mxu0 0.0
        %571 = vmatprep.subr.mxu0 0.0
        %572 = vmatpush1.msra.mxu0 0.0
        %573 = vmatprep.subr.mxu0 0.0
        %574 = vmatpush1.msra.mxu0 0.0
        %575 = vmatprep.subr.mxu0 0.0
        %576 = vmatpush1.msra.mxu0 0.0
        %577 = vmatprep.subr.mxu0 0.0
        %578 = vmatpush1.msra.mxu0 0.0
        %579 = vmatprep.subr.mxu0 0.0
        %580 = vmatpush1.msra.mxu0 0.0
        %581 = vmatprep.subr.mxu0 0.0
        %582 = vmatpush1.msra.mxu0 0.0
        %583 = vmatprep.subr.mxu0 0.0
        %584 = vmatpush1.msra.mxu0 0.0
        %585 = vmatprep.subr.mxu0 0.0
        %586 = vmatpush1.msra.mxu0 0.0
        %587 = vmatprep.subr.mxu0 0.0
        %588 = vmatpush1.msra.mxu0 0.0
        %589 = vmatprep.mubr.f32.mxu0 0.0
        %590 = vmatmul.mubr.f32.gmra.mrb[0].mxu0 %v505
        %v591 = vpop.f32.mrb[0].mxu0
        %v592 = vadd.f32 0.0, %v591
        %v593 = vpop.f32.mrb[0].mxu0
        %594 = vmatprep.mubr.f32.mxu0 0.0
        %595 = vmatmul.mubr.f32.gmra.mrb[0].mxu0 %v506
        %v596 = vpop.f32.mrb[0].mxu0
        %v597 = vadd.f32 0.0, %v596
        %v598 = vpop.f32.mrb[0].mxu0
        %599 = vmatprep.mubr.f32.mxu0 0.0
        %600 = vmatmul.mubr.f32.gmra.mrb[0].mxu0 %v507
        %v601 = vpop.f32.mrb[0].mxu0
        %v602 = vadd.f32 0.0, %v601
        %v603 = vpop.f32.mrb[0].mxu0
        %604 = vmatprep.mubr.f32.mxu0 0.0
        %605 = vmatmul.mubr.f32.gmra.mrb[0].mxu0 %v508
        %v606 = vpop.f32.mrb[0].mxu0
        %v607 = vadd.f32 0.0, %v606
        %v608 = vpop.f32.mrb[0].mxu0
        %609 = vdwg.mxu0
        %v610 = vld [vmem:[#allocation7] sm:$0xff]
        %v611 = vld [vmem:[#allocation7 + $0x8] sm:$0xff]
        %v612 = vld [vmem:[#allocation7 + $0x10] sm:$0xff]
        %v613 = vld [vmem:[#allocation7 + $0x18] sm:$0xff]
        %v614 = vld [vmem:[#allocation7 + $0x20] sm:$0xff]
        %v615 = vld [vmem:[#allocation7 + $0x28] sm:$0xff]
        %v616 = vld [vmem:[#allocation7 + $0x30] sm:$0xff]
        %v617 = vld [vmem:[#allocation7 + $0x38] sm:$0xff]
        %v618 = vld [vmem:[#allocation7 + $0x40] sm:$0xff]
        %v619 = vld [vmem:[#allocation7 + $0x48] sm:$0xff]
        %v620 = vld [vmem:[#allocation7 + $0x50] sm:$0xff]
        %v621 = vld [vmem:[#allocation7 + $0x58] sm:$0xff]
        %v622 = vld [vmem:[#allocation7 + $0x60] sm:$0xff]
        %v623 = vld [vmem:[#allocation7 + $0x68] sm:$0xff]
        %v624 = vld [vmem:[#allocation7 + $0x70] sm:$0xff]
        %v625 = vld [vmem:[#allocation7 + $0x78] sm:$0xff]
        %626 = vmatprep.subr.mxu0 0.0
        %627 = vmatpush1.msra.mxu0 %v610
        %628 = vmatprep.subr.mxu0 0.0
        %629 = vmatpush1.msra.mxu0 %v611
        %630 = vmatprep.subr.mxu0 0.0
        %631 = vmatpush1.msra.mxu0 %v612
        %632 = vmatprep.subr.mxu0 0.0
        %633 = vmatpush1.msra.mxu0 %v613
        %634 = vmatprep.subr.mxu0 0.0
        %635 = vmatpush1.msra.mxu0 %v614
        %636 = vmatprep.subr.mxu0 0.0
        %637 = vmatpush1.msra.mxu0 %v615
        %638 = vmatprep.subr.mxu0 0.0
        %639 = vmatpush1.msra.mxu0 %v616
        %640 = vmatprep.subr.mxu0 0.0
        %641 = vmatpush1.msra.mxu0 %v617
        %642 = vmatprep.subr.mxu0 0.0
        %643 = vmatpush1.msra.mxu0 %v618
        %644 = vmatprep.subr.mxu0 0.0
        %645 = vmatpush1.msra.mxu0 %v619
        %646 = vmatprep.subr.mxu0 0.0
        %647 = vmatpush1.msra.mxu0 %v620
        %648 = vmatprep.subr.mxu0 0.0
        %649 = vmatpush1.msra.mxu0 %v621
        %650 = vmatprep.subr.mxu0 0.0
        %651 = vmatpush1.msra.mxu0 %v622
        %652 = vmatprep.subr.mxu0 0.0
        %653 = vmatpush1.msra.mxu0 %v623
        %654 = vmatprep.subr.mxu0 0.0
        %655 = vmatpush1.msra.mxu0 %v624
        %656 = vmatprep.subr.mxu0 0.0
        %657 = vmatpush1.msra.mxu0 %v625
        %658 = vmatprep.subr.mxu0 0.0
        %659 = vmatpush1.msra.mxu0 0.0
        %660 = vmatprep.subr.mxu0 0.0
        %661 = vmatpush1.msra.mxu0 0.0
        %662 = vmatprep.subr.mxu0 0.0
        %663 = vmatpush1.msra.mxu0 0.0
        %664 = vmatprep.subr.mxu0 0.0
        %665 = vmatpush1.msra.mxu0 0.0
        %666 = vmatprep.subr.mxu0 0.0
        %667 = vmatpush1.msra.mxu0 0.0
        %668 = vmatprep.subr.mxu0 0.0
        %669 = vmatpush1.msra.mxu0 0.0
        %670 = vmatprep.subr.mxu0 0.0
        %671 = vmatpush1.msra.mxu0 0.0
        %672 = vmatprep.subr.mxu0 0.0
        %673 = vmatpush1.msra.mxu0 0.0
        %674 = vmatprep.subr.mxu0 0.0
        %675 = vmatpush1.msra.mxu0 0.0
        %676 = vmatprep.subr.mxu0 0.0
        %677 = vmatpush1.msra.mxu0 0.0
        %678 = vmatprep.subr.mxu0 0.0
        %679 = vmatpush1.msra.mxu0 0.0
        %680 = vmatprep.subr.mxu0 0.0
        %681 = vmatpush1.msra.mxu0 0.0
        %682 = vmatprep.subr.mxu0 0.0
        %683 = vmatpush1.msra.mxu0 0.0
        %684 = vmatprep.subr.mxu0 0.0
        %685 = vmatpush1.msra.mxu0 0.0
        %686 = vmatprep.subr.mxu0 0.0
        %687 = vmatpush1.msra.mxu0 0.0
        %688 = vmatprep.subr.mxu0 0.0
        %689 = vmatpush1.msra.mxu0 0.0
        %690 = vmatprep.mubr.f32.mxu0 0.0
        %691 = vmatmul.mubr.f32.gmra.mrb[0].mxu0 %v505
        %v692 = vpop.f32.mrb[0].mxu0
        %v693 = vadd.f32 0.0, %v692
        %v694 = vpop.f32.mrb[0].mxu0
        %695 = vmatprep.mubr.f32.mxu0 0.0
        %696 = vmatmul.mubr.f32.gmra.mrb[0].mxu0 %v506
        %v697 = vpop.f32.mrb[0].mxu0
        %v698 = vadd.f32 0.0, %v697
        %v699 = vpop.f32.mrb[0].mxu0
        %700 = vmatprep.mubr.f32.mxu0 0.0
        %701 = vmatmul.mubr.f32.gmra.mrb[0].mxu0 %v507
        %v702 = vpop.f32.mrb[0].mxu0
        %v703 = vadd.f32 0.0, %v702
        %v704 = vpop.f32.mrb[0].mxu0
        %705 = vmatprep.mubr.f32.mxu0 0.0
        %706 = vmatmul.mubr.f32.gmra.mrb[0].mxu0 %v508
        %v707 = vpop.f32.mrb[0].mxu0
        %v708 = vadd.f32 0.0, %v707
        %v709 = vpop.f32.mrb[0].mxu0
        %710 = vdwg.mxu0
        %v711 = vld [vmem:[#allocation8] sm:$0xff]
        %v712 = vld [vmem:[#allocation8 + $0x8] sm:$0xff]
        %v713 = vld [vmem:[#allocation8 + $0x10] sm:$0xff]
        %v714 = vld [vmem:[#allocation8 + $0x18] sm:$0xff]
        %v715 = vld [vmem:[#allocation8 + $0x20] sm:$0xff]
        %v716 = vld [vmem:[#allocation8 + $0x28] sm:$0xff]
        %v717 = vld [vmem:[#allocation8 + $0x30] sm:$0xff]
        %v718 = vld [vmem:[#allocation8 + $0x38] sm:$0xff]
        %v719 = vld [vmem:[#allocation8 + $0x40] sm:$0xff]
        %v720 = vld [vmem:[#allocation8 + $0x48] sm:$0xff]
        %v721 = vld [vmem:[#allocation8 + $0x50] sm:$0xff]
        %v722 = vld [vmem:[#allocation8 + $0x58] sm:$0xff]
        %v723 = vld [vmem:[#allocation8 + $0x60] sm:$0xff]
        %v724 = vld [vmem:[#allocation8 + $0x68] sm:$0xff]
        %v725 = vld [vmem:[#allocation8 + $0x70] sm:$0xff]
        %v726 = vld [vmem:[#allocation8 + $0x78] sm:$0xff]
        %727 = vmatprep.subr.mxu0 0.0
        %728 = vmatpush1.msra.mxu0 %v711
        %729 = vmatprep.subr.mxu0 0.0
        %730 = vmatpush1.msra.mxu0 %v712
        %731 = vmatprep.subr.mxu0 0.0
        %732 = vmatpush1.msra.mxu0 %v713
        %733 = vmatprep.subr.mxu0 0.0
        %734 = vmatpush1.msra.mxu0 %v714
        %735 = vmatprep.subr.mxu0 0.0
        %736 = vmatpush1.msra.mxu0 %v715
        %737 = vmatprep.subr.mxu0 0.0
        %738 = vmatpush1.msra.mxu0 %v716
        %739 = vmatprep.subr.mxu0 0.0
        %740 = vmatpush1.msra.mxu0 %v717
        %741 = vmatprep.subr.mxu0 0.0
        %742 = vmatpush1.msra.mxu0 %v718
        %743 = vmatprep.subr.mxu0 0.0
        %744 = vmatpush1.msra.mxu0 %v719
        %745 = vmatprep.subr.mxu0 0.0
        %746 = vmatpush1.msra.mxu0 %v720
        %747 = vmatprep.subr.mxu0 0.0
        %748 = vmatpush1.msra.mxu0 %v721
        %749 = vmatprep.subr.mxu0 0.0
        %750 = vmatpush1.msra.mxu0 %v722
        %751 = vmatprep.subr.mxu0 0.0
        %752 = vmatpush1.msra.mxu0 %v723
        %753 = vmatprep.subr.mxu0 0.0
        %754 = vmatpush1.msra.mxu0 %v724
        %755 = vmatprep.subr.mxu0 0.0
        %756 = vmatpush1.msra.mxu0 %v725
        %757 = vmatprep.subr.mxu0 0.0
        %758 = vmatpush1.msra.mxu0 %v726
        %759 = vmatprep.subr.mxu0 0.0
        %760 = vmatpush1.msra.mxu0 0.0
        %761 = vmatprep.subr.mxu0 0.0
        %762 = vmatpush1.msra.mxu0 0.0
        %763 = vmatprep.subr.mxu0 0.0
        %764 = vmatpush1.msra.mxu0 0.0
        %765 = vmatprep.subr.mxu0 0.0
        %766 = vmatpush1.msra.mxu0 0.0
        %767 = vmatprep.subr.mxu0 0.0
        %768 = vmatpush1.msra.mxu0 0.0
        %769 = vmatprep.subr.mxu0 0.0
        %770 = vmatpush1.msra.mxu0 0.0
        %771 = vmatprep.subr.mxu0 0.0
        %772 = vmatpush1.msra.mxu0 0.0
        %773 = vmatprep.subr.mxu0 0.0
        %774 = vmatpush1.msra.mxu0 0.0
        %775 = vmatprep.subr.mxu0 0.0
        %776 = vmatpush1.msra.mxu0 0.0
        %777 = vmatprep.subr.mxu0 0.0
        %778 = vmatpush1.msra.mxu0 0.0
        %779 = vmatprep.subr.mxu0 0.0
        %780 = vmatpush1.msra.mxu0 0.0
        %781 = vmatprep.subr.mxu0 0.0
        %782 = vmatpush1.msra.mxu0 0.0
        %783 = vmatprep.subr.mxu0 0.0
        %784 = vmatpush1.msra.mxu0 0.0
        %785 = vmatprep.subr.mxu0 0.0
        %786 = vmatpush1.msra.mxu0 0.0
        %787 = vmatprep.subr.mxu0 0.0
        %788 = vmatpush1.msra.mxu0 0.0
        %789 = vmatprep.subr.mxu0 0.0
        %790 = vmatpush1.msra.mxu0 0.0
        %791 = vmatprep.mubr.f32.mxu0 0.0
        %792 = vmatmul.mubr.f32.gmra.mrb[0].mxu0 %v505
        %v793 = vpop.f32.mrb[0].mxu0
        %v794 = vadd.f32 0.0, %v793
        %v795 = vpop.f32.mrb[0].mxu0
        %796 = vmatprep.mubr.f32.mxu0 0.0
        %797 = vmatmul.mubr.f32.gmra.mrb[0].mxu0 %v506
        %v798 = vpop.f32.mrb[0].mxu0
        %v799 = vadd.f32 0.0, %v798
        %v800 = vpop.f32.mrb[0].mxu0
        %801 = vmatprep.mubr.f32.mxu0 0.0
        %802 = vmatmul.mubr.f32.gmra.mrb[0].mxu0 %v507
        %v803 = vpop.f32.mrb[0].mxu0
        %v804 = vadd.f32 0.0, %v803
        %v805 = vpop.f32.mrb[0].mxu0
        %806 = vmatprep.mubr.f32.mxu0 0.0
        %807 = vmatmul.mubr.f32.gmra.mrb[0].mxu0 %v508
        %v808 = vpop.f32.mrb[0].mxu0
        %v809 = vadd.f32 0.0, %v808
        %v810 = vpop.f32.mrb[0].mxu0
        %811 = vdwg.mxu0
        %v812 = vld [vmem:[%s4] sm:$0xff]
        %v814 = vcombine.high %v812, %v812
        %v816 = vunpack.c.l.s4 1966171168
        %v817 = vunpack.c.0.s8 %v816
        %v818 = vlaneseq
        %v819 = vshrl.u32 %v818, 7
        %v820 = vsub.s32 %v817, %v819
        %v821 = vrot.slane %v812, %v820
        %v823 = vunpack.c.l.s4 1966171168
        %v824 = vunpack.c.0.s8 %v823
        %v825 = vlaneseq
        %v826 = vshrl.u32 %v825, 7
        %v827 = vsub.s32 %v824, %v826
        %v828 = vrot.slane %v814, %v827
        %v829 = vcombine.high %v821, %v821
        %v830 = vcombine.high %v828, %v828
        %v832 = vunpack.c.l.s4 1966171168
        %v833 = vunpack.c.0.s8 %v832
        %v834 = vlaneseq
        %v835 = vshrl.u32 %v834, 7
        %v836 = vsub.s32 %v833, %v835
        %v837 = vrot.slane %v821, %v836
        %v839 = vunpack.c.l.s4 1966171168
        %v840 = vunpack.c.0.s8 %v839
        %v841 = vlaneseq
        %v842 = vshrl.u32 %v841, 7
        %v843 = vsub.s32 %v840, %v842
        %v844 = vrot.slane %v828, %v843
        %v846 = vunpack.c.l.s4 1966171168
        %v847 = vunpack.c.0.s8 %v846
        %v848 = vlaneseq
        %v849 = vshrl.u32 %v848, 7
        %v850 = vsub.s32 %v847, %v849
        %v851 = vrot.slane %v829, %v850
        %v853 = vunpack.c.l.s4 1966171168
        %v854 = vunpack.c.0.s8 %v853
        %v855 = vlaneseq
        %v856 = vshrl.u32 %v855, 7
        %v857 = vsub.s32 %v854, %v856
        %v858 = vrot.slane %v830, %v857
        %v859 = vcombine.high %v837, %v837
        %v860 = vcombine.high %v844, %v844
        %v861 = vcombine.high %v851, %v851
        %v862 = vcombine.high %v858, %v858
        %v863 = vlaneseq
        %v864 = vshrl.u32 %v863, 7
        %v865 = vsub.s32 0, %v864
        %v866 = vrot.slane %v837, %v865
        %v867 = vlaneseq
        %v868 = vshrl.u32 %v867, 7
        %v869 = vsub.s32 0, %v868
        %v870 = vrot.slane %v851, %v869
        %v871 = vlaneseq
        %v872 = vshrl.u32 %v871, 7
        %v873 = vsub.s32 0, %v872
        %v874 = vrot.slane %v859, %v873
        %v875 = vlaneseq
        %v876 = vshrl.u32 %v875, 7
        %v877 = vsub.s32 0, %v876
        %v878 = vrot.slane %v861, %v877
        %v879 = vlaneseq
        %v880 = vshrl.u32 %v879, 7
        %v881 = vsub.s32 0, %v880
        %v882 = vrot.slane %v844, %v881
        %v883 = vlaneseq
        %v884 = vshrl.u32 %v883, 7
        %v885 = vsub.s32 0, %v884
        %v886 = vrot.slane %v858, %v885
        %v887 = vlaneseq
        %v888 = vshrl.u32 %v887, 7
        %v889 = vsub.s32 0, %v888
        %v890 = vrot.slane %v860, %v889
        %v891 = vlaneseq
        %v892 = vshrl.u32 %v891, 7
        %v893 = vsub.s32 0, %v892
        %v894 = vrot.slane %v862, %v893
        %v903 = vmul.f32 %v592, %v866
        %v904 = vmul.f32 %v597, %v866
        %v905 = vmul.f32 %v602, %v866
        %v906 = vmul.f32 %v607, %v866
        %v907 = vmul.f32 %v592, %v870
        %v908 = vmul.f32 %v597, %v870
        %v909 = vmul.f32 %v602, %v870
        %v910 = vmul.f32 %v607, %v870
        %v911 = vmul.f32 %v592, %v874
        %v912 = vmul.f32 %v597, %v874
        %v913 = vmul.f32 %v602, %v874
        %v914 = vmul.f32 %v607, %v874
        %v915 = vmul.f32 %v592, %v878
        %v916 = vmul.f32 %v597, %v878
        %v917 = vmul.f32 %v602, %v878
        %v918 = vmul.f32 %v607, %v878
        %v919 = vmul.f32 %v592, %v882
        %v920 = vmul.f32 %v597, %v882
        %v921 = vmul.f32 %v602, %v882
        %v922 = vmul.f32 %v607, %v882
        %v923 = vmul.f32 %v592, %v886
        %v924 = vmul.f32 %v597, %v886
        %v925 = vmul.f32 %v602, %v886
        %v926 = vmul.f32 %v607, %v886
        %v927 = vmul.f32 %v592, %v890
        %v928 = vmul.f32 %v597, %v890
        %v929 = vmul.f32 %v602, %v890
        %v930 = vmul.f32 %v607, %v890
        %v931 = vmul.f32 %v592, %v894
        %v932 = vmul.f32 %v597, %v894
        %v933 = vmul.f32 %v602, %v894
        %v934 = vmul.f32 %v607, %v894
        %v935 = vmul.f32 %v693, %v866
        %v936 = vmul.f32 %v698, %v866
        %v937 = vmul.f32 %v703, %v866
        %v938 = vmul.f32 %v708, %v866
        %v939 = vmul.f32 %v693, %v870
        %v940 = vmul.f32 %v698, %v870
        %v941 = vmul.f32 %v703, %v870
        %v942 = vmul.f32 %v708, %v870
        %v943 = vmul.f32 %v693, %v874
        %v944 = vmul.f32 %v698, %v874
        %v945 = vmul.f32 %v703, %v874
        %v946 = vmul.f32 %v708, %v874
        %v947 = vmul.f32 %v693, %v878
        %v948 = vmul.f32 %v698, %v878
        %v949 = vmul.f32 %v703, %v878
        %v950 = vmul.f32 %v708, %v878
        %v951 = vmul.f32 %v693, %v882
        %v952 = vmul.f32 %v698, %v882
        %v953 = vmul.f32 %v703, %v882
        %v954 = vmul.f32 %v708, %v882
        %v955 = vmul.f32 %v693, %v886
        %v956 = vmul.f32 %v698, %v886
        %v957 = vmul.f32 %v703, %v886
        %v958 = vmul.f32 %v708, %v886
        %v959 = vmul.f32 %v693, %v890
        %v960 = vmul.f32 %v698, %v890
        %v961 = vmul.f32 %v703, %v890
        %v962 = vmul.f32 %v708, %v890
        %v963 = vmul.f32 %v693, %v894
        %v964 = vmul.f32 %v698, %v894
        %v965 = vmul.f32 %v703, %v894
        %v966 = vmul.f32 %v708, %v894
        %v967 = vmul.f32 %v794, %v866
        %v968 = vmul.f32 %v799, %v866
        %v969 = vmul.f32 %v804, %v866
        %v970 = vmul.f32 %v809, %v866
        %v971 = vmul.f32 %v794, %v870
        %v972 = vmul.f32 %v799, %v870
        %v973 = vmul.f32 %v804, %v870
        %v974 = vmul.f32 %v809, %v870
        %v975 = vmul.f32 %v794, %v874
        %v976 = vmul.f32 %v799, %v874
        %v977 = vmul.f32 %v804, %v874
        %v978 = vmul.f32 %v809, %v874
        %v979 = vmul.f32 %v794, %v878
        %v980 = vmul.f32 %v799, %v878
        %v981 = vmul.f32 %v804, %v878
        %v982 = vmul.f32 %v809, %v878
        %v983 = vmul.f32 %v794, %v882
        %v984 = vmul.f32 %v799, %v882
        %v985 = vmul.f32 %v804, %v882
        %v986 = vmul.f32 %v809, %v882
        %v987 = vmul.f32 %v794, %v886
        %v988 = vmul.f32 %v799, %v886
        %v989 = vmul.f32 %v804, %v886
        %v990 = vmul.f32 %v809, %v886
        %v991 = vmul.f32 %v794, %v890
        %v992 = vmul.f32 %v799, %v890
        %v993 = vmul.f32 %v804, %v890
        %v994 = vmul.f32 %v809, %v890
        %v995 = vmul.f32 %v794, %v894
        %v996 = vmul.f32 %v799, %v894
        %v997 = vmul.f32 %v804, %v894
        %v998 = vmul.f32 %v809, %v894
        %999 = vmatprep.subr.mxu0 0.0
        %1000 = vmatpush1.xpose.msra.mxu0 %v935
        %1001 = vmatprep.subr.mxu0 0.0
        %1002 = vmatpush1.xpose.msra.mxu0 %v936
        %1003 = vmatprep.subr.mxu0 0.0
        %1004 = vmatpush1.xpose.msra.mxu0 %v937
        %1005 = vmatprep.subr.mxu0 0.0
        %1006 = vmatpush1.xpose.msra.mxu0 %v938
        %1007 = vmatprep.subr.mxu0 0.0
        %1008 = vmatpush1.xpose.msra.mxu0 0.0
        %1009 = vmatprep.subr.mxu0 0.0
        %1010 = vmatpush1.xpose.msra.mxu0 0.0
        %1011 = vmatprep.subr.mxu0 0.0
        %1012 = vmatpush1.xpose.msra.mxu0 0.0
        %1013 = vmatprep.subr.mxu0 0.0
        %1014 = vmatpush1.xpose.msra.mxu0 0.0
        %1015 = vmatprep.subr.mxu0 0.0
        %1016 = vmatpush1.xpose.msra.mxu0 0.0
        %1017 = vmatprep.subr.mxu0 0.0
        %1018 = vmatpush1.xpose.msra.mxu0 0.0
        %1019 = vmatprep.subr.mxu0 0.0
        %1020 = vmatpush1.xpose.msra.mxu0 0.0
        %1021 = vmatprep.subr.mxu0 0.0
        %1022 = vmatpush1.xpose.msra.mxu0 0.0
        %1023 = vmatprep.subr.mxu0 0.0
        %1024 = vmatpush1.xpose.msra.mxu0 0.0
        %1025 = vmatprep.subr.mxu0 0.0
        %1026 = vmatpush1.xpose.msra.mxu0 0.0
        %1027 = vmatprep.subr.mxu0 0.0
        %1028 = vmatpush1.xpose.msra.mxu0 0.0
        %1029 = vmatprep.subr.mxu0 0.0
        %1030 = vmatpush1.xpose.msra.mxu0 0.0
        %1031 = vmatprep.subr.mxu0 0.0
        %1032 = vmatpush1.xpose.msra.mxu0 0.0
        %1033 = vmatprep.subr.mxu0 0.0
        %1034 = vmatpush1.xpose.msra.mxu0 0.0
        %1035 = vmatprep.subr.mxu0 0.0
        %1036 = vmatpush1.xpose.msra.mxu0 0.0
        %1037 = vmatprep.subr.mxu0 0.0
        %1038 = vmatpush1.xpose.msra.mxu0 0.0
        %1039 = vmatprep.subr.mxu0 0.0
        %1040 = vmatpush1.xpose.msra.mxu0 0.0
        %1041 = vmatprep.subr.mxu0 0.0
        %1042 = vmatpush1.xpose.msra.mxu0 0.0
        %1043 = vmatprep.subr.mxu0 0.0
        %1044 = vmatpush1.xpose.msra.mxu0 0.0
        %1045 = vmatprep.subr.mxu0 0.0
        %1046 = vmatpush1.xpose.msra.mxu0 0.0
        %1047 = vmatprep.subr.mxu0 0.0
        %1048 = vmatpush1.xpose.msra.mxu0 0.0
        %1049 = vmatprep.subr.mxu0 0.0
        %1050 = vmatpush1.xpose.msra.mxu0 0.0
        %1051 = vmatprep.subr.mxu0 0.0
        %1052 = vmatpush1.xpose.msra.mxu0 0.0
        %1053 = vmatprep.subr.mxu0 0.0
        %1054 = vmatpush1.xpose.msra.mxu0 0.0
        %1055 = vmatprep.subr.mxu0 0.0
        %1056 = vmatpush1.xpose.msra.mxu0 0.0
        %1057 = vmatprep.subr.mxu0 0.0
        %1058 = vmatpush1.xpose.msra.mxu0 0.0
        %1059 = vmatprep.subr.mxu0 0.0
        %1060 = vmatpush1.xpose.msra.mxu0 0.0
        %1061 = vmatprep.subr.mxu0 0.0
        %1062 = vmatpush1.xpose.msra.mxu0 0.0
        %1063 = vmatprep.mubr.f32.mxu0 0.0
        %1064 = vmatmul.mubr.f32.gmra.mrb[0].mxu0 %v903
        %v1065 = vpop.f32.mrb[0].mxu0
        %v1066 = vadd.f32 0.0, %v1065
        %v1067 = vpop.f32.mrb[0].mxu0
        %1068 = vmatprep.mubr.f32.mxu0 0.0
        %1069 = vmatmul.mubr.f32.gmra.mrb[0].mxu0 %v904
        %v1070 = vpop.f32.mrb[0].mxu0
        %v1071 = vadd.f32 0.0, %v1070
        %v1072 = vpop.f32.mrb[0].mxu0
        %1073 = vmatprep.mubr.f32.mxu0 0.0
        %1074 = vmatmul.mubr.f32.gmra.mrb[0].mxu0 %v905
        %v1075 = vpop.f32.mrb[0].mxu0
        %v1076 = vadd.f32 0.0, %v1075
        %v1077 = vpop.f32.mrb[0].mxu0
        %1078 = vmatprep.mubr.f32.mxu0 0.0
        %1079 = vmatmul.mubr.f32.gmra.mrb[0].mxu0 %v906
        %v1080 = vpop.f32.mrb[0].mxu0
        %v1081 = vadd.f32 0.0, %v1080
        %v1082 = vpop.f32.mrb[0].mxu0
        %1083 = vdwg.mxu0
        %1084 = vmatprep.subr.mxu0 0.0
        %1085 = vmatpush1.xpose.msra.mxu0 %v939
        %1086 = vmatprep.subr.mxu0 0.0
        %1087 = vmatpush1.xpose.msra.mxu0 %v940
        %1088 = vmatprep.subr.mxu0 0.0
        %1089 = vmatpush1.xpose.msra.mxu0 %v941
        %1090 = vmatprep.subr.mxu0 0.0
        %1091 = vmatpush1.xpose.msra.mxu0 %v942
        %1092 = vmatprep.subr.mxu0 0.0
        %1093 = vmatpush1.xpose.msra.mxu0 0.0
        %1094 = vmatprep.subr.mxu0 0.0
        %1095 = vmatpush1.xpose.msra.mxu0 0.0
        %1096 = vmatprep.subr.mxu0 0.0
        %1097 = vmatpush1.xpose.msra.mxu0 0.0
        %1098 = vmatprep.subr.mxu0 0.0
        %1099 = vmatpush1.xpose.msra.mxu0 0.0
        %1100 = vmatprep.subr.mxu0 0.0
        %1101 = vmatpush1.xpose.msra.mxu0 0.0
        %1102 = vmatprep.subr.mxu0 0.0
        %1103 = vmatpush1.xpose.msra.mxu0 0.0
        %1104 = vmatprep.subr.mxu0 0.0
        %1105 = vmatpush1.xpose.msra.mxu0 0.0
        %1106 = vmatprep.subr.mxu0 0.0
        %1107 = vmatpush1.xpose.msra.mxu0 0.0
        %1108 = vmatprep.subr.mxu0 0.0
        %1109 = vmatpush1.xpose.msra.mxu0 0.0
        %1110 = vmatprep.subr.mxu0 0.0
        %1111 = vmatpush1.xpose.msra.mxu0 0.0
        %1112 = vmatprep.subr.mxu0 0.0
        %1113 = vmatpush1.xpose.msra.mxu0 0.0
        %1114 = vmatprep.subr.mxu0 0.0
        %1115 = vmatpush1.xpose.msra.mxu0 0.0
        %1116 = vmatprep.subr.mxu0 0.0
        %1117 = vmatpush1.xpose.msra.mxu0 0.0
        %1118 = vmatprep.subr.mxu0 0.0
        %1119 = vmatpush1.xpose.msra.mxu0 0.0
        %1120 = vmatprep.subr.mxu0 0.0
        %1121 = vmatpush1.xpose.msra.mxu0 0.0
        %1122 = vmatprep.subr.mxu0 0.0
        %1123 = vmatpush1.xpose.msra.mxu0 0.0
        %1124 = vmatprep.subr.mxu0 0.0
        %1125 = vmatpush1.xpose.msra.mxu0 0.0
        %1126 = vmatprep.subr.mxu0 0.0
        %1127 = vmatpush1.xpose.msra.mxu0 0.0
        %1128 = vmatprep.subr.mxu0 0.0
        %1129 = vmatpush1.xpose.msra.mxu0 0.0
        %1130 = vmatprep.subr.mxu0 0.0
        %1131 = vmatpush1.xpose.msra.mxu0 0.0
        %1132 = vmatprep.subr.mxu0 0.0
        %1133 = vmatpush1.xpose.msra.mxu0 0.0
        %1134 = vmatprep.subr.mxu0 0.0
        %1135 = vmatpush1.xpose.msra.mxu0 0.0
        %1136 = vmatprep.subr.mxu0 0.0
        %1137 = vmatpush1.xpose.msra.mxu0 0.0
        %1138 = vmatprep.subr.mxu0 0.0
        %1139 = vmatpush1.xpose.msra.mxu0 0.0
        %1140 = vmatprep.subr.mxu0 0.0
        %1141 = vmatpush1.xpose.msra.mxu0 0.0
        %1142 = vmatprep.subr.mxu0 0.0
        %1143 = vmatpush1.xpose.msra.mxu0 0.0
        %1144 = vmatprep.subr.mxu0 0.0
        %1145 = vmatpush1.xpose.msra.mxu0 0.0
        %1146 = vmatprep.subr.mxu0 0.0
        %1147 = vmatpush1.xpose.msra.mxu0 0.0
        %1148 = vmatprep.mubr.f32.mxu0 0.0
        %1149 = vmatmul.mubr.f32.gmra.mrb[0].mxu0 %v907
        %v1150 = vpop.f32.mrb[0].mxu0
        %v1151 = vadd.f32 0.0, %v1150
        %v1152 = vpop.f32.mrb[0].mxu0
        %1153 = vmatprep.mubr.f32.mxu0 0.0
        %1154 = vmatmul.mubr.f32.gmra.mrb[0].mxu0 %v908
        %v1155 = vpop.f32.mrb[0].mxu0
        %v1156 = vadd.f32 0.0, %v1155
        %v1157 = vpop.f32.mrb[0].mxu0
        %1158 = vmatprep.mubr.f32.mxu0 0.0
        %1159 = vmatmul.mubr.f32.gmra.mrb[0].mxu0 %v909
        %v1160 = vpop.f32.mrb[0].mxu0
        %v1161 = vadd.f32 0.0, %v1160
        %v1162 = vpop.f32.mrb[0].mxu0
        %1163 = vmatprep.mubr.f32.mxu0 0.0
        %1164 = vmatmul.mubr.f32.gmra.mrb[0].mxu0 %v910
        %v1165 = vpop.f32.mrb[0].mxu0
        %v1166 = vadd.f32 0.0, %v1165
        %v1167 = vpop.f32.mrb[0].mxu0
        %1168 = vdwg.mxu0
        %1169 = vmatprep.subr.mxu0 0.0
        %1170 = vmatpush1.xpose.msra.mxu0 %v943
        %1171 = vmatprep.subr.mxu0 0.0
        %1172 = vmatpush1.xpose.msra.mxu0 %v944
        %1173 = vmatprep.subr.mxu0 0.0
        %1174 = vmatpush1.xpose.msra.mxu0 %v945
        %1175 = vmatprep.subr.mxu0 0.0
        %1176 = vmatpush1.xpose.msra.mxu0 %v946
        %1177 = vmatprep.subr.mxu0 0.0
        %1178 = vmatpush1.xpose.msra.mxu0 0.0
        %1179 = vmatprep.subr.mxu0 0.0
        %1180 = vmatpush1.xpose.msra.mxu0 0.0
        %1181 = vmatprep.subr.mxu0 0.0
        %1182 = vmatpush1.xpose.msra.mxu0 0.0
        %1183 = vmatprep.subr.mxu0 0.0
        %1184 = vmatpush1.xpose.msra.mxu0 0.0
        %1185 = vmatprep.subr.mxu0 0.0
        %1186 = vmatpush1.xpose.msra.mxu0 0.0
        %1187 = vmatprep.subr.mxu0 0.0
        %1188 = vmatpush1.xpose.msra.mxu0 0.0
        %1189 = vmatprep.subr.mxu0 0.0
        %1190 = vmatpush1.xpose.msra.mxu0 0.0
        %1191 = vmatprep.subr.mxu0 0.0
        %1192 = vmatpush1.xpose.msra.mxu0 0.0
        %1193 = vmatprep.subr.mxu0 0.0
        %1194 = vmatpush1.xpose.msra.mxu0 0.0
        %1195 = vmatprep.subr.mxu0 0.0
        %1196 = vmatpush1.xpose.msra.mxu0 0.0
        %1197 = vmatprep.subr.mxu0 0.0
        %1198 = vmatpush1.xpose.msra.mxu0 0.0
        %1199 = vmatprep.subr.mxu0 0.0
        %1200 = vmatpush1.xpose.msra.mxu0 0.0
        %1201 = vmatprep.subr.mxu0 0.0
        %1202 = vmatpush1.xpose.msra.mxu0 0.0
        %1203 = vmatprep.subr.mxu0 0.0
        %1204 = vmatpush1.xpose.msra.mxu0 0.0
        %1205 = vmatprep.subr.mxu0 0.0
        %1206 = vmatpush1.xpose.msra.mxu0 0.0
        %1207 = vmatprep.subr.mxu0 0.0
        %1208 = vmatpush1.xpose.msra.mxu0 0.0
        %1209 = vmatprep.subr.mxu0 0.0
        %1210 = vmatpush1.xpose.msra.mxu0 0.0
        %1211 = vmatprep.subr.mxu0 0.0
        %1212 = vmatpush1.xpose.msra.mxu0 0.0
        %1213 = vmatprep.subr.mxu0 0.0
        %1214 = vmatpush1.xpose.msra.mxu0 0.0
        %1215 = vmatprep.subr.mxu0 0.0
        %1216 = vmatpush1.xpose.msra.mxu0 0.0
        %1217 = vmatprep.subr.mxu0 0.0
        %1218 = vmatpush1.xpose.msra.mxu0 0.0
        %1219 = vmatprep.subr.mxu0 0.0
        %1220 = vmatpush1.xpose.msra.mxu0 0.0
        %1221 = vmatprep.subr.mxu0 0.0
        %1222 = vmatpush1.xpose.msra.mxu0 0.0
        %1223 = vmatprep.subr.mxu0 0.0
        %1224 = vmatpush1.xpose.msra.mxu0 0.0
        %1225 = vmatprep.subr.mxu0 0.0
        %1226 = vmatpush1.xpose.msra.mxu0 0.0
        %1227 = vmatprep.subr.mxu0 0.0
        %1228 = vmatpush1.xpose.msra.mxu0 0.0
        %1229 = vmatprep.subr.mxu0 0.0
        %1230 = vmatpush1.xpose.msra.mxu0 0.0
        %1231 = vmatprep.subr.mxu0 0.0
        %1232 = vmatpush1.xpose.msra.mxu0 0.0
        %1233 = vmatprep.mubr.f32.mxu0 0.0
        %1234 = vmatmul.mubr.f32.gmra.mrb[0].mxu0 %v911
        %v1235 = vpop.f32.mrb[0].mxu0
        %v1236 = vadd.f32 0.0, %v1235
        %v1237 = vpop.f32.mrb[0].mxu0
        %1238 = vmatprep.mubr.f32.mxu0 0.0
        %1239 = vmatmul.mubr.f32.gmra.mrb[0].mxu0 %v912
        %v1240 = vpop.f32.mrb[0].mxu0
        %v1241 = vadd.f32 0.0, %v1240
        %v1242 = vpop.f32.mrb[0].mxu0
        %1243 = vmatprep.mubr.f32.mxu0 0.0
        %1244 = vmatmul.mubr.f32.gmra.mrb[0].mxu0 %v913
        %v1245 = vpop.f32.mrb[0].mxu0
        %v1246 = vadd.f32 0.0, %v1245
        %v1247 = vpop.f32.mrb[0].mxu0
        %1248 = vmatprep.mubr.f32.mxu0 0.0
        %1249 = vmatmul.mubr.f32.gmra.mrb[0].mxu0 %v914
        %v1250 = vpop.f32.mrb[0].mxu0
        %v1251 = vadd.f32 0.0, %v1250
        %v1252 = vpop.f32.mrb[0].mxu0
        %1253 = vdwg.mxu0
        %1254 = vmatprep.subr.mxu0 0.0
        %1255 = vmatpush1.xpose.msra.mxu0 %v947
        %1256 = vmatprep.subr.mxu0 0.0
        %1257 = vmatpush1.xpose.msra.mxu0 %v948
        %1258 = vmatprep.subr.mxu0 0.0
        %1259 = vmatpush1.xpose.msra.mxu0 %v949
        %1260 = vmatprep.subr.mxu0 0.0
        %1261 = vmatpush1.xpose.msra.mxu0 %v950
        %1262 = vmatprep.subr.mxu0 0.0
        %1263 = vmatpush1.xpose.msra.mxu0 0.0
        %1264 = vmatprep.subr.mxu0 0.0
        %1265 = vmatpush1.xpose.msra.mxu0 0.0
        %1266 = vmatprep.subr.mxu0 0.0
        %1267 = vmatpush1.xpose.msra.mxu0 0.0
        %1268 = vmatprep.subr.mxu0 0.0
        %1269 = vmatpush1.xpose.msra.mxu0 0.0
        %1270 = vmatprep.subr.mxu0 0.0
        %1271 = vmatpush1.xpose.msra.mxu0 0.0
        %1272 = vmatprep.subr.mxu0 0.0
        %1273 = vmatpush1.xpose.msra.mxu0 0.0
        %1274 = vmatprep.subr.mxu0 0.0
        %1275 = vmatpush1.xpose.msra.mxu0 0.0
        %1276 = vmatprep.subr.mxu0 0.0
        %1277 = vmatpush1.xpose.msra.mxu0 0.0
        %1278 = vmatprep.subr.mxu0 0.0
        %1279 = vmatpush1.xpose.msra.mxu0 0.0
        %1280 = vmatprep.subr.mxu0 0.0
        %1281 = vmatpush1.xpose.msra.mxu0 0.0
        %1282 = vmatprep.subr.mxu0 0.0
        %1283 = vmatpush1.xpose.msra.mxu0 0.0
        %1284 = vmatprep.subr.mxu0 0.0
        %1285 = vmatpush1.xpose.msra.mxu0 0.0
        %1286 = vmatprep.subr.mxu0 0.0
        %1287 = vmatpush1.xpose.msra.mxu0 0.0
        %1288 = vmatprep.subr.mxu0 0.0
        %1289 = vmatpush1.xpose.msra.mxu0 0.0
        %1290 = vmatprep.subr.mxu0 0.0
        %1291 = vmatpush1.xpose.msra.mxu0 0.0
        %1292 = vmatprep.subr.mxu0 0.0
        %1293 = vmatpush1.xpose.msra.mxu0 0.0
        %1294 = vmatprep.subr.mxu0 0.0
        %1295 = vmatpush1.xpose.msra.mxu0 0.0
        %1296 = vmatprep.subr.mxu0 0.0
        %1297 = vmatpush1.xpose.msra.mxu0 0.0
        %1298 = vmatprep.subr.mxu0 0.0
        %1299 = vmatpush1.xpose.msra.mxu0 0.0
        %1300 = vmatprep.subr.mxu0 0.0
        %1301 = vmatpush1.xpose.msra.mxu0 0.0
        %1302 = vmatprep.subr.mxu0 0.0
        %1303 = vmatpush1.xpose.msra.mxu0 0.0
        %1304 = vmatprep.subr.mxu0 0.0
        %1305 = vmatpush1.xpose.msra.mxu0 0.0
        %1306 = vmatprep.subr.mxu0 0.0
        %1307 = vmatpush1.xpose.msra.mxu0 0.0
        %1308 = vmatprep.subr.mxu0 0.0
        %1309 = vmatpush1.xpose.msra.mxu0 0.0
        %1310 = vmatprep.subr.mxu0 0.0
        %1311 = vmatpush1.xpose.msra.mxu0 0.0
        %1312 = vmatprep.subr.mxu0 0.0
        %1313 = vmatpush1.xpose.msra.mxu0 0.0
        %1314 = vmatprep.subr.mxu0 0.0
        %1315 = vmatpush1.xpose.msra.mxu0 0.0
        %1316 = vmatprep.subr.mxu0 0.0
        %1317 = vmatpush1.xpose.msra.mxu0 0.0
        %1318 = vmatprep.mubr.f32.mxu0 0.0
        %1319 = vmatmul.mubr.f32.gmra.mrb[0].mxu0 %v915
        %v1320 = vpop.f32.mrb[0].mxu0
        %v1321 = vadd.f32 0.0, %v1320
        %v1322 = vpop.f32.mrb[0].mxu0
        %1323 = vmatprep.mubr.f32.mxu0 0.0
        %1324 = vmatmul.mubr.f32.gmra.mrb[0].mxu0 %v916
        %v1325 = vpop.f32.mrb[0].mxu0
        %v1326 = vadd.f32 0.0, %v1325
        %v1327 = vpop.f32.mrb[0].mxu0
        %1328 = vmatprep.mubr.f32.mxu0 0.0
        %1329 = vmatmul.mubr.f32.gmra.mrb[0].mxu0 %v917
        %v1330 = vpop.f32.mrb[0].mxu0
        %v1331 = vadd.f32 0.0, %v1330
        %v1332 = vpop.f32.mrb[0].mxu0
        %1333 = vmatprep.mubr.f32.mxu0 0.0
        %1334 = vmatmul.mubr.f32.gmra.mrb[0].mxu0 %v918
        %v1335 = vpop.f32.mrb[0].mxu0
        %v1336 = vadd.f32 0.0, %v1335
        %v1337 = vpop.f32.mrb[0].mxu0
        %1338 = vdwg.mxu0
        %1339 = vmatprep.subr.mxu0 0.0
        %1340 = vmatpush1.xpose.msra.mxu0 %v951
        %1341 = vmatprep.subr.mxu0 0.0
        %1342 = vmatpush1.xpose.msra.mxu0 %v952
        %1343 = vmatprep.subr.mxu0 0.0
        %1344 = vmatpush1.xpose.msra.mxu0 %v953
        %1345 = vmatprep.subr.mxu0 0.0
        %1346 = vmatpush1.xpose.msra.mxu0 %v954
        %1347 = vmatprep.subr.mxu0 0.0
        %1348 = vmatpush1.xpose.msra.mxu0 0.0
        %1349 = vmatprep.subr.mxu0 0.0
        %1350 = vmatpush1.xpose.msra.mxu0 0.0
        %1351 = vmatprep.subr.mxu0 0.0
        %1352 = vmatpush1.xpose.msra.mxu0 0.0
        %1353 = vmatprep.subr.mxu0 0.0
        %1354 = vmatpush1.xpose.msra.mxu0 0.0
        %1355 = vmatprep.subr.mxu0 0.0
        %1356 = vmatpush1.xpose.msra.mxu0 0.0
        %1357 = vmatprep.subr.mxu0 0.0
        %1358 = vmatpush1.xpose.msra.mxu0 0.0
        %1359 = vmatprep.subr.mxu0 0.0
        %1360 = vmatpush1.xpose.msra.mxu0 0.0
        %1361 = vmatprep.subr.mxu0 0.0
        %1362 = vmatpush1.xpose.msra.mxu0 0.0
        %1363 = vmatprep.subr.mxu0 0.0
        %1364 = vmatpush1.xpose.msra.mxu0 0.0
        %1365 = vmatprep.subr.mxu0 0.0
        %1366 = vmatpush1.xpose.msra.mxu0 0.0
        %1367 = vmatprep.subr.mxu0 0.0
        %1368 = vmatpush1.xpose.msra.mxu0 0.0
        %1369 = vmatprep.subr.mxu0 0.0
        %1370 = vmatpush1.xpose.msra.mxu0 0.0
        %1371 = vmatprep.subr.mxu0 0.0
        %1372 = vmatpush1.xpose.msra.mxu0 0.0
        %1373 = vmatprep.subr.mxu0 0.0
        %1374 = vmatpush1.xpose.msra.mxu0 0.0
        %1375 = vmatprep.subr.mxu0 0.0
        %1376 = vmatpush1.xpose.msra.mxu0 0.0
        %1377 = vmatprep.subr.mxu0 0.0
        %1378 = vmatpush1.xpose.msra.mxu0 0.0
        %1379 = vmatprep.subr.mxu0 0.0
        %1380 = vmatpush1.xpose.msra.mxu0 0.0
        %1381 = vmatprep.subr.mxu0 0.0
        %1382 = vmatpush1.xpose.msra.mxu0 0.0
        %1383 = vmatprep.subr.mxu0 0.0
        %1384 = vmatpush1.xpose.msra.mxu0 0.0
        %1385 = vmatprep.subr.mxu0 0.0
        %1386 = vmatpush1.xpose.msra.mxu0 0.0
        %1387 = vmatprep.subr.mxu0 0.0
        %1388 = vmatpush1.xpose.msra.mxu0 0.0
        %1389 = vmatprep.subr.mxu0 0.0
        %1390 = vmatpush1.xpose.msra.mxu0 0.0
        %1391 = vmatprep.subr.mxu0 0.0
        %1392 = vmatpush1.xpose.msra.mxu0 0.0
        %1393 = vmatprep.subr.mxu0 0.0
        %1394 = vmatpush1.xpose.msra.mxu0 0.0
        %1395 = vmatprep.subr.mxu0 0.0
        %1396 = vmatpush1.xpose.msra.mxu0 0.0
        %1397 = vmatprep.subr.mxu0 0.0
        %1398 = vmatpush1.xpose.msra.mxu0 0.0
        %1399 = vmatprep.subr.mxu0 0.0
        %1400 = vmatpush1.xpose.msra.mxu0 0.0
        %1401 = vmatprep.subr.mxu0 0.0
        %1402 = vmatpush1.xpose.msra.mxu0 0.0
        %1403 = vmatprep.mubr.f32.mxu0 0.0
        %1404 = vmatmul.mubr.f32.gmra.mrb[0].mxu0 %v919
        %v1405 = vpop.f32.mrb[0].mxu0
        %v1406 = vadd.f32 0.0, %v1405
        %v1407 = vpop.f32.mrb[0].mxu0
        %1408 = vmatprep.mubr.f32.mxu0 0.0
        %1409 = vmatmul.mubr.f32.gmra.mrb[0].mxu0 %v920
        %v1410 = vpop.f32.mrb[0].mxu0
        %v1411 = vadd.f32 0.0, %v1410
        %v1412 = vpop.f32.mrb[0].mxu0
        %1413 = vmatprep.mubr.f32.mxu0 0.0
        %1414 = vmatmul.mubr.f32.gmra.mrb[0].mxu0 %v921
        %v1415 = vpop.f32.mrb[0].mxu0
        %v1416 = vadd.f32 0.0, %v1415
        %v1417 = vpop.f32.mrb[0].mxu0
        %1418 = vmatprep.mubr.f32.mxu0 0.0
        %1419 = vmatmul.mubr.f32.gmra.mrb[0].mxu0 %v922
        %v1420 = vpop.f32.mrb[0].mxu0
        %v1421 = vadd.f32 0.0, %v1420
        %v1422 = vpop.f32.mrb[0].mxu0
        %1423 = vdwg.mxu0
        %1424 = vmatprep.subr.mxu0 0.0
        %1425 = vmatpush1.xpose.msra.mxu0 %v955
        %1426 = vmatprep.subr.mxu0 0.0
        %1427 = vmatpush1.xpose.msra.mxu0 %v956
        %1428 = vmatprep.subr.mxu0 0.0
        %1429 = vmatpush1.xpose.msra.mxu0 %v957
        %1430 = vmatprep.subr.mxu0 0.0
        %1431 = vmatpush1.xpose.msra.mxu0 %v958
        %1432 = vmatprep.subr.mxu0 0.0
        %1433 = vmatpush1.xpose.msra.mxu0 0.0
        %1434 = vmatprep.subr.mxu0 0.0
        %1435 = vmatpush1.xpose.msra.mxu0 0.0
        %1436 = vmatprep.subr.mxu0 0.0
        %1437 = vmatpush1.xpose.msra.mxu0 0.0
        %1438 = vmatprep.subr.mxu0 0.0
        %1439 = vmatpush1.xpose.msra.mxu0 0.0
        %1440 = vmatprep.subr.mxu0 0.0
        %1441 = vmatpush1.xpose.msra.mxu0 0.0
        %1442 = vmatprep.subr.mxu0 0.0
        %1443 = vmatpush1.xpose.msra.mxu0 0.0
        %1444 = vmatprep.subr.mxu0 0.0
        %1445 = vmatpush1.xpose.msra.mxu0 0.0
        %1446 = vmatprep.subr.mxu0 0.0
        %1447 = vmatpush1.xpose.msra.mxu0 0.0
        %1448 = vmatprep.subr.mxu0 0.0
        %1449 = vmatpush1.xpose.msra.mxu0 0.0
        %1450 = vmatprep.subr.mxu0 0.0
        %1451 = vmatpush1.xpose.msra.mxu0 0.0
        %1452 = vmatprep.subr.mxu0 0.0
        %1453 = vmatpush1.xpose.msra.mxu0 0.0
        %1454 = vmatprep.subr.mxu0 0.0
        %1455 = vmatpush1.xpose.msra.mxu0 0.0
        %1456 = vmatprep.subr.mxu0 0.0
        %1457 = vmatpush1.xpose.msra.mxu0 0.0
        %1458 = vmatprep.subr.mxu0 0.0
        %1459 = vmatpush1.xpose.msra.mxu0 0.0
        %1460 = vmatprep.subr.mxu0 0.0
        %1461 = vmatpush1.xpose.msra.mxu0 0.0
        %1462 = vmatprep.subr.mxu0 0.0
        %1463 = vmatpush1.xpose.msra.mxu0 0.0
        %1464 = vmatprep.subr.mxu0 0.0
        %1465 = vmatpush1.xpose.msra.mxu0 0.0
        %1466 = vmatprep.subr.mxu0 0.0
        %1467 = vmatpush1.xpose.msra.mxu0 0.0
        %1468 = vmatprep.subr.mxu0 0.0
        %1469 = vmatpush1.xpose.msra.mxu0 0.0
        %1470 = vmatprep.subr.mxu0 0.0
        %1471 = vmatpush1.xpose.msra.mxu0 0.0
        %1472 = vmatprep.subr.mxu0 0.0
        %1473 = vmatpush1.xpose.msra.mxu0 0.0
        %1474 = vmatprep.subr.mxu0 0.0
        %1475 = vmatpush1.xpose.msra.mxu0 0.0
        %1476 = vmatprep.subr.mxu0 0.0
        %1477 = vmatpush1.xpose.msra.mxu0 0.0
        %1478 = vmatprep.subr.mxu0 0.0
        %1479 = vmatpush1.xpose.msra.mxu0 0.0
        %1480 = vmatprep.subr.mxu0 0.0
        %1481 = vmatpush1.xpose.msra.mxu0 0.0
        %1482 = vmatprep.subr.mxu0 0.0
        %1483 = vmatpush1.xpose.msra.mxu0 0.0
        %1484 = vmatprep.subr.mxu0 0.0
        %1485 = vmatpush1.xpose.msra.mxu0 0.0
        %1486 = vmatprep.subr.mxu0 0.0
        %1487 = vmatpush1.xpose.msra.mxu0 0.0
        %1488 = vmatprep.mubr.f32.mxu0 0.0
        %1489 = vmatmul.mubr.f32.gmra.mrb[0].mxu0 %v923
        %v1490 = vpop.f32.mrb[0].mxu0
        %v1491 = vadd.f32 0.0, %v1490
        %v1492 = vpop.f32.mrb[0].mxu0
        %1493 = vmatprep.mubr.f32.mxu0 0.0
        %1494 = vmatmul.mubr.f32.gmra.mrb[0].mxu0 %v924
        %v1495 = vpop.f32.mrb[0].mxu0
        %v1496 = vadd.f32 0.0, %v1495
        %v1497 = vpop.f32.mrb[0].mxu0
        %1498 = vmatprep.mubr.f32.mxu0 0.0
        %1499 = vmatmul.mubr.f32.gmra.mrb[0].mxu0 %v925
        %v1500 = vpop.f32.mrb[0].mxu0
        %v1501 = vadd.f32 0.0, %v1500
        %v1502 = vpop.f32.mrb[0].mxu0
        %1503 = vmatprep.mubr.f32.mxu0 0.0
        %1504 = vmatmul.mubr.f32.gmra.mrb[0].mxu0 %v926
        %v1505 = vpop.f32.mrb[0].mxu0
        %v1506 = vadd.f32 0.0, %v1505
        %v1507 = vpop.f32.mrb[0].mxu0
        %1508 = vdwg.mxu0
        %1509 = vmatprep.subr.mxu0 0.0
        %1510 = vmatpush1.xpose.msra.mxu0 %v959
        %1511 = vmatprep.subr.mxu0 0.0
        %1512 = vmatpush1.xpose.msra.mxu0 %v960
        %1513 = vmatprep.subr.mxu0 0.0
        %1514 = vmatpush1.xpose.msra.mxu0 %v961
        %1515 = vmatprep.subr.mxu0 0.0
        %1516 = vmatpush1.xpose.msra.mxu0 %v962
        %1517 = vmatprep.subr.mxu0 0.0
        %1518 = vmatpush1.xpose.msra.mxu0 0.0
        %1519 = vmatprep.subr.mxu0 0.0
        %1520 = vmatpush1.xpose.msra.mxu0 0.0
        %1521 = vmatprep.subr.mxu0 0.0
        %1522 = vmatpush1.xpose.msra.mxu0 0.0
        %1523 = vmatprep.subr.mxu0 0.0
        %1524 = vmatpush1.xpose.msra.mxu0 0.0
        %1525 = vmatprep.subr.mxu0 0.0
        %1526 = vmatpush1.xpose.msra.mxu0 0.0
        %1527 = vmatprep.subr.mxu0 0.0
        %1528 = vmatpush1.xpose.msra.mxu0 0.0
        %1529 = vmatprep.subr.mxu0 0.0
        %1530 = vmatpush1.xpose.msra.mxu0 0.0
        %1531 = vmatprep.subr.mxu0 0.0
        %1532 = vmatpush1.xpose.msra.mxu0 0.0
        %1533 = vmatprep.subr.mxu0 0.0
        %1534 = vmatpush1.xpose.msra.mxu0 0.0
        %1535 = vmatprep.subr.mxu0 0.0
        %1536 = vmatpush1.xpose.msra.mxu0 0.0
        %1537 = vmatprep.subr.mxu0 0.0
        %1538 = vmatpush1.xpose.msra.mxu0 0.0
        %1539 = vmatprep.subr.mxu0 0.0
        %1540 = vmatpush1.xpose.msra.mxu0 0.0
        %1541 = vmatprep.subr.mxu0 0.0
        %1542 = vmatpush1.xpose.msra.mxu0 0.0
        %1543 = vmatprep.subr.mxu0 0.0
        %1544 = vmatpush1.xpose.msra.mxu0 0.0
        %1545 = vmatprep.subr.mxu0 0.0
        %1546 = vmatpush1.xpose.msra.mxu0 0.0
        %1547 = vmatprep.subr.mxu0 0.0
        %1548 = vmatpush1.xpose.msra.mxu0 0.0
        %1549 = vmatprep.subr.mxu0 0.0
        %1550 = vmatpush1.xpose.msra.mxu0 0.0
        %1551 = vmatprep.subr.mxu0 0.0
        %1552 = vmatpush1.xpose.msra.mxu0 0.0
        %1553 = vmatprep.subr.mxu0 0.0
        %1554 = vmatpush1.xpose.msra.mxu0 0.0
        %1555 = vmatprep.subr.mxu0 0.0
        %1556 = vmatpush1.xpose.msra.mxu0 0.0
        %1557 = vmatprep.subr.mxu0 0.0
        %1558 = vmatpush1.xpose.msra.mxu0 0.0
        %1559 = vmatprep.subr.mxu0 0.0
        %1560 = vmatpush1.xpose.msra.mxu0 0.0
        %1561 = vmatprep.subr.mxu0 0.0
        %1562 = vmatpush1.xpose.msra.mxu0 0.0
        %1563 = vmatprep.subr.mxu0 0.0
        %1564 = vmatpush1.xpose.msra.mxu0 0.0
        %1565 = vmatprep.subr.mxu0 0.0
        %1566 = vmatpush1.xpose.msra.mxu0 0.0
        %1567 = vmatprep.subr.mxu0 0.0
        %1568 = vmatpush1.xpose.msra.mxu0 0.0
        %1569 = vmatprep.subr.mxu0 0.0
        %1570 = vmatpush1.xpose.msra.mxu0 0.0
        %1571 = vmatprep.subr.mxu0 0.0
        %1572 = vmatpush1.xpose.msra.mxu0 0.0
        %1573 = vmatprep.mubr.f32.mxu0 0.0
        %1574 = vmatmul.mubr.f32.gmra.mrb[0].mxu0 %v927
        %v1575 = vpop.f32.mrb[0].mxu0
        %v1576 = vadd.f32 0.0, %v1575
        %v1577 = vpop.f32.mrb[0].mxu0
        %1578 = vmatprep.mubr.f32.mxu0 0.0
        %1579 = vmatmul.mubr.f32.gmra.mrb[0].mxu0 %v928
        %v1580 = vpop.f32.mrb[0].mxu0
        %v1581 = vadd.f32 0.0, %v1580
        %v1582 = vpop.f32.mrb[0].mxu0
        %1583 = vmatprep.mubr.f32.mxu0 0.0
        %1584 = vmatmul.mubr.f32.gmra.mrb[0].mxu0 %v929
        %v1585 = vpop.f32.mrb[0].mxu0
        %v1586 = vadd.f32 0.0, %v1585
        %v1587 = vpop.f32.mrb[0].mxu0
        %1588 = vmatprep.mubr.f32.mxu0 0.0
        %1589 = vmatmul.mubr.f32.gmra.mrb[0].mxu0 %v930
        %v1590 = vpop.f32.mrb[0].mxu0
        %v1591 = vadd.f32 0.0, %v1590
        %v1592 = vpop.f32.mrb[0].mxu0
        %1593 = vdwg.mxu0
        %1594 = vmatprep.subr.mxu0 0.0
        %1595 = vmatpush1.xpose.msra.mxu0 %v963
        %1596 = vmatprep.subr.mxu0 0.0
        %1597 = vmatpush1.xpose.msra.mxu0 %v964
        %1598 = vmatprep.subr.mxu0 0.0
        %1599 = vmatpush1.xpose.msra.mxu0 %v965
        %1600 = vmatprep.subr.mxu0 0.0
        %1601 = vmatpush1.xpose.msra.mxu0 %v966
        %1602 = vmatprep.subr.mxu0 0.0
        %1603 = vmatpush1.xpose.msra.mxu0 0.0
        %1604 = vmatprep.subr.mxu0 0.0
        %1605 = vmatpush1.xpose.msra.mxu0 0.0
        %1606 = vmatprep.subr.mxu0 0.0
        %1607 = vmatpush1.xpose.msra.mxu0 0.0
        %1608 = vmatprep.subr.mxu0 0.0
        %1609 = vmatpush1.xpose.msra.mxu0 0.0
        %1610 = vmatprep.subr.mxu0 0.0
        %1611 = vmatpush1.xpose.msra.mxu0 0.0
        %1612 = vmatprep.subr.mxu0 0.0
        %1613 = vmatpush1.xpose.msra.mxu0 0.0
        %1614 = vmatprep.subr.mxu0 0.0
        %1615 = vmatpush1.xpose.msra.mxu0 0.0
        %1616 = vmatprep.subr.mxu0 0.0
        %1617 = vmatpush1.xpose.msra.mxu0 0.0
        %1618 = vmatprep.subr.mxu0 0.0
        %1619 = vmatpush1.xpose.msra.mxu0 0.0
        %1620 = vmatprep.subr.mxu0 0.0
        %1621 = vmatpush1.xpose.msra.mxu0 0.0
        %1622 = vmatprep.subr.mxu0 0.0
        %1623 = vmatpush1.xpose.msra.mxu0 0.0
        %1624 = vmatprep.subr.mxu0 0.0
        %1625 = vmatpush1.xpose.msra.mxu0 0.0
        %1626 = vmatprep.subr.mxu0 0.0
        %1627 = vmatpush1.xpose.msra.mxu0 0.0
        %1628 = vmatprep.subr.mxu0 0.0
        %1629 = vmatpush1.xpose.msra.mxu0 0.0
        %1630 = vmatprep.subr.mxu0 0.0
        %1631 = vmatpush1.xpose.msra.mxu0 0.0
        %1632 = vmatprep.subr.mxu0 0.0
        %1633 = vmatpush1.xpose.msra.mxu0 0.0
        %1634 = vmatprep.subr.mxu0 0.0
        %1635 = vmatpush1.xpose.msra.mxu0 0.0
        %1636 = vmatprep.subr.mxu0 0.0
        %1637 = vmatpush1.xpose.msra.mxu0 0.0
        %1638 = vmatprep.subr.mxu0 0.0
        %1639 = vmatpush1.xpose.msra.mxu0 0.0
        %1640 = vmatprep.subr.mxu0 0.0
        %1641 = vmatpush1.xpose.msra.mxu0 0.0
        %1642 = vmatprep.subr.mxu0 0.0
        %1643 = vmatpush1.xpose.msra.mxu0 0.0
        %1644 = vmatprep.subr.mxu0 0.0
        %1645 = vmatpush1.xpose.msra.mxu0 0.0
        %1646 = vmatprep.subr.mxu0 0.0
        %1647 = vmatpush1.xpose.msra.mxu0 0.0
        %1648 = vmatprep.subr.mxu0 0.0
        %1649 = vmatpush1.xpose.msra.mxu0 0.0
        %1650 = vmatprep.subr.mxu0 0.0
        %1651 = vmatpush1.xpose.msra.mxu0 0.0
        %1652 = vmatprep.subr.mxu0 0.0
        %1653 = vmatpush1.xpose.msra.mxu0 0.0
        %1654 = vmatprep.subr.mxu0 0.0
        %1655 = vmatpush1.xpose.msra.mxu0 0.0
        %1656 = vmatprep.subr.mxu0 0.0
        %1657 = vmatpush1.xpose.msra.mxu0 0.0
        %1658 = vmatprep.mubr.f32.mxu0 0.0
        %1659 = vmatmul.mubr.f32.gmra.mrb[0].mxu0 %v931
        %v1660 = vpop.f32.mrb[0].mxu0
        %v1661 = vadd.f32 0.0, %v1660
        %v1662 = vpop.f32.mrb[0].mxu0
        %1663 = vmatprep.mubr.f32.mxu0 0.0
        %1664 = vmatmul.mubr.f32.gmra.mrb[0].mxu0 %v932
        %v1665 = vpop.f32.mrb[0].mxu0
        %v1666 = vadd.f32 0.0, %v1665
        %v1667 = vpop.f32.mrb[0].mxu0
        %1668 = vmatprep.mubr.f32.mxu0 0.0
        %1669 = vmatmul.mubr.f32.gmra.mrb[0].mxu0 %v933
        %v1670 = vpop.f32.mrb[0].mxu0
        %v1671 = vadd.f32 0.0, %v1670
        %v1672 = vpop.f32.mrb[0].mxu0
        %1673 = vmatprep.mubr.f32.mxu0 0.0
        %1674 = vmatmul.mubr.f32.gmra.mrb[0].mxu0 %v934
        %v1675 = vpop.f32.mrb[0].mxu0
        %v1676 = vadd.f32 0.0, %v1675
        %v1677 = vpop.f32.mrb[0].mxu0
        %1678 = vdwg.mxu0
        %v1679 = vmul.f32 %v1066, 0.088388346
        %v1680 = vmul.f32 %v1071, 0.088388346
        %v1681 = vmul.f32 %v1076, 0.088388346
        %v1682 = vmul.f32 %v1081, 0.088388346
        %v1683 = vmul.f32 %v1151, 0.088388346
        %v1684 = vmul.f32 %v1156, 0.088388346
        %v1685 = vmul.f32 %v1161, 0.088388346
        %v1686 = vmul.f32 %v1166, 0.088388346
        %v1687 = vmul.f32 %v1236, 0.088388346
        %v1688 = vmul.f32 %v1241, 0.088388346
        %v1689 = vmul.f32 %v1246, 0.088388346
        %v1690 = vmul.f32 %v1251, 0.088388346
        %v1691 = vmul.f32 %v1321, 0.088388346
        %v1692 = vmul.f32 %v1326, 0.088388346
        %v1693 = vmul.f32 %v1331, 0.088388346
        %v1694 = vmul.f32 %v1336, 0.088388346
        %v1695 = vmul.f32 %v1406, 0.088388346
        %v1696 = vmul.f32 %v1411, 0.088388346
        %v1697 = vmul.f32 %v1416, 0.088388346
        %v1698 = vmul.f32 %v1421, 0.088388346
        %v1699 = vmul.f32 %v1491, 0.088388346
        %v1700 = vmul.f32 %v1496, 0.088388346
        %v1701 = vmul.f32 %v1501, 0.088388346
        %v1702 = vmul.f32 %v1506, 0.088388346
        %v1703 = vmul.f32 %v1576, 0.088388346
        %v1704 = vmul.f32 %v1581, 0.088388346
        %v1705 = vmul.f32 %v1586, 0.088388346
        %v1706 = vmul.f32 %v1591, 0.088388346
        %v1707 = vmul.f32 %v1661, 0.088388346
        %v1708 = vmul.f32 %v1666, 0.088388346
        %v1709 = vmul.f32 %v1671, 0.088388346
        %v1710 = vmul.f32 %v1676, 0.088388346
        %vm1711 = vcmask 261120
        %v1712 = vsel %vm1711, %v1679, -inf
        %1713 = vmax.xlane.f32.xlu0 %v1712
        %v1714 = vpop.xlane.xlu0 %1713
        %v1715 = vsel %vm1711, %v1680, -inf
        %1716 = vmax.xlane.f32.xlu0 %v1715
        %v1717 = vpop.xlane.xlu0 %1716
        %v1718 = vsel %vm1711, %v1681, -inf
        %1719 = vmax.xlane.f32.xlu0 %v1718
        %v1720 = vpop.xlane.xlu0 %1719
        %v1721 = vsel %vm1711, %v1682, -inf
        %1722 = vmax.xlane.f32.xlu0 %v1721
        %v1723 = vpop.xlane.xlu0 %1722
        %v1724 = vsel %vm1711, %v1683, -inf
        %1725 = vmax.xlane.f32.xlu0 %v1724
        %v1726 = vpop.xlane.xlu0 %1725
        %v1727 = vsel %vm1711, %v1684, -inf
        %1728 = vmax.xlane.f32.xlu0 %v1727
        %v1729 = vpop.xlane.xlu0 %1728
        %v1730 = vsel %vm1711, %v1685, -inf
        %1731 = vmax.xlane.f32.xlu0 %v1730
        %v1732 = vpop.xlane.xlu0 %1731
        %v1733 = vsel %vm1711, %v1686, -inf
        %1734 = vmax.xlane.f32.xlu0 %v1733
        %v1735 = vpop.xlane.xlu0 %1734
        %v1736 = vsel %vm1711, %v1687, -inf
        %1737 = vmax.xlane.f32.xlu0 %v1736
        %v1738 = vpop.xlane.xlu0 %1737
        %v1739 = vsel %vm1711, %v1688, -inf
        %1740 = vmax.xlane.f32.xlu0 %v1739
        %v1741 = vpop.xlane.xlu0 %1740
        %v1742 = vsel %vm1711, %v1689, -inf
        %1743 = vmax.xlane.f32.xlu0 %v1742
        %v1744 = vpop.xlane.xlu0 %1743
        %v1745 = vsel %vm1711, %v1690, -inf
        %1746 = vmax.xlane.f32.xlu0 %v1745
        %v1747 = vpop.xlane.xlu0 %1746
        %v1748 = vsel %vm1711, %v1691, -inf
        %1749 = vmax.xlane.f32.xlu0 %v1748
        %v1750 = vpop.xlane.xlu0 %1749
        %v1751 = vsel %vm1711, %v1692, -inf
        %1752 = vmax.xlane.f32.xlu0 %v1751
        %v1753 = vpop.xlane.xlu0 %1752
        %v1754 = vsel %vm1711, %v1693, -inf
        %1755 = vmax.xlane.f32.xlu0 %v1754
        %v1756 = vpop.xlane.xlu0 %1755
        %v1757 = vsel %vm1711, %v1694, -inf
        %1758 = vmax.xlane.f32.xlu0 %v1757
        %v1759 = vpop.xlane.xlu0 %1758
        %v1760 = vsel %vm1711, %v1695, -inf
        %1761 = vmax.xlane.f32.xlu0 %v1760
        %v1762 = vpop.xlane.xlu0 %1761
        %v1763 = vsel %vm1711, %v1696, -inf
        %1764 = vmax.xlane.f32.xlu0 %v1763
        %v1765 = vpop.xlane.xlu0 %1764
        %v1766 = vsel %vm1711, %v1697, -inf
        %1767 = vmax.xlane.f32.xlu0 %v1766
        %v1768 = vpop.xlane.xlu0 %1767
        %v1769 = vsel %vm1711, %v1698, -inf
        %1770 = vmax.xlane.f32.xlu0 %v1769
        %v1771 = vpop.xlane.xlu0 %1770
        %v1772 = vsel %vm1711, %v1699, -inf
        %1773 = vmax.xlane.f32.xlu0 %v1772
        %v1774 = vpop.xlane.xlu0 %1773
        %v1775 = vsel %vm1711, %v1700, -inf
        %1776 = vmax.xlane.f32.xlu0 %v1775
        %v1777 = vpop.xlane.xlu0 %1776
        %v1778 = vsel %vm1711, %v1701, -inf
        %1779 = vmax.xlane.f32.xlu0 %v1778
        %v1780 = vpop.xlane.xlu0 %1779
        %v1781 = vsel %vm1711, %v1702, -inf
        %1782 = vmax.xlane.f32.xlu0 %v1781
        %v1783 = vpop.xlane.xlu0 %1782
        %v1784 = vsel %vm1711, %v1703, -inf
        %1785 = vmax.xlane.f32.xlu0 %v1784
        %v1786 = vpop.xlane.xlu0 %1785
        %v1787 = vsel %vm1711, %v1704, -inf
        %1788 = vmax.xlane.f32.xlu0 %v1787
        %v1789 = vpop.xlane.xlu0 %1788
        %v1790 = vsel %vm1711, %v1705, -inf
        %1791 = vmax.xlane.f32.xlu0 %v1790
        %v1792 = vpop.xlane.xlu0 %1791
        %v1793 = vsel %vm1711, %v1706, -inf
        %1794 = vmax.xlane.f32.xlu0 %v1793
        %v1795 = vpop.xlane.xlu0 %1794
        %v1796 = vsel %vm1711, %v1707, -inf
        %1797 = vmax.xlane.f32.xlu0 %v1796
        %v1798 = vpop.xlane.xlu0 %1797
        %v1799 = vsel %vm1711, %v1708, -inf
        %1800 = vmax.xlane.f32.xlu0 %v1799
        %v1801 = vpop.xlane.xlu0 %1800
        %v1802 = vsel %vm1711, %v1709, -inf
        %1803 = vmax.xlane.f32.xlu0 %v1802
        %v1804 = vpop.xlane.xlu0 %1803
        %v1805 = vsel %vm1711, %v1710, -inf
        %1806 = vmax.xlane.f32.xlu0 %v1805
        %v1807 = vpop.xlane.xlu0 %1806
        %v1808 = vsub.f32 %v1679, %v1714
        %v1809 = vsub.f32 %v1680, %v1717
        %v1810 = vsub.f32 %v1681, %v1720
        %v1811 = vsub.f32 %v1682, %v1723
        %v1812 = vsub.f32 %v1683, %v1726
        %v1813 = vsub.f32 %v1684, %v1729
        %v1814 = vsub.f32 %v1685, %v1732
        %v1815 = vsub.f32 %v1686, %v1735
        %v1816 = vsub.f32 %v1687, %v1738
        %v1817 = vsub.f32 %v1688, %v1741
        %v1818 = vsub.f32 %v1689, %v1744
        %v1819 = vsub.f32 %v1690, %v1747
        %v1820 = vsub.f32 %v1691, %v1750
        %v1821 = vsub.f32 %v1692, %v1753
        %v1822 = vsub.f32 %v1693, %v1756
        %v1823 = vsub.f32 %v1694, %v1759
        %v1824 = vsub.f32 %v1695, %v1762
        %v1825 = vsub.f32 %v1696, %v1765
        %v1826 = vsub.f32 %v1697, %v1768
        %v1827 = vsub.f32 %v1698, %v1771
        %v1828 = vsub.f32 %v1699, %v1774
        %v1829 = vsub.f32 %v1700, %v1777
        %v1830 = vsub.f32 %v1701, %v1780
        %v1831 = vsub.f32 %v1702, %v1783
        %v1832 = vsub.f32 %v1703, %v1786
        %v1833 = vsub.f32 %v1704, %v1789
        %v1834 = vsub.f32 %v1705, %v1792
        %v1835 = vsub.f32 %v1706, %v1795
        %v1836 = vsub.f32 %v1707, %v1798
        %v1837 = vsub.f32 %v1708, %v1801
        %v1838 = vsub.f32 %v1709, %v1804
        %v1839 = vsub.f32 %v1710, %v1807
        %v1840 = vmul.f32 %v1808, 1.442695
        %v1841 = vpow.pop %v1840
        %v1842 = vmul.f32 %v1809, 1.442695
        %v1843 = vpow.pop %v1842
        %v1844 = vmul.f32 %v1810, 1.442695
        %v1845 = vpow.pop %v1844
        %v1846 = vmul.f32 %v1811, 1.442695
        %v1847 = vpow.pop %v1846
        %v1848 = vmul.f32 %v1812, 1.442695
        %v1849 = vpow.pop %v1848
        %v1850 = vmul.f32 %v1813, 1.442695
        %v1851 = vpow.pop %v1850
        %v1852 = vmul.f32 %v1814, 1.442695
        %v1853 = vpow.pop %v1852
        %v1854 = vmul.f32 %v1815, 1.442695
        %v1855 = vpow.pop %v1854
        %v1856 = vmul.f32 %v1816, 1.442695
        %v1857 = vpow.pop %v1856
        %v1858 = vmul.f32 %v1817, 1.442695
        %v1859 = vpow.pop %v1858
        %v1860 = vmul.f32 %v1818, 1.442695
        %v1861 = vpow.pop %v1860
        %v1862 = vmul.f32 %v1819, 1.442695
        %v1863 = vpow.pop %v1862
        %v1864 = vmul.f32 %v1820, 1.442695
        %v1865 = vpow.pop %v1864
        %v1866 = vmul.f32 %v1821, 1.442695
        %v1867 = vpow.pop %v1866
        %v1868 = vmul.f32 %v1822, 1.442695
        %v1869 = vpow.pop %v1868
        %v1870 = vmul.f32 %v1823, 1.442695
        %v1871 = vpow.pop %v1870
        %v1872 = vmul.f32 %v1824, 1.442695
        %v1873 = vpow.pop %v1872
        %v1874 = vmul.f32 %v1825, 1.442695
        %v1875 = vpow.pop %v1874
        %v1876 = vmul.f32 %v1826, 1.442695
        %v1877 = vpow.pop %v1876
        %v1878 = vmul.f32 %v1827, 1.442695
        %v1879 = vpow.pop %v1878
        %v1880 = vmul.f32 %v1828, 1.442695
        %v1881 = vpow.pop %v1880
        %v1882 = vmul.f32 %v1829, 1.442695
        %v1883 = vpow.pop %v1882
        %v1884 = vmul.f32 %v1830, 1.442695
        %v1885 = vpow.pop %v1884
        %v1886 = vmul.f32 %v1831, 1.442695
        %v1887 = vpow.pop %v1886
        %v1888 = vmul.f32 %v1832, 1.442695
        %v1889 = vpow.pop %v1888
        %v1890 = vmul.f32 %v1833, 1.442695
        %v1891 = vpow.pop %v1890
        %v1892 = vmul.f32 %v1834, 1.442695
        %v1893 = vpow.pop %v1892
        %v1894 = vmul.f32 %v1835, 1.442695
        %v1895 = vpow.pop %v1894
        %v1896 = vmul.f32 %v1836, 1.442695
        %v1897 = vpow.pop %v1896
        %v1898 = vmul.f32 %v1837, 1.442695
        %v1899 = vpow.pop %v1898
        %v1900 = vmul.f32 %v1838, 1.442695
        %v1901 = vpow.pop %v1900
        %v1902 = vmul.f32 %v1839, 1.442695
        %v1903 = vpow.pop %v1902
        %v1904 = vsel %vm1711, %v1841, 0.0
        %1905 = vadd.xlane.f32.xlu0 %v1904
        %v1906 = vpop.xlane.xlu0 %1905
        %v1907 = vsel %vm1711, %v1843, 0.0
        %1908 = vadd.xlane.f32.xlu0 %v1907
        %v1909 = vpop.xlane.xlu0 %1908
        %v1910 = vsel %vm1711, %v1845, 0.0
        %1911 = vadd.xlane.f32.xlu0 %v1910
        %v1912 = vpop.xlane.xlu0 %1911
        %v1913 = vsel %vm1711, %v1847, 0.0
        %1914 = vadd.xlane.f32.xlu0 %v1913
        %v1915 = vpop.xlane.xlu0 %1914
        %v1916 = vsel %vm1711, %v1849, 0.0
        %1917 = vadd.xlane.f32.xlu0 %v1916
        %v1918 = vpop.xlane.xlu0 %1917
        %v1919 = vsel %vm1711, %v1851, 0.0
        %1920 = vadd.xlane.f32.xlu0 %v1919
        %v1921 = vpop.xlane.xlu0 %1920
        %v1922 = vsel %vm1711, %v1853, 0.0
        %1923 = vadd.xlane.f32.xlu0 %v1922
        %v1924 = vpop.xlane.xlu0 %1923
        %v1925 = vsel %vm1711, %v1855, 0.0
        %1926 = vadd.xlane.f32.xlu0 %v1925
        %v1927 = vpop.xlane.xlu0 %1926
        %v1928 = vsel %vm1711, %v1857, 0.0
        %1929 = vadd.xlane.f32.xlu0 %v1928
        %v1930 = vpop.xlane.xlu0 %1929
        %v1931 = vsel %vm1711, %v1859, 0.0
        %1932 = vadd.xlane.f32.xlu0 %v1931
        %v1933 = vpop.xlane.xlu0 %1932
        %v1934 = vsel %vm1711, %v1861, 0.0
        %1935 = vadd.xlane.f32.xlu0 %v1934
        %v1936 = vpop.xlane.xlu0 %1935
        %v1937 = vsel %vm1711, %v1863, 0.0
        %1938 = vadd.xlane.f32.xlu0 %v1937
        %v1939 = vpop.xlane.xlu0 %1938
        %v1940 = vsel %vm1711, %v1865, 0.0
        %1941 = vadd.xlane.f32.xlu0 %v1940
        %v1942 = vpop.xlane.xlu0 %1941
        %v1943 = vsel %vm1711, %v1867, 0.0
        %1944 = vadd.xlane.f32.xlu0 %v1943
        %v1945 = vpop.xlane.xlu0 %1944
        %v1946 = vsel %vm1711, %v1869, 0.0
        %1947 = vadd.xlane.f32.xlu0 %v1946
        %v1948 = vpop.xlane.xlu0 %1947
        %v1949 = vsel %vm1711, %v1871, 0.0
        %1950 = vadd.xlane.f32.xlu0 %v1949
        %v1951 = vpop.xlane.xlu0 %1950
        %v1952 = vsel %vm1711, %v1873, 0.0
        %1953 = vadd.xlane.f32.xlu0 %v1952
        %v1954 = vpop.xlane.xlu0 %1953
        %v1955 = vsel %vm1711, %v1875, 0.0
        %1956 = vadd.xlane.f32.xlu0 %v1955
        %v1957 = vpop.xlane.xlu0 %1956
        %v1958 = vsel %vm1711, %v1877, 0.0
        %1959 = vadd.xlane.f32.xlu0 %v1958
        %v1960 = vpop.xlane.xlu0 %1959
        %v1961 = vsel %vm1711, %v1879, 0.0
        %1962 = vadd.xlane.f32.xlu0 %v1961
        %v1963 = vpop.xlane.xlu0 %1962
        %v1964 = vsel %vm1711, %v1881, 0.0
        %1965 = vadd.xlane.f32.xlu0 %v1964
        %v1966 = vpop.xlane.xlu0 %1965
        %v1967 = vsel %vm1711, %v1883, 0.0
        %1968 = vadd.xlane.f32.xlu0 %v1967
        %v1969 = vpop.xlane.xlu0 %1968
        %v1970 = vsel %vm1711, %v1885, 0.0
        %1971 = vadd.xlane.f32.xlu0 %v1970
        %v1972 = vpop.xlane.xlu0 %1971
        %v1973 = vsel %vm1711, %v1887, 0.0
        %1974 = vadd.xlane.f32.xlu0 %v1973
        %v1975 = vpop.xlane.xlu0 %1974
        %v1976 = vsel %vm1711, %v1889, 0.0
        %1977 = vadd.xlane.f32.xlu0 %v1976
        %v1978 = vpop.xlane.xlu0 %1977
        %v1979 = vsel %vm1711, %v1891, 0.0
        %1980 = vadd.xlane.f32.xlu0 %v1979
        %v1981 = vpop.xlane.xlu0 %1980
        %v1982 = vsel %vm1711, %v1893, 0.0
        %1983 = vadd.xlane.f32.xlu0 %v1982
        %v1984 = vpop.xlane.xlu0 %1983
        %v1985 = vsel %vm1711, %v1895, 0.0
        %1986 = vadd.xlane.f32.xlu0 %v1985
        %v1987 = vpop.xlane.xlu0 %1986
        %v1988 = vsel %vm1711, %v1897, 0.0
        %1989 = vadd.xlane.f32.xlu0 %v1988
        %v1990 = vpop.xlane.xlu0 %1989
        %v1991 = vsel %vm1711, %v1899, 0.0
        %1992 = vadd.xlane.f32.xlu0 %v1991
        %v1993 = vpop.xlane.xlu0 %1992
        %v1994 = vsel %vm1711, %v1901, 0.0
        %1995 = vadd.xlane.f32.xlu0 %v1994
        %v1996 = vpop.xlane.xlu0 %1995
        %v1997 = vsel %vm1711, %v1903, 0.0
        %1998 = vadd.xlane.f32.xlu0 %v1997
        %v1999 = vpop.xlane.xlu0 %1998
        %v2000 = vrcp.pop %v1906
        %v2001 = vmul.f32 %v1841, %v2000
        %v2002 = vrcp.pop %v1909
        %v2003 = vmul.f32 %v1843, %v2002
        %v2004 = vrcp.pop %v1912
        %v2005 = vmul.f32 %v1845, %v2004
        %v2006 = vrcp.pop %v1915
        %v2007 = vmul.f32 %v1847, %v2006
        %v2008 = vrcp.pop %v1918
        %v2009 = vmul.f32 %v1849, %v2008
        %v2010 = vrcp.pop %v1921
        %v2011 = vmul.f32 %v1851, %v2010
        %v2012 = vrcp.pop %v1924
        %v2013 = vmul.f32 %v1853, %v2012
        %v2014 = vrcp.pop %v1927
        %v2015 = vmul.f32 %v1855, %v2014
        %v2016 = vrcp.pop %v1930
        %v2017 = vmul.f32 %v1857, %v2016
        %v2018 = vrcp.pop %v1933
        %v2019 = vmul.f32 %v1859, %v2018
        %v2020 = vrcp.pop %v1936
        %v2021 = vmul.f32 %v1861, %v2020
        %v2022 = vrcp.pop %v1939
        %v2023 = vmul.f32 %v1863, %v2022
        %v2024 = vrcp.pop %v1942
        %v2025 = vmul.f32 %v1865, %v2024
        %v2026 = vrcp.pop %v1945
        %v2027 = vmul.f32 %v1867, %v2026
        %v2028 = vrcp.pop %v1948
        %v2029 = vmul.f32 %v1869, %v2028
        %v2030 = vrcp.pop %v1951
        %v2031 = vmul.f32 %v1871, %v2030
        %v2032 = vrcp.pop %v1954
        %v2033 = vmul.f32 %v1873, %v2032
        %v2034 = vrcp.pop %v1957
        %v2035 = vmul.f32 %v1875, %v2034
        %v2036 = vrcp.pop %v1960
        %v2037 = vmul.f32 %v1877, %v2036
        %v2038 = vrcp.pop %v1963
        %v2039 = vmul.f32 %v1879, %v2038
        %v2040 = vrcp.pop %v1966
        %v2041 = vmul.f32 %v1881, %v2040
        %v2042 = vrcp.pop %v1969
        %v2043 = vmul.f32 %v1883, %v2042
        %v2044 = vrcp.pop %v1972
        %v2045 = vmul.f32 %v1885, %v2044
        %v2046 = vrcp.pop %v1975
        %v2047 = vmul.f32 %v1887, %v2046
        %v2048 = vrcp.pop %v1978
        %v2049 = vmul.f32 %v1889, %v2048
        %v2050 = vrcp.pop %v1981
        %v2051 = vmul.f32 %v1891, %v2050
        %v2052 = vrcp.pop %v1984
        %v2053 = vmul.f32 %v1893, %v2052
        %v2054 = vrcp.pop %v1987
        %v2055 = vmul.f32 %v1895, %v2054
        %v2056 = vrcp.pop %v1990
        %v2057 = vmul.f32 %v1897, %v2056
        %v2058 = vrcp.pop %v1993
        %v2059 = vmul.f32 %v1899, %v2058
        %v2060 = vrcp.pop %v1996
        %v2061 = vmul.f32 %v1901, %v2060
        %v2062 = vrcp.pop %v1999
        %v2063 = vmul.f32 %v1903, %v2062
        %v2065 = vsel %vm1711, %v2001, 0
        %v2068 = vsel %vm1711, %v2003, 0
        %v2071 = vsel %vm1711, %v2005, 0
        %v2074 = vsel %vm1711, %v2007, 0
        %2076 = vmatprep.subr.mxu0 0.0
        %2077 = vmatpush1.msra.mxu0 %v967
        %2078 = vmatprep.subr.mxu0 0.0
        %2079 = vmatpush1.msra.mxu0 %v968
        %2080 = vmatprep.subr.mxu0 0.0
        %2081 = vmatpush1.msra.mxu0 %v969
        %2082 = vmatprep.subr.mxu0 0.0
        %2083 = vmatpush1.msra.mxu0 %v970
        %2084 = vmatprep.subr.mxu0 0.0
        %2085 = vmatpush1.msra.mxu0 0.0
        %2086 = vmatprep.subr.mxu0 0.0
        %2087 = vmatpush1.msra.mxu0 0.0
        %2088 = vmatprep.subr.mxu0 0.0
        %2089 = vmatpush1.msra.mxu0 0.0
        %2090 = vmatprep.subr.mxu0 0.0
        %2091 = vmatpush1.msra.mxu0 0.0
        %2092 = vmatprep.subr.mxu0 0.0
        %2093 = vmatpush1.msra.mxu0 0.0
        %2094 = vmatprep.subr.mxu0 0.0
        %2095 = vmatpush1.msra.mxu0 0.0
        %2096 = vmatprep.subr.mxu0 0.0
        %2097 = vmatpush1.msra.mxu0 0.0
        %2098 = vmatprep.subr.mxu0 0.0
        %2099 = vmatpush1.msra.mxu0 0.0
        %2100 = vmatprep.subr.mxu0 0.0
        %2101 = vmatpush1.msra.mxu0 0.0
        %2102 = vmatprep.subr.mxu0 0.0
        %2103 = vmatpush1.msra.mxu0 0.0
        %2104 = vmatprep.subr.mxu0 0.0
        %2105 = vmatpush1.msra.mxu0 0.0
        %2106 = vmatprep.subr.mxu0 0.0
        %2107 = vmatpush1.msra.mxu0 0.0
        %2108 = vmatprep.subr.mxu0 0.0
        %2109 = vmatpush1.msra.mxu0 0.0
        %2110 = vmatprep.subr.mxu0 0.0
        %2111 = vmatpush1.msra.mxu0 0.0
        %2112 = vmatprep.subr.mxu0 0.0
        %2113 = vmatpush1.msra.mxu0 0.0
        %2114 = vmatprep.subr.mxu0 0.0
        %2115 = vmatpush1.msra.mxu0 0.0
        %2116 = vmatprep.subr.mxu0 0.0
        %2117 = vmatpush1.msra.mxu0 0.0
        %2118 = vmatprep.subr.mxu0 0.0
        %2119 = vmatpush1.msra.mxu0 0.0
        %2120 = vmatprep.subr.mxu0 0.0
        %2121 = vmatpush1.msra.mxu0 0.0
        %2122 = vmatprep.subr.mxu0 0.0
        %2123 = vmatpush1.msra.mxu0 0.0
        %2124 = vmatprep.subr.mxu0 0.0
        %2125 = vmatpush1.msra.mxu0 0.0
        %2126 = vmatprep.subr.mxu0 0.0
        %2127 = vmatpush1.msra.mxu0 0.0
        %2128 = vmatprep.subr.mxu0 0.0
        %2129 = vmatpush1.msra.mxu0 0.0
        %2130 = vmatprep.subr.mxu0 0.0
        %2131 = vmatpush1.msra.mxu0 0.0
        %2132 = vmatprep.subr.mxu0 0.0
        %2133 = vmatpush1.msra.mxu0 0.0
        %2134 = vmatprep.subr.mxu0 0.0
        %2135 = vmatpush1.msra.mxu0 0.0
        %2136 = vmatprep.subr.mxu0 0.0
        %2137 = vmatpush1.msra.mxu0 0.0
        %2138 = vmatprep.subr.mxu0 0.0
        %2139 = vmatpush1.msra.mxu0 0.0
        %2140 = vmatprep.mubr.f32.mxu0 0.0
        %2141 = vmatmul.mubr.f32.gmra.mrb[0].mxu0 %v2065
        %v2142 = vpop.f32.mrb[0].mxu0
        %v2143 = vadd.f32 0.0, %v2142
        %v2144 = vpop.f32.mrb[0].mxu0
        %2145 = vmatprep.mubr.f32.mxu0 0.0
        %2146 = vmatmul.mubr.f32.gmra.mrb[0].mxu0 %v2068
        %v2147 = vpop.f32.mrb[0].mxu0
        %v2148 = vadd.f32 0.0, %v2147
        %v2149 = vpop.f32.mrb[0].mxu0
        %2150 = vmatprep.mubr.f32.mxu0 0.0
        %2151 = vmatmul.mubr.f32.gmra.mrb[0].mxu0 %v2071
        %v2152 = vpop.f32.mrb[0].mxu0
        %v2153 = vadd.f32 0.0, %v2152
        %v2154 = vpop.f32.mrb[0].mxu0
        %2155 = vmatprep.mubr.f32.mxu0 0.0
        %2156 = vmatmul.mubr.f32.gmra.mrb[0].mxu0 %v2074
        %v2157 = vpop.f32.mrb[0].mxu0
        %v2158 = vadd.f32 0.0, %v2157
        %v2159 = vpop.f32.mrb[0].mxu0
        %2160 = vdwg.mxu0
        %v2162 = vsel %vm1711, %v2009, 0
        %v2165 = vsel %vm1711, %v2011, 0
        %v2168 = vsel %vm1711, %v2013, 0
        %v2171 = vsel %vm1711, %v2015, 0
        %2173 = vmatprep.subr.mxu0 0.0
        %2174 = vmatpush1.msra.mxu0 %v971
        %2175 = vmatprep.subr.mxu0 0.0
        %2176 = vmatpush1.msra.mxu0 %v972
        %2177 = vmatprep.subr.mxu0 0.0
        %2178 = vmatpush1.msra.mxu0 %v973
        %2179 = vmatprep.subr.mxu0 0.0
        %2180 = vmatpush1.msra.mxu0 %v974
        %2181 = vmatprep.subr.mxu0 0.0
        %2182 = vmatpush1.msra.mxu0 0.0
        %2183 = vmatprep.subr.mxu0 0.0
        %2184 = vmatpush1.msra.mxu0 0.0
        %2185 = vmatprep.subr.mxu0 0.0
        %2186 = vmatpush1.msra.mxu0 0.0
        %2187 = vmatprep.subr.mxu0 0.0
        %2188 = vmatpush1.msra.mxu0 0.0
        %2189 = vmatprep.subr.mxu0 0.0
        %2190 = vmatpush1.msra.mxu0 0.0
        %2191 = vmatprep.subr.mxu0 0.0
        %2192 = vmatpush1.msra.mxu0 0.0
        %2193 = vmatprep.subr.mxu0 0.0
        %2194 = vmatpush1.msra.mxu0 0.0
        %2195 = vmatprep.subr.mxu0 0.0
        %2196 = vmatpush1.msra.mxu0 0.0
        %2197 = vmatprep.subr.mxu0 0.0
        %2198 = vmatpush1.msra.mxu0 0.0
        %2199 = vmatprep.subr.mxu0 0.0
        %2200 = vmatpush1.msra.mxu0 0.0
        %2201 = vmatprep.subr.mxu0 0.0
        %2202 = vmatpush1.msra.mxu0 0.0
        %2203 = vmatprep.subr.mxu0 0.0
        %2204 = vmatpush1.msra.mxu0 0.0
        %2205 = vmatprep.subr.mxu0 0.0
        %2206 = vmatpush1.msra.mxu0 0.0
        %2207 = vmatprep.subr.mxu0 0.0
        %2208 = vmatpush1.msra.mxu0 0.0
        %2209 = vmatprep.subr.mxu0 0.0
        %2210 = vmatpush1.msra.mxu0 0.0
        %2211 = vmatprep.subr.mxu0 0.0
        %2212 = vmatpush1.msra.mxu0 0.0
        %2213 = vmatprep.subr.mxu0 0.0
        %2214 = vmatpush1.msra.mxu0 0.0
        %2215 = vmatprep.subr.mxu0 0.0
        %2216 = vmatpush1.msra.mxu0 0.0
        %2217 = vmatprep.subr.mxu0 0.0
        %2218 = vmatpush1.msra.mxu0 0.0
        %2219 = vmatprep.subr.mxu0 0.0
        %2220 = vmatpush1.msra.mxu0 0.0
        %2221 = vmatprep.subr.mxu0 0.0
        %2222 = vmatpush1.msra.mxu0 0.0
        %2223 = vmatprep.subr.mxu0 0.0
        %2224 = vmatpush1.msra.mxu0 0.0
        %2225 = vmatprep.subr.mxu0 0.0
        %2226 = vmatpush1.msra.mxu0 0.0
        %2227 = vmatprep.subr.mxu0 0.0
        %2228 = vmatpush1.msra.mxu0 0.0
        %2229 = vmatprep.subr.mxu0 0.0
        %2230 = vmatpush1.msra.mxu0 0.0
        %2231 = vmatprep.subr.mxu0 0.0
        %2232 = vmatpush1.msra.mxu0 0.0
        %2233 = vmatprep.subr.mxu0 0.0
        %2234 = vmatpush1.msra.mxu0 0.0
        %2235 = vmatprep.subr.mxu0 0.0
        %2236 = vmatpush1.msra.mxu0 0.0
        %2237 = vmatprep.mubr.f32.mxu0 0.0
        %2238 = vmatmul.mubr.f32.gmra.mrb[0].mxu0 %v2162
        %v2239 = vpop.f32.mrb[0].mxu0
        %v2240 = vadd.f32 0.0, %v2239
        %v2241 = vpop.f32.mrb[0].mxu0
        %2242 = vmatprep.mubr.f32.mxu0 0.0
        %2243 = vmatmul.mubr.f32.gmra.mrb[0].mxu0 %v2165
        %v2244 = vpop.f32.mrb[0].mxu0
        %v2245 = vadd.f32 0.0, %v2244
        %v2246 = vpop.f32.mrb[0].mxu0
        %2247 = vmatprep.mubr.f32.mxu0 0.0
        %2248 = vmatmul.mubr.f32.gmra.mrb[0].mxu0 %v2168
        %v2249 = vpop.f32.mrb[0].mxu0
        %v2250 = vadd.f32 0.0, %v2249
        %v2251 = vpop.f32.mrb[0].mxu0
        %2252 = vmatprep.mubr.f32.mxu0 0.0
        %2253 = vmatmul.mubr.f32.gmra.mrb[0].mxu0 %v2171
        %v2254 = vpop.f32.mrb[0].mxu0
        %v2255 = vadd.f32 0.0, %v2254
        %v2256 = vpop.f32.mrb[0].mxu0
        %2257 = vdwg.mxu0
        %v2259 = vsel %vm1711, %v2017, 0
        %v2262 = vsel %vm1711, %v2019, 0
        %v2265 = vsel %vm1711, %v2021, 0
        %v2268 = vsel %vm1711, %v2023, 0
        %2270 = vmatprep.subr.mxu0 0.0
        %2271 = vmatpush1.msra.mxu0 %v975
        %2272 = vmatprep.subr.mxu0 0.0
        %2273 = vmatpush1.msra.mxu0 %v976
        %2274 = vmatprep.subr.mxu0 0.0
        %2275 = vmatpush1.msra.mxu0 %v977
        %2276 = vmatprep.subr.mxu0 0.0
        %2277 = vmatpush1.msra.mxu0 %v978
        %2278 = vmatprep.subr.mxu0 0.0
        %2279 = vmatpush1.msra.mxu0 0.0
        %2280 = vmatprep.subr.mxu0 0.0
        %2281 = vmatpush1.msra.mxu0 0.0
        %2282 = vmatprep.subr.mxu0 0.0
        %2283 = vmatpush1.msra.mxu0 0.0
        %2284 = vmatprep.subr.mxu0 0.0
        %2285 = vmatpush1.msra.mxu0 0.0
        %2286 = vmatprep.subr.mxu0 0.0
        %2287 = vmatpush1.msra.mxu0 0.0
        %2288 = vmatprep.subr.mxu0 0.0
        %2289 = vmatpush1.msra.mxu0 0.0
        %2290 = vmatprep.subr.mxu0 0.0
        %2291 = vmatpush1.msra.mxu0 0.0
        %2292 = vmatprep.subr.mxu0 0.0
        %2293 = vmatpush1.msra.mxu0 0.0
        %2294 = vmatprep.subr.mxu0 0.0
        %2295 = vmatpush1.msra.mxu0 0.0
        %2296 = vmatprep.subr.mxu0 0.0
        %2297 = vmatpush1.msra.mxu0 0.0
        %2298 = vmatprep.subr.mxu0 0.0
        %2299 = vmatpush1.msra.mxu0 0.0
        %2300 = vmatprep.subr.mxu0 0.0
        %2301 = vmatpush1.msra.mxu0 0.0
        %2302 = vmatprep.subr.mxu0 0.0
        %2303 = vmatpush1.msra.mxu0 0.0
        %2304 = vmatprep.subr.mxu0 0.0
        %2305 = vmatpush1.msra.mxu0 0.0
        %2306 = vmatprep.subr.mxu0 0.0
        %2307 = vmatpush1.msra.mxu0 0.0
        %2308 = vmatprep.subr.mxu0 0.0
        %2309 = vmatpush1.msra.mxu0 0.0
        %2310 = vmatprep.subr.mxu0 0.0
        %2311 = vmatpush1.msra.mxu0 0.0
        %2312 = vmatprep.subr.mxu0 0.0
        %2313 = vmatpush1.msra.mxu0 0.0
        %2314 = vmatprep.subr.mxu0 0.0
        %2315 = vmatpush1.msra.mxu0 0.0
        %2316 = vmatprep.subr.mxu0 0.0
        %2317 = vmatpush1.msra.mxu0 0.0
        %2318 = vmatprep.subr.mxu0 0.0
        %2319 = vmatpush1.msra.mxu0 0.0
        %2320 = vmatprep.subr.mxu0 0.0
        %2321 = vmatpush1.msra.mxu0 0.0
        %2322 = vmatprep.subr.mxu0 0.0
        %2323 = vmatpush1.msra.mxu0 0.0
        %2324 = vmatprep.subr.mxu0 0.0
        %2325 = vmatpush1.msra.mxu0 0.0
        %2326 = vmatprep.subr.mxu0 0.0
        %2327 = vmatpush1.msra.mxu0 0.0
        %2328 = vmatprep.subr.mxu0 0.0
        %2329 = vmatpush1.msra.mxu0 0.0
        %2330 = vmatprep.subr.mxu0 0.0
        %2331 = vmatpush1.msra.mxu0 0.0
        %2332 = vmatprep.subr.mxu0 0.0
        %2333 = vmatpush1.msra.mxu0 0.0
        %2334 = vmatprep.mubr.f32.mxu0 0.0
        %2335 = vmatmul.mubr.f32.gmra.mrb[0].mxu0 %v2259
        %v2336 = vpop.f32.mrb[0].mxu0
        %v2337 = vadd.f32 0.0, %v2336
        %v2338 = vpop.f32.mrb[0].mxu0
        %2339 = vmatprep.mubr.f32.mxu0 0.0
        %2340 = vmatmul.mubr.f32.gmra.mrb[0].mxu0 %v2262
        %v2341 = vpop.f32.mrb[0].mxu0
        %v2342 = vadd.f32 0.0, %v2341
        %v2343 = vpop.f32.mrb[0].mxu0
        %2344 = vmatprep.mubr.f32.mxu0 0.0
        %2345 = vmatmul.mubr.f32.gmra.mrb[0].mxu0 %v2265
        %v2346 = vpop.f32.mrb[0].mxu0
        %v2347 = vadd.f32 0.0, %v2346
        %v2348 = vpop.f32.mrb[0].mxu0
        %2349 = vmatprep.mubr.f32.mxu0 0.0
        %2350 = vmatmul.mubr.f32.gmra.mrb[0].mxu0 %v2268
        %v2351 = vpop.f32.mrb[0].mxu0
        %v2352 = vadd.f32 0.0, %v2351
        %v2353 = vpop.f32.mrb[0].mxu0
        %2354 = vdwg.mxu0
        %v2356 = vsel %vm1711, %v2025, 0
        %v2359 = vsel %vm1711, %v2027, 0
        %v2362 = vsel %vm1711, %v2029, 0
        %v2365 = vsel %vm1711, %v2031, 0
        %2367 = vmatprep.subr.mxu0 0.0
        %2368 = vmatpush1.msra.mxu0 %v979
        %2369 = vmatprep.subr.mxu0 0.0
        %2370 = vmatpush1.msra.mxu0 %v980
        %2371 = vmatprep.subr.mxu0 0.0
        %2372 = vmatpush1.msra.mxu0 %v981
        %2373 = vmatprep.subr.mxu0 0.0
        %2374 = vmatpush1.msra.mxu0 %v982
        %2375 = vmatprep.subr.mxu0 0.0
        %2376 = vmatpush1.msra.mxu0 0.0
        %2377 = vmatprep.subr.mxu0 0.0
        %2378 = vmatpush1.msra.mxu0 0.0
        %2379 = vmatprep.subr.mxu0 0.0
        %2380 = vmatpush1.msra.mxu0 0.0
        %2381 = vmatprep.subr.mxu0 0.0
        %2382 = vmatpush1.msra.mxu0 0.0
        %2383 = vmatprep.subr.mxu0 0.0
        %2384 = vmatpush1.msra.mxu0 0.0
        %2385 = vmatprep.subr.mxu0 0.0
        %2386 = vmatpush1.msra.mxu0 0.0
        %2387 = vmatprep.subr.mxu0 0.0
        %2388 = vmatpush1.msra.mxu0 0.0
        %2389 = vmatprep.subr.mxu0 0.0
        %2390 = vmatpush1.msra.mxu0 0.0
        %2391 = vmatprep.subr.mxu0 0.0
        %2392 = vmatpush1.msra.mxu0 0.0
        %2393 = vmatprep.subr.mxu0 0.0
        %2394 = vmatpush1.msra.mxu0 0.0
        %2395 = vmatprep.subr.mxu0 0.0
        %2396 = vmatpush1.msra.mxu0 0.0
        %2397 = vmatprep.subr.mxu0 0.0
        %2398 = vmatpush1.msra.mxu0 0.0
        %2399 = vmatprep.subr.mxu0 0.0
        %2400 = vmatpush1.msra.mxu0 0.0
        %2401 = vmatprep.subr.mxu0 0.0
        %2402 = vmatpush1.msra.mxu0 0.0
        %2403 = vmatprep.subr.mxu0 0.0
        %2404 = vmatpush1.msra.mxu0 0.0
        %2405 = vmatprep.subr.mxu0 0.0
        %2406 = vmatpush1.msra.mxu0 0.0
        %2407 = vmatprep.subr.mxu0 0.0
        %2408 = vmatpush1.msra.mxu0 0.0
        %2409 = vmatprep.subr.mxu0 0.0
        %2410 = vmatpush1.msra.mxu0 0.0
        %2411 = vmatprep.subr.mxu0 0.0
        %2412 = vmatpush1.msra.mxu0 0.0
        %2413 = vmatprep.subr.mxu0 0.0
        %2414 = vmatpush1.msra.mxu0 0.0
        %2415 = vmatprep.subr.mxu0 0.0
        %2416 = vmatpush1.msra.mxu0 0.0
        %2417 = vmatprep.subr.mxu0 0.0
        %2418 = vmatpush1.msra.mxu0 0.0
        %2419 = vmatprep.subr.mxu0 0.0
        %2420 = vmatpush1.msra.mxu0 0.0
        %2421 = vmatprep.subr.mxu0 0.0
        %2422 = vmatpush1.msra.mxu0 0.0
        %2423 = vmatprep.subr.mxu0 0.0
        %2424 = vmatpush1.msra.mxu0 0.0
        %2425 = vmatprep.subr.mxu0 0.0
        %2426 = vmatpush1.msra.mxu0 0.0
        %2427 = vmatprep.subr.mxu0 0.0
        %2428 = vmatpush1.msra.mxu0 0.0
        %2429 = vmatprep.subr.mxu0 0.0
        %2430 = vmatpush1.msra.mxu0 0.0
        %2431 = vmatprep.mubr.f32.mxu0 0.0
        %2432 = vmatmul.mubr.f32.gmra.mrb[0].mxu0 %v2356
        %v2433 = vpop.f32.mrb[0].mxu0
        %v2434 = vadd.f32 0.0, %v2433
        %v2435 = vpop.f32.mrb[0].mxu0
        %2436 = vmatprep.mubr.f32.mxu0 0.0
        %2437 = vmatmul.mubr.f32.gmra.mrb[0].mxu0 %v2359
        %v2438 = vpop.f32.mrb[0].mxu0
        %v2439 = vadd.f32 0.0, %v2438
        %v2440 = vpop.f32.mrb[0].mxu0
        %2441 = vmatprep.mubr.f32.mxu0 0.0
        %2442 = vmatmul.mubr.f32.gmra.mrb[0].mxu0 %v2362
        %v2443 = vpop.f32.mrb[0].mxu0
        %v2444 = vadd.f32 0.0, %v2443
        %v2445 = vpop.f32.mrb[0].mxu0
        %2446 = vmatprep.mubr.f32.mxu0 0.0
        %2447 = vmatmul.mubr.f32.gmra.mrb[0].mxu0 %v2365
        %v2448 = vpop.f32.mrb[0].mxu0
        %v2449 = vadd.f32 0.0, %v2448
        %v2450 = vpop.f32.mrb[0].mxu0
        %2451 = vdwg.mxu0
        %v2453 = vsel %vm1711, %v2033, 0
        %v2456 = vsel %vm1711, %v2035, 0
        %v2459 = vsel %vm1711, %v2037, 0
        %v2462 = vsel %vm1711, %v2039, 0
        %2464 = vmatprep.subr.mxu0 0.0
        %2465 = vmatpush1.msra.mxu0 %v983
        %2466 = vmatprep.subr.mxu0 0.0
        %2467 = vmatpush1.msra.mxu0 %v984
        %2468 = vmatprep.subr.mxu0 0.0
        %2469 = vmatpush1.msra.mxu0 %v985
        %2470 = vmatprep.subr.mxu0 0.0
        %2471 = vmatpush1.msra.mxu0 %v986
        %2472 = vmatprep.subr.mxu0 0.0
        %2473 = vmatpush1.msra.mxu0 0.0
        %2474 = vmatprep.subr.mxu0 0.0
        %2475 = vmatpush1.msra.mxu0 0.0
        %2476 = vmatprep.subr.mxu0 0.0
        %2477 = vmatpush1.msra.mxu0 0.0
        %2478 = vmatprep.subr.mxu0 0.0
        %2479 = vmatpush1.msra.mxu0 0.0
        %2480 = vmatprep.subr.mxu0 0.0
        %2481 = vmatpush1.msra.mxu0 0.0
        %2482 = vmatprep.subr.mxu0 0.0
        %2483 = vmatpush1.msra.mxu0 0.0
        %2484 = vmatprep.subr.mxu0 0.0
        %2485 = vmatpush1.msra.mxu0 0.0
        %2486 = vmatprep.subr.mxu0 0.0
        %2487 = vmatpush1.msra.mxu0 0.0
        %2488 = vmatprep.subr.mxu0 0.0
        %2489 = vmatpush1.msra.mxu0 0.0
        %2490 = vmatprep.subr.mxu0 0.0
        %2491 = vmatpush1.msra.mxu0 0.0
        %2492 = vmatprep.subr.mxu0 0.0
        %2493 = vmatpush1.msra.mxu0 0.0
        %2494 = vmatprep.subr.mxu0 0.0
        %2495 = vmatpush1.msra.mxu0 0.0
        %2496 = vmatprep.subr.mxu0 0.0
        %2497 = vmatpush1.msra.mxu0 0.0
        %2498 = vmatprep.subr.mxu0 0.0
        %2499 = vmatpush1.msra.mxu0 0.0
        %2500 = vmatprep.subr.mxu0 0.0
        %2501 = vmatpush1.msra.mxu0 0.0
        %2502 = vmatprep.subr.mxu0 0.0
        %2503 = vmatpush1.msra.mxu0 0.0
        %2504 = vmatprep.subr.mxu0 0.0
        %2505 = vmatpush1.msra.mxu0 0.0
        %2506 = vmatprep.subr.mxu0 0.0
        %2507 = vmatpush1.msra.mxu0 0.0
        %2508 = vmatprep.subr.mxu0 0.0
        %2509 = vmatpush1.msra.mxu0 0.0
        %2510 = vmatprep.subr.mxu0 0.0
        %2511 = vmatpush1.msra.mxu0 0.0
        %2512 = vmatprep.subr.mxu0 0.0
        %2513 = vmatpush1.msra.mxu0 0.0
        %2514 = vmatprep.subr.mxu0 0.0
        %2515 = vmatpush1.msra.mxu0 0.0
        %2516 = vmatprep.subr.mxu0 0.0
        %2517 = vmatpush1.msra.mxu0 0.0
        %2518 = vmatprep.subr.mxu0 0.0
        %2519 = vmatpush1.msra.mxu0 0.0
        %2520 = vmatprep.subr.mxu0 0.0
        %2521 = vmatpush1.msra.mxu0 0.0
        %2522 = vmatprep.subr.mxu0 0.0
        %2523 = vmatpush1.msra.mxu0 0.0
        %2524 = vmatprep.subr.mxu0 0.0
        %2525 = vmatpush1.msra.mxu0 0.0
        %2526 = vmatprep.subr.mxu0 0.0
        %2527 = vmatpush1.msra.mxu0 0.0
        %2528 = vmatprep.mubr.f32.mxu0 0.0
        %2529 = vmatmul.mubr.f32.gmra.mrb[0].mxu0 %v2453
        %v2530 = vpop.f32.mrb[0].mxu0
        %v2531 = vadd.f32 0.0, %v2530
        %v2532 = vpop.f32.mrb[0].mxu0
        %2533 = vmatprep.mubr.f32.mxu0 0.0
        %2534 = vmatmul.mubr.f32.gmra.mrb[0].mxu0 %v2456
        %v2535 = vpop.f32.mrb[0].mxu0
        %v2536 = vadd.f32 0.0, %v2535
        %v2537 = vpop.f32.mrb[0].mxu0
        %2538 = vmatprep.mubr.f32.mxu0 0.0
        %2539 = vmatmul.mubr.f32.gmra.mrb[0].mxu0 %v2459
        %v2540 = vpop.f32.mrb[0].mxu0
        %v2541 = vadd.f32 0.0, %v2540
        %v2542 = vpop.f32.mrb[0].mxu0
        %2543 = vmatprep.mubr.f32.mxu0 0.0
        %2544 = vmatmul.mubr.f32.gmra.mrb[0].mxu0 %v2462
        %v2545 = vpop.f32.mrb[0].mxu0
        %v2546 = vadd.f32 0.0, %v2545
        %v2547 = vpop.f32.mrb[0].mxu0
        %2548 = vdwg.mxu0
        %v2550 = vsel %vm1711, %v2041, 0
        %v2553 = vsel %vm1711, %v2043, 0
        %v2556 = vsel %vm1711, %v2045, 0
        %v2559 = vsel %vm1711, %v2047, 0
        %2561 = vmatprep.subr.mxu0 0.0
        %2562 = vmatpush1.msra.mxu0 %v987
        %2563 = vmatprep.subr.mxu0 0.0
        %2564 = vmatpush1.msra.mxu0 %v988
        %2565 = vmatprep.subr.mxu0 0.0
        %2566 = vmatpush1.msra.mxu0 %v989
        %2567 = vmatprep.subr.mxu0 0.0
        %2568 = vmatpush1.msra.mxu0 %v990
        %2569 = vmatprep.subr.mxu0 0.0
        %2570 = vmatpush1.msra.mxu0 0.0
        %2571 = vmatprep.subr.mxu0 0.0
        %2572 = vmatpush1.msra.mxu0 0.0
        %2573 = vmatprep.subr.mxu0 0.0
        %2574 = vmatpush1.msra.mxu0 0.0
        %2575 = vmatprep.subr.mxu0 0.0
        %2576 = vmatpush1.msra.mxu0 0.0
        %2577 = vmatprep.subr.mxu0 0.0
        %2578 = vmatpush1.msra.mxu0 0.0
        %2579 = vmatprep.subr.mxu0 0.0
        %2580 = vmatpush1.msra.mxu0 0.0
        %2581 = vmatprep.subr.mxu0 0.0
        %2582 = vmatpush1.msra.mxu0 0.0
        %2583 = vmatprep.subr.mxu0 0.0
        %2584 = vmatpush1.msra.mxu0 0.0
        %2585 = vmatprep.subr.mxu0 0.0
        %2586 = vmatpush1.msra.mxu0 0.0
        %2587 = vmatprep.subr.mxu0 0.0
        %2588 = vmatpush1.msra.mxu0 0.0
        %2589 = vmatprep.subr.mxu0 0.0
        %2590 = vmatpush1.msra.mxu0 0.0
        %2591 = vmatprep.subr.mxu0 0.0
        %2592 = vmatpush1.msra.mxu0 0.0
        %2593 = vmatprep.subr.mxu0 0.0
        %2594 = vmatpush1.msra.mxu0 0.0
        %2595 = vmatprep.subr.mxu0 0.0
        %2596 = vmatpush1.msra.mxu0 0.0
        %2597 = vmatprep.subr.mxu0 0.0
        %2598 = vmatpush1.msra.mxu0 0.0
        %2599 = vmatprep.subr.mxu0 0.0
        %2600 = vmatpush1.msra.mxu0 0.0
        %2601 = vmatprep.subr.mxu0 0.0
        %2602 = vmatpush1.msra.mxu0 0.0
        %2603 = vmatprep.subr.mxu0 0.0
        %2604 = vmatpush1.msra.mxu0 0.0
        %2605 = vmatprep.subr.mxu0 0.0
        %2606 = vmatpush1.msra.mxu0 0.0
        %2607 = vmatprep.subr.mxu0 0.0
        %2608 = vmatpush1.msra.mxu0 0.0
        %2609 = vmatprep.subr.mxu0 0.0
        %2610 = vmatpush1.msra.mxu0 0.0
        %2611 = vmatprep.subr.mxu0 0.0
        %2612 = vmatpush1.msra.mxu0 0.0
        %2613 = vmatprep.subr.mxu0 0.0
        %2614 = vmatpush1.msra.mxu0 0.0
        %2615 = vmatprep.subr.mxu0 0.0
        %2616 = vmatpush1.msra.mxu0 0.0
        %2617 = vmatprep.subr.mxu0 0.0
        %2618 = vmatpush1.msra.mxu0 0.0
        %2619 = vmatprep.subr.mxu0 0.0
        %2620 = vmatpush1.msra.mxu0 0.0
        %2621 = vmatprep.subr.mxu0 0.0
        %2622 = vmatpush1.msra.mxu0 0.0
        %2623 = vmatprep.subr.mxu0 0.0
        %2624 = vmatpush1.msra.mxu0 0.0
        %2625 = vmatprep.mubr.f32.mxu0 0.0
        %2626 = vmatmul.mubr.f32.gmra.mrb[0].mxu0 %v2550
        %v2627 = vpop.f32.mrb[0].mxu0
        %v2628 = vadd.f32 0.0, %v2627
        %v2629 = vpop.f32.mrb[0].mxu0
        %2630 = vmatprep.mubr.f32.mxu0 0.0
        %2631 = vmatmul.mubr.f32.gmra.mrb[0].mxu0 %v2553
        %v2632 = vpop.f32.mrb[0].mxu0
        %v2633 = vadd.f32 0.0, %v2632
        %v2634 = vpop.f32.mrb[0].mxu0
        %2635 = vmatprep.mubr.f32.mxu0 0.0
        %2636 = vmatmul.mubr.f32.gmra.mrb[0].mxu0 %v2556
        %v2637 = vpop.f32.mrb[0].mxu0
        %v2638 = vadd.f32 0.0, %v2637
        %v2639 = vpop.f32.mrb[0].mxu0
        %2640 = vmatprep.mubr.f32.mxu0 0.0
        %2641 = vmatmul.mubr.f32.gmra.mrb[0].mxu0 %v2559
        %v2642 = vpop.f32.mrb[0].mxu0
        %v2643 = vadd.f32 0.0, %v2642
        %v2644 = vpop.f32.mrb[0].mxu0
        %2645 = vdwg.mxu0
        %v2647 = vsel %vm1711, %v2049, 0
        %v2650 = vsel %vm1711, %v2051, 0
        %v2653 = vsel %vm1711, %v2053, 0
        %v2656 = vsel %vm1711, %v2055, 0
        %2658 = vmatprep.subr.mxu0 0.0
        %2659 = vmatpush1.msra.mxu0 %v991
        %2660 = vmatprep.subr.mxu0 0.0
        %2661 = vmatpush1.msra.mxu0 %v992
        %2662 = vmatprep.subr.mxu0 0.0
        %2663 = vmatpush1.msra.mxu0 %v993
        %2664 = vmatprep.subr.mxu0 0.0
        %2665 = vmatpush1.msra.mxu0 %v994
        %2666 = vmatprep.subr.mxu0 0.0
        %2667 = vmatpush1.msra.mxu0 0.0
        %2668 = vmatprep.subr.mxu0 0.0
        %2669 = vmatpush1.msra.mxu0 0.0
        %2670 = vmatprep.subr.mxu0 0.0
        %2671 = vmatpush1.msra.mxu0 0.0
        %2672 = vmatprep.subr.mxu0 0.0
        %2673 = vmatpush1.msra.mxu0 0.0
        %2674 = vmatprep.subr.mxu0 0.0
        %2675 = vmatpush1.msra.mxu0 0.0
        %2676 = vmatprep.subr.mxu0 0.0
        %2677 = vmatpush1.msra.mxu0 0.0
        %2678 = vmatprep.subr.mxu0 0.0
        %2679 = vmatpush1.msra.mxu0 0.0
        %2680 = vmatprep.subr.mxu0 0.0
        %2681 = vmatpush1.msra.mxu0 0.0
        %2682 = vmatprep.subr.mxu0 0.0
        %2683 = vmatpush1.msra.mxu0 0.0
        %2684 = vmatprep.subr.mxu0 0.0
        %2685 = vmatpush1.msra.mxu0 0.0
        %2686 = vmatprep.subr.mxu0 0.0
        %2687 = vmatpush1.msra.mxu0 0.0
        %2688 = vmatprep.subr.mxu0 0.0
        %2689 = vmatpush1.msra.mxu0 0.0
        %2690 = vmatprep.subr.mxu0 0.0
        %2691 = vmatpush1.msra.mxu0 0.0
        %2692 = vmatprep.subr.mxu0 0.0
        %2693 = vmatpush1.msra.mxu0 0.0
        %2694 = vmatprep.subr.mxu0 0.0
        %2695 = vmatpush1.msra.mxu0 0.0
        %2696 = vmatprep.subr.mxu0 0.0
        %2697 = vmatpush1.msra.mxu0 0.0
        %2698 = vmatprep.subr.mxu0 0.0
        %2699 = vmatpush1.msra.mxu0 0.0
        %2700 = vmatprep.subr.mxu0 0.0
        %2701 = vmatpush1.msra.mxu0 0.0
        %2702 = vmatprep.subr.mxu0 0.0
        %2703 = vmatpush1.msra.mxu0 0.0
        %2704 = vmatprep.subr.mxu0 0.0
        %2705 = vmatpush1.msra.mxu0 0.0
        %2706 = vmatprep.subr.mxu0 0.0
        %2707 = vmatpush1.msra.mxu0 0.0
        %2708 = vmatprep.subr.mxu0 0.0
        %2709 = vmatpush1.msra.mxu0 0.0
        %2710 = vmatprep.subr.mxu0 0.0
        %2711 = vmatpush1.msra.mxu0 0.0
        %2712 = vmatprep.subr.mxu0 0.0
        %2713 = vmatpush1.msra.mxu0 0.0
        %2714 = vmatprep.subr.mxu0 0.0
        %2715 = vmatpush1.msra.mxu0 0.0
        %2716 = vmatprep.subr.mxu0 0.0
        %2717 = vmatpush1.msra.mxu0 0.0
        %2718 = vmatprep.subr.mxu0 0.0
        %2719 = vmatpush1.msra.mxu0 0.0
        %2720 = vmatprep.subr.mxu0 0.0
        %2721 = vmatpush1.msra.mxu0 0.0
        %2722 = vmatprep.mubr.f32.mxu0 0.0
        %2723 = vmatmul.mubr.f32.gmra.mrb[0].mxu0 %v2647
        %v2724 = vpop.f32.mrb[0].mxu0
        %v2725 = vadd.f32 0.0, %v2724
        %v2726 = vpop.f32.mrb[0].mxu0
        %2727 = vmatprep.mubr.f32.mxu0 0.0
        %2728 = vmatmul.mubr.f32.gmra.mrb[0].mxu0 %v2650
        %v2729 = vpop.f32.mrb[0].mxu0
        %v2730 = vadd.f32 0.0, %v2729
        %v2731 = vpop.f32.mrb[0].mxu0
        %2732 = vmatprep.mubr.f32.mxu0 0.0
        %2733 = vmatmul.mubr.f32.gmra.mrb[0].mxu0 %v2653
        %v2734 = vpop.f32.mrb[0].mxu0
        %v2735 = vadd.f32 0.0, %v2734
        %v2736 = vpop.f32.mrb[0].mxu0
        %2737 = vmatprep.mubr.f32.mxu0 0.0
        %2738 = vmatmul.mubr.f32.gmra.mrb[0].mxu0 %v2656
        %v2739 = vpop.f32.mrb[0].mxu0
        %v2740 = vadd.f32 0.0, %v2739
        %v2741 = vpop.f32.mrb[0].mxu0
        %2742 = vdwg.mxu0
        %v2744 = vsel %vm1711, %v2057, 0
        %v2747 = vsel %vm1711, %v2059, 0
        %v2750 = vsel %vm1711, %v2061, 0
        %v2753 = vsel %vm1711, %v2063, 0
        %2755 = vmatprep.subr.mxu0 0.0
        %2756 = vmatpush1.msra.mxu0 %v995
        %2757 = vmatprep.subr.mxu0 0.0
        %2758 = vmatpush1.msra.mxu0 %v996
        %2759 = vmatprep.subr.mxu0 0.0
        %2760 = vmatpush1.msra.mxu0 %v997
        %2761 = vmatprep.subr.mxu0 0.0
        %2762 = vmatpush1.msra.mxu0 %v998
        %2763 = vmatprep.subr.mxu0 0.0
        %2764 = vmatpush1.msra.mxu0 0.0
        %2765 = vmatprep.subr.mxu0 0.0
        %2766 = vmatpush1.msra.mxu0 0.0
        %2767 = vmatprep.subr.mxu0 0.0
        %2768 = vmatpush1.msra.mxu0 0.0
        %2769 = vmatprep.subr.mxu0 0.0
        %2770 = vmatpush1.msra.mxu0 0.0
        %2771 = vmatprep.subr.mxu0 0.0
        %2772 = vmatpush1.msra.mxu0 0.0
        %2773 = vmatprep.subr.mxu0 0.0
        %2774 = vmatpush1.msra.mxu0 0.0
        %2775 = vmatprep.subr.mxu0 0.0
        %2776 = vmatpush1.msra.mxu0 0.0
        %2777 = vmatprep.subr.mxu0 0.0
        %2778 = vmatpush1.msra.mxu0 0.0
        %2779 = vmatprep.subr.mxu0 0.0
        %2780 = vmatpush1.msra.mxu0 0.0
        %2781 = vmatprep.subr.mxu0 0.0
        %2782 = vmatpush1.msra.mxu0 0.0
        %2783 = vmatprep.subr.mxu0 0.0
        %2784 = vmatpush1.msra.mxu0 0.0
        %2785 = vmatprep.subr.mxu0 0.0
        %2786 = vmatpush1.msra.mxu0 0.0
        %2787 = vmatprep.subr.mxu0 0.0
        %2788 = vmatpush1.msra.mxu0 0.0
        %2789 = vmatprep.subr.mxu0 0.0
        %2790 = vmatpush1.msra.mxu0 0.0
        %2791 = vmatprep.subr.mxu0 0.0
        %2792 = vmatpush1.msra.mxu0 0.0
        %2793 = vmatprep.subr.mxu0 0.0
        %2794 = vmatpush1.msra.mxu0 0.0
        %2795 = vmatprep.subr.mxu0 0.0
        %2796 = vmatpush1.msra.mxu0 0.0
        %2797 = vmatprep.subr.mxu0 0.0
        %2798 = vmatpush1.msra.mxu0 0.0
        %2799 = vmatprep.subr.mxu0 0.0
        %2800 = vmatpush1.msra.mxu0 0.0
        %2801 = vmatprep.subr.mxu0 0.0
        %2802 = vmatpush1.msra.mxu0 0.0
        %2803 = vmatprep.subr.mxu0 0.0
        %2804 = vmatpush1.msra.mxu0 0.0
        %2805 = vmatprep.subr.mxu0 0.0
        %2806 = vmatpush1.msra.mxu0 0.0
        %2807 = vmatprep.subr.mxu0 0.0
        %2808 = vmatpush1.msra.mxu0 0.0
        %2809 = vmatprep.subr.mxu0 0.0
        %2810 = vmatpush1.msra.mxu0 0.0
        %2811 = vmatprep.subr.mxu0 0.0
        %2812 = vmatpush1.msra.mxu0 0.0
        %2813 = vmatprep.subr.mxu0 0.0
        %2814 = vmatpush1.msra.mxu0 0.0
        %2815 = vmatprep.subr.mxu0 0.0
        %2816 = vmatpush1.msra.mxu0 0.0
        %2817 = vmatprep.subr.mxu0 0.0
        %2818 = vmatpush1.msra.mxu0 0.0
        %2819 = vmatprep.mubr.f32.mxu0 0.0
        %2820 = vmatmul.mubr.f32.gmra.mrb[0].mxu0 %v2744
        %v2821 = vpop.f32.mrb[0].mxu0
        %v2822 = vadd.f32 0.0, %v2821
        %v2823 = vpop.f32.mrb[0].mxu0
        %2824 = vmatprep.mubr.f32.mxu0 0.0
        %2825 = vmatmul.mubr.f32.gmra.mrb[0].mxu0 %v2747
        %v2826 = vpop.f32.mrb[0].mxu0
        %v2827 = vadd.f32 0.0, %v2826
        %v2828 = vpop.f32.mrb[0].mxu0
        %2829 = vmatprep.mubr.f32.mxu0 0.0
        %2830 = vmatmul.mubr.f32.gmra.mrb[0].mxu0 %v2750
        %v2831 = vpop.f32.mrb[0].mxu0
        %v2832 = vadd.f32 0.0, %v2831
        %v2833 = vpop.f32.mrb[0].mxu0
        %2834 = vmatprep.mubr.f32.mxu0 0.0
        %2835 = vmatmul.mubr.f32.gmra.mrb[0].mxu0 %v2753
        %v2836 = vpop.f32.mrb[0].mxu0
        %v2837 = vadd.f32 0.0, %v2836
        %v2838 = vpop.f32.mrb[0].mxu0
        %2839 = vdwg.mxu0
        %v2840 = vadd.f32 %v2143, %v2240
        %v2841 = vadd.f32 %v2840, %v2337
        %v2842 = vadd.f32 %v2841, %v2434
        %v2843 = vadd.f32 %v2842, %v2531
        %v2844 = vadd.f32 %v2843, %v2628
        %v2845 = vadd.f32 %v2844, %v2725
        %v2846 = vadd.f32 %v2845, %v2822
        %v2847 = vadd.f32 %v2148, %v2245
        %v2848 = vadd.f32 %v2847, %v2342
        %v2849 = vadd.f32 %v2848, %v2439
        %v2850 = vadd.f32 %v2849, %v2536
        %v2851 = vadd.f32 %v2850, %v2633
        %v2852 = vadd.f32 %v2851, %v2730
        %v2853 = vadd.f32 %v2852, %v2827
        %v2854 = vadd.f32 %v2153, %v2250
        %v2855 = vadd.f32 %v2854, %v2347
        %v2856 = vadd.f32 %v2855, %v2444
        %v2857 = vadd.f32 %v2856, %v2541
        %v2858 = vadd.f32 %v2857, %v2638
        %v2859 = vadd.f32 %v2858, %v2735
        %v2860 = vadd.f32 %v2859, %v2832
        %v2861 = vadd.f32 %v2158, %v2255
        %v2862 = vadd.f32 %v2861, %v2352
        %v2863 = vadd.f32 %v2862, %v2449
        %v2864 = vadd.f32 %v2863, %v2546
        %v2865 = vadd.f32 %v2864, %v2643
        %v2866 = vadd.f32 %v2865, %v2740
        %v2867 = vadd.f32 %v2866, %v2837
        %v2868 = vld [vmem:[#allocation10] sm:$0xff]
        %v2869 = vld [vmem:[#allocation10 + $0x8] sm:$0xff]
        %v2870 = vld [vmem:[#allocation10 + $0x10] sm:$0xff]
        %v2871 = vld [vmem:[#allocation10 + $0x18] sm:$0xff]
        %v2872 = vld [vmem:[#allocation10 + $0x20] sm:$0xff]
        %v2873 = vld [vmem:[#allocation10 + $0x28] sm:$0xff]
        %v2874 = vld [vmem:[#allocation10 + $0x30] sm:$0xff]
        %v2875 = vld [vmem:[#allocation10 + $0x38] sm:$0xff]
        %v2876 = vld [vmem:[#allocation10 + $0x40] sm:$0xff]
        %v2877 = vld [vmem:[#allocation10 + $0x48] sm:$0xff]
        %v2878 = vld [vmem:[#allocation10 + $0x50] sm:$0xff]
        %v2879 = vld [vmem:[#allocation10 + $0x58] sm:$0xff]
        %v2880 = vld [vmem:[#allocation10 + $0x60] sm:$0xff]
        %v2881 = vld [vmem:[#allocation10 + $0x68] sm:$0xff]
        %v2882 = vld [vmem:[#allocation10 + $0x70] sm:$0xff]
        %v2883 = vld [vmem:[#allocation10 + $0x78] sm:$0xff]
        %v2884 = vld [vmem:[%s6] sm:$0x1]
        %v2886 = vlaneseq
        %v2887 = vshrl.u32 %v2886, 7
        %v2888 = vsub.s32 0, %v2887
        %v2889 = vrot.slane %v2884, %v2888
        %2891 = vmatprep.subr.mxu0 0.0
        %2892 = vmatpush1.msra.mxu0 %v2868
        %2893 = vmatprep.subr.mxu0 0.0
        %2894 = vmatpush1.msra.mxu0 %v2869
        %2895 = vmatprep.subr.mxu0 0.0
        %2896 = vmatpush1.msra.mxu0 %v2870
        %2897 = vmatprep.subr.mxu0 0.0
        %2898 = vmatpush1.msra.mxu0 %v2871
        %2899 = vmatprep.subr.mxu0 0.0
        %2900 = vmatpush1.msra.mxu0 %v2872
        %2901 = vmatprep.subr.mxu0 0.0
        %2902 = vmatpush1.msra.mxu0 %v2873
        %2903 = vmatprep.subr.mxu0 0.0
        %2904 = vmatpush1.msra.mxu0 %v2874
        %2905 = vmatprep.subr.mxu0 0.0
        %2906 = vmatpush1.msra.mxu0 %v2875
        %2907 = vmatprep.subr.mxu0 0.0
        %2908 = vmatpush1.msra.mxu0 %v2876
        %2909 = vmatprep.subr.mxu0 0.0
        %2910 = vmatpush1.msra.mxu0 %v2877
        %2911 = vmatprep.subr.mxu0 0.0
        %2912 = vmatpush1.msra.mxu0 %v2878
        %2913 = vmatprep.subr.mxu0 0.0
        %2914 = vmatpush1.msra.mxu0 %v2879
        %2915 = vmatprep.subr.mxu0 0.0
        %2916 = vmatpush1.msra.mxu0 %v2880
        %2917 = vmatprep.subr.mxu0 0.0
        %2918 = vmatpush1.msra.mxu0 %v2881
        %2919 = vmatprep.subr.mxu0 0.0
        %2920 = vmatpush1.msra.mxu0 %v2882
        %2921 = vmatprep.subr.mxu0 0.0
        %2922 = vmatpush1.msra.mxu0 %v2883
        %2923 = vmatprep.subr.mxu0 0.0
        %2924 = vmatpush1.msra.mxu0 0.0
        %2925 = vmatprep.subr.mxu0 0.0
        %2926 = vmatpush1.msra.mxu0 0.0
        %2927 = vmatprep.subr.mxu0 0.0
        %2928 = vmatpush1.msra.mxu0 0.0
        %2929 = vmatprep.subr.mxu0 0.0
        %2930 = vmatpush1.msra.mxu0 0.0
        %2931 = vmatprep.subr.mxu0 0.0
        %2932 = vmatpush1.msra.mxu0 0.0
        %2933 = vmatprep.subr.mxu0 0.0
        %2934 = vmatpush1.msra.mxu0 0.0
        %2935 = vmatprep.subr.mxu0 0.0
        %2936 = vmatpush1.msra.mxu0 0.0
        %2937 = vmatprep.subr.mxu0 0.0
        %2938 = vmatpush1.msra.mxu0 0.0
        %2939 = vmatprep.subr.mxu0 0.0
        %2940 = vmatpush1.msra.mxu0 0.0
        %2941 = vmatprep.subr.mxu0 0.0
        %2942 = vmatpush1.msra.mxu0 0.0
        %2943 = vmatprep.subr.mxu0 0.0
        %2944 = vmatpush1.msra.mxu0 0.0
        %2945 = vmatprep.subr.mxu0 0.0
        %2946 = vmatpush1.msra.mxu0 0.0
        %2947 = vmatprep.subr.mxu0 0.0
        %2948 = vmatpush1.msra.mxu0 0.0
        %2949 = vmatprep.subr.mxu0 0.0
        %2950 = vmatpush1.msra.mxu0 0.0
        %2951 = vmatprep.subr.mxu0 0.0
        %2952 = vmatpush1.msra.mxu0 0.0
        %2953 = vmatprep.subr.mxu0 0.0
        %2954 = vmatpush1.msra.mxu0 0.0
        %2955 = vmatprep.mubr.f32.mxu0 0.0
        %2956 = vmatmul.mubr.f32.gmra.mrb[0].mxu0 %v2846
        %v2957 = vpop.f32.mrb[0].mxu0
        %v2958 = vadd.f32 %v2889, %v2957
        %v2959 = vpop.f32.mrb[0].mxu0
        %2960 = vmatprep.mubr.f32.mxu0 0.0
        %2961 = vmatmul.mubr.f32.gmra.mrb[0].mxu0 %v2853
        %v2962 = vpop.f32.mrb[0].mxu0
        %v2963 = vadd.f32 %v2889, %v2962
        %v2964 = vpop.f32.mrb[0].mxu0
        %2965 = vmatprep.mubr.f32.mxu0 0.0
        %2966 = vmatmul.mubr.f32.gmra.mrb[0].mxu0 %v2860
        %v2967 = vpop.f32.mrb[0].mxu0
        %v2968 = vadd.f32 %v2889, %v2967
        %v2969 = vpop.f32.mrb[0].mxu0
        %2970 = vmatprep.mubr.f32.mxu0 0.0
        %2971 = vmatmul.mubr.f32.gmra.mrb[0].mxu0 %v2867
        %v2972 = vpop.f32.mrb[0].mxu0
        %v2973 = vadd.f32 %v2889, %v2972
        %v2974 = vpop.f32.mrb[0].mxu0
        %2975 = vdwg.mxu0
        %v2976 = vadd.f32 %v2958, %v505
        %v2977 = vadd.f32 %v2963, %v506
        %v2978 = vadd.f32 %v2968, %v507
        %v2979 = vadd.f32 %v2973, %v508
        %2980 = vadd.xlane.f32.xlu0 %v2976
        %v2981 = vpop.xlane.xlu0 %2980
        %2982 = vadd.xlane.f32.xlu0 %v2977
        %v2983 = vpop.xlane.xlu0 %2982
        %2984 = vadd.xlane.f32.xlu0 %v2978
        %v2985 = vpop.xlane.xlu0 %2984
        %2986 = vadd.xlane.f32.xlu0 %v2979
        %v2987 = vpop.xlane.xlu0 %2986
        %v2988 = vrcp.pop 128.0
        %v2989 = vmul.f32 %v2981, %v2988
        %v2990 = vmul.f32 %v2983, %v2988
        %v2991 = vmul.f32 %v2985, %v2988
        %v2992 = vmul.f32 %v2987, %v2988
        %v2993 = vsub.f32 %v2976, %v2989
        %v2994 = vsub.f32 %v2977, %v2990
        %v2995 = vsub.f32 %v2978, %v2991
        %v2996 = vsub.f32 %v2979, %v2992
        %v2997 = vmul.f32 %v2993, %v2993
        %v2998 = vmul.f32 %v2994, %v2994
        %v2999 = vmul.f32 %v2995, %v2995
        %v3000 = vmul.f32 %v2996, %v2996
        %3001 = vadd.xlane.f32.xlu0 %v2997
        %v3002 = vpop.xlane.xlu0 %3001
        %3003 = vadd.xlane.f32.xlu0 %v2998
        %v3004 = vpop.xlane.xlu0 %3003
        %3005 = vadd.xlane.f32.xlu0 %v2999
        %v3006 = vpop.xlane.xlu0 %3005
        %3007 = vadd.xlane.f32.xlu0 %v3000
        %v3008 = vpop.xlane.xlu0 %3007
        %v3009 = vmul.f32 %v3002, %v2988
        %v3010 = vmul.f32 %v3004, %v2988
        %v3011 = vmul.f32 %v3006, %v2988
        %v3012 = vmul.f32 %v3008, %v2988
        %v3013 = vadd.f32 %v3009, 1e-05
        %v3014 = vadd.f32 %v3010, 1e-05
        %v3015 = vadd.f32 %v3011, 1e-05
        %v3016 = vadd.f32 %v3012, 1e-05
        %v3017 = vrsqrt.pop %v3013
        %v3018 = vrsqrt.pop %v3014
        %v3019 = vrsqrt.pop %v3015
        %v3020 = vrsqrt.pop %v3016
        %v3021 = vmul.f32 %v2993, %v3017
        %v3022 = vmul.f32 %v2994, %v3018
        %v3023 = vmul.f32 %v2995, %v3019
        %v3024 = vmul.f32 %v2996, %v3020
        %v3025 = vld [vmem:[%s7] sm:$0x1]
        %v3027 = vlaneseq
        %v3028 = vshrl.u32 %v3027, 7
        %v3029 = vsub.s32 0, %v3028
        %v3030 = vrot.slane %v3025, %v3029
        %v3032 = vmul.f32 %v3021, %v3030
        %v3033 = vmul.f32 %v3022, %v3030
        %v3034 = vmul.f32 %v3023, %v3030
        %v3035 = vmul.f32 %v3024, %v3030
        %v3036 = vld [vmem:[%s8] sm:$0x1]
        %v3038 = vlaneseq
        %v3039 = vshrl.u32 %v3038, 7
        %v3040 = vsub.s32 0, %v3039
        %v3041 = vrot.slane %v3036, %v3040
        %v3043 = vadd.f32 %v3032, %v3041
        %v3044 = vadd.f32 %v3033, %v3041
        %v3045 = vadd.f32 %v3034, %v3041
        %v3046 = vadd.f32 %v3035, %v3041
        %v3047 = vld [vmem:[#allocation11] sm:$0xff]
        %v3048 = vld [vmem:[#allocation11 + $0x8] sm:$0xff]
        %v3049 = vld [vmem:[#allocation11 + $0x10] sm:$0xff]
        %v3050 = vld [vmem:[#allocation11 + $0x18] sm:$0xff]
        %v3051 = vld [vmem:[#allocation11 + $0x20] sm:$0xff]
        %v3052 = vld [vmem:[#allocation11 + $0x28] sm:$0xff]
        %v3053 = vld [vmem:[#allocation11 + $0x30] sm:$0xff]
        %v3054 = vld [vmem:[#allocation11 + $0x38] sm:$0xff]
        %v3055 = vld [vmem:[#allocation11 + $0x40] sm:$0xff]
        %v3056 = vld [vmem:[#allocation11 + $0x48] sm:$0xff]
        %v3057 = vld [vmem:[#allocation11 + $0x50] sm:$0xff]
        %v3058 = vld [vmem:[#allocation11 + $0x58] sm:$0xff]
        %v3059 = vld [vmem:[#allocation11 + $0x60] sm:$0xff]
        %v3060 = vld [vmem:[#allocation11 + $0x68] sm:$0xff]
        %v3061 = vld [vmem:[#allocation11 + $0x70] sm:$0xff]
        %v3062 = vld [vmem:[#allocation11 + $0x78] sm:$0xff]
        %v3063 = vld [vmem:[%s10] sm:$0x1]
        %v3065 = vlaneseq
        %v3066 = vshrl.u32 %v3065, 7
        %v3067 = vsub.s32 0, %v3066
        %v3068 = vrot.slane %v3063, %v3067
        %3070 = vmatprep.subr.mxu0 0.0
        %3071 = vmatpush1.msra.mxu0 %v3047
        %3072 = vmatprep.subr.mxu0 0.0
        %3073 = vmatpush1.msra.mxu0 %v3048
        %3074 = vmatprep.subr.mxu0 0.0
        %3075 = vmatpush1.msra.mxu0 %v3049
        %3076 = vmatprep.subr.mxu0 0.0
        %3077 = vmatpush1.msra.mxu0 %v3050
        %3078 = vmatprep.subr.mxu0 0.0
        %3079 = vmatpush1.msra.mxu0 %v3051
        %3080 = vmatprep.subr.mxu0 0.0
        %3081 = vmatpush1.msra.mxu0 %v3052
        %3082 = vmatprep.subr.mxu0 0.0
        %3083 = vmatpush1.msra.mxu0 %v3053
        %3084 = vmatprep.subr.mxu0 0.0
        %3085 = vmatpush1.msra.mxu0 %v3054
        %3086 = vmatprep.subr.mxu0 0.0
        %3087 = vmatpush1.msra.mxu0 %v3055
        %3088 = vmatprep.subr.mxu0 0.0
        %3089 = vmatpush1.msra.mxu0 %v3056
        %3090 = vmatprep.subr.mxu0 0.0
        %3091 = vmatpush1.msra.mxu0 %v3057
        %3092 = vmatprep.subr.mxu0 0.0
        %3093 = vmatpush1.msra.mxu0 %v3058
        %3094 = vmatprep.subr.mxu0 0.0
        %3095 = vmatpush1.msra.mxu0 %v3059
        %3096 = vmatprep.subr.mxu0 0.0
        %3097 = vmatpush1.msra.mxu0 %v3060
        %3098 = vmatprep.subr.mxu0 0.0
        %3099 = vmatpush1.msra.mxu0 %v3061
        %3100 = vmatprep.subr.mxu0 0.0
        %3101 = vmatpush1.msra.mxu0 %v3062
        %3102 = vmatprep.subr.mxu0 0.0
        %3103 = vmatpush1.msra.mxu0 0.0
        %3104 = vmatprep.subr.mxu0 0.0
        %3105 = vmatpush1.msra.mxu0 0.0
        %3106 = vmatprep.subr.mxu0 0.0
        %3107 = vmatpush1.msra.mxu0 0.0
        %3108 = vmatprep.subr.mxu0 0.0
        %3109 = vmatpush1.msra.mxu0 0.0
        %3110 = vmatprep.subr.mxu0 0.0
        %3111 = vmatpush1.msra.mxu0 0.0
        %3112 = vmatprep.subr.mxu0 0.0
        %3113 = vmatpush1.msra.mxu0 0.0
        %3114 = vmatprep.subr.mxu0 0.0
        %3115 = vmatpush1.msra.mxu0 0.0
        %3116 = vmatprep.subr.mxu0 0.0
        %3117 = vmatpush1.msra.mxu0 0.0
        %3118 = vmatprep.subr.mxu0 0.0
        %3119 = vmatpush1.msra.mxu0 0.0
        %3120 = vmatprep.subr.mxu0 0.0
        %3121 = vmatpush1.msra.mxu0 0.0
        %3122 = vmatprep.subr.mxu0 0.0
        %3123 = vmatpush1.msra.mxu0 0.0
        %3124 = vmatprep.subr.mxu0 0.0
        %3125 = vmatpush1.msra.mxu0 0.0
        %3126 = vmatprep.subr.mxu0 0.0
        %3127 = vmatpush1.msra.mxu0 0.0
        %3128 = vmatprep.subr.mxu0 0.0
        %3129 = vmatpush1.msra.mxu0 0.0
        %3130 = vmatprep.subr.mxu0 0.0
        %3131 = vmatpush1.msra.mxu0 0.0
        %3132 = vmatprep.subr.mxu0 0.0
        %3133 = vmatpush1.msra.mxu0 0.0
        %3134 = vmatprep.mubr.f32.mxu0 0.0
        %3135 = vmatmul.mubr.f32.gmra.mrb[0].mxu0 %v3043
        %v3136 = vpop.f32.mrb[0].mxu0
        %v3137 = vadd.f32 %v3068, %v3136
        %v3138 = vpop.f32.mrb[0].mxu0
        %3139 = vmatprep.mubr.f32.mxu0 0.0
        %3140 = vmatmul.mubr.f32.gmra.mrb[0].mxu0 %v3044
        %v3141 = vpop.f32.mrb[0].mxu0
        %v3142 = vadd.f32 %v3068, %v3141
        %v3143 = vpop.f32.mrb[0].mxu0
        %3144 = vmatprep.mubr.f32.mxu0 0.0
        %3145 = vmatmul.mubr.f32.gmra.mrb[0].mxu0 %v3045
        %v3146 = vpop.f32.mrb[0].mxu0
        %v3147 = vadd.f32 %v3068, %v3146
        %v3148 = vpop.f32.mrb[0].mxu0
        %3149 = vmatprep.mubr.f32.mxu0 0.0
        %3150 = vmatmul.mubr.f32.gmra.mrb[0].mxu0 %v3046
        %v3151 = vpop.f32.mrb[0].mxu0
        %v3152 = vadd.f32 %v3068, %v3151
        %v3153 = vpop.f32.mrb[0].mxu0
        %3154 = vdwg.mxu0
        %v3155 = vld [vmem:[%s11] sm:$0xff]
        %v3156 = vld [vmem:[%s11 + $0x8] sm:$0xff]
        %v3158 = vsel %vm1711, %v3155, 0
        %v3161 = vsel %vm1711, %v3156, 0
        %3163 = vmatprep.subr.mxu0 0.0
        %3164 = vmatpush1.msra.mxu0 %v3137
        %3165 = vmatprep.subr.mxu0 0.0
        %3166 = vmatpush1.msra.mxu0 %v3142
        %3167 = vmatprep.subr.mxu0 0.0
        %3168 = vmatpush1.msra.mxu0 %v3147
        %3169 = vmatprep.subr.mxu0 0.0
        %3170 = vmatpush1.msra.mxu0 %v3152
        %3171 = vmatprep.subr.mxu0 0.0
        %3172 = vmatpush1.msra.mxu0 0.0
        %3173 = vmatprep.subr.mxu0 0.0
        %3174 = vmatpush1.msra.mxu0 0.0
        %3175 = vmatprep.subr.mxu0 0.0
        %3176 = vmatpush1.msra.mxu0 0.0
        %3177 = vmatprep.subr.mxu0 0.0
        %3178 = vmatpush1.msra.mxu0 0.0
        %3179 = vmatprep.subr.mxu0 0.0
        %3180 = vmatpush1.msra.mxu0 0.0
        %3181 = vmatprep.subr.mxu0 0.0
        %3182 = vmatpush1.msra.mxu0 0.0
        %3183 = vmatprep.subr.mxu0 0.0
        %3184 = vmatpush1.msra.mxu0 0.0
        %3185 = vmatprep.subr.mxu0 0.0
        %3186 = vmatpush1.msra.mxu0 0.0
        %3187 = vmatprep.subr.mxu0 0.0
        %3188 = vmatpush1.msra.mxu0 0.0
        %3189 = vmatprep.subr.mxu0 0.0
        %3190 = vmatpush1.msra.mxu0 0.0
        %3191 = vmatprep.subr.mxu0 0.0
        %3192 = vmatpush1.msra.mxu0 0.0
        %3193 = vmatprep.subr.mxu0 0.0
        %3194 = vmatpush1.msra.mxu0 0.0
        %3195 = vmatprep.subr.mxu0 0.0
        %3196 = vmatpush1.msra.mxu0 0.0
        %3197 = vmatprep.subr.mxu0 0.0
        %3198 = vmatpush1.msra.mxu0 0.0
        %3199 = vmatprep.subr.mxu0 0.0
        %3200 = vmatpush1.msra.mxu0 0.0
        %3201 = vmatprep.subr.mxu0 0.0
        %3202 = vmatpush1.msra.mxu0 0.0
        %3203 = vmatprep.subr.mxu0 0.0
        %3204 = vmatpush1.msra.mxu0 0.0
        %3205 = vmatprep.subr.mxu0 0.0
        %3206 = vmatpush1.msra.mxu0 0.0
        %3207 = vmatprep.subr.mxu0 0.0
        %3208 = vmatpush1.msra.mxu0 0.0
        %3209 = vmatprep.subr.mxu0 0.0
        %3210 = vmatpush1.msra.mxu0 0.0
        %3211 = vmatprep.subr.mxu0 0.0
        %3212 = vmatpush1.msra.mxu0 0.0
        %3213 = vmatprep.subr.mxu0 0.0
        %3214 = vmatpush1.msra.mxu0 0.0
        %3215 = vmatprep.subr.mxu0 0.0
        %3216 = vmatpush1.msra.mxu0 0.0
        %3217 = vmatprep.subr.mxu0 0.0
        %3218 = vmatpush1.msra.mxu0 0.0
        %3219 = vmatprep.subr.mxu0 0.0
        %3220 = vmatpush1.msra.mxu0 0.0
        %3221 = vmatprep.subr.mxu0 0.0
        %3222 = vmatpush1.msra.mxu0 0.0
        %3223 = vmatprep.subr.mxu0 0.0
        %3224 = vmatpush1.msra.mxu0 0.0
        %3225 = vmatprep.subr.mxu0 0.0
        %3226 = vmatpush1.msra.mxu0 0.0
        %3227 = vmatprep.mubr.f32.mxu0 0.0
        %3228 = vmatmul.mubr.f32.gmra.mrb[0].mxu0 %v3158
        %v3229 = vpop.f32.mrb[0].mxu0
        %v3230 = vadd.f32 0.0, %v3229
        %v3231 = vpop.f32.mrb[0].mxu0
        %3232 = vmatprep.mubr.f32.mxu0 0.0
        %3233 = vmatmul.mubr.f32.gmra.mrb[0].mxu0 %v3161
        %v3234 = vpop.f32.mrb[0].mxu0
        %v3235 = vadd.f32 0.0, %v3234
        %v3236 = vpop.f32.mrb[0].mxu0
        %3237 = vdwg.mxu0
        %3238 = vst [vmem:[%s504] sm:$0xff] %v3230
        %3239 = vst [vmem:[%s504 + $0x8] sm:$0xff] %v3235
        %s3240 = sand.u32 %s297, 1
        %s3241 = scalar_lea.sflag [#allocation4], %s3240
        %s3242 = sand.u32 %s297, 1
        %s3243 = smul.addr %s3242, 16
        %s3244 = scalar_lea.vmem [#allocation13], %s3243
        // Predicated region
        $region93: #{tpu_custom_call.1} parent=67 // pred_check
          %p3245 = pneg %p307
        $region94: #{tpu_custom_call.1} parent=67 // pred_check_branch
          %3247 = sbr.rel (%p3245) target = $region96
        $region95: #{tpu_custom_call.1} parent=67 // pred_region
          %s3249 = ssub.s32 256, 256
          %3250 = vsyncadd %s3241, %s3249
          %s3251 = smul.addr %s32, 2
          %s3252 = smul.addr %s3251, 128
          %s3253 = scalar_lea.hbm %s12, %s3252
          %s3254 = sshll.u32 %s3244, 4
          %s3255 = int_to_ptr.vmem [resolvable:$true] %s3254
          %3260 = dma.vmem_to_hbm [thread:$0]  %s3255, 256, %s3253, %s3241, 128, 128, 8
        $region96: #{tpu_custom_call.1} parent=67 // pred_fallthru
          _
      $region68: #{tpu_custom_call.1} parent=5 // pred_fallthru
        _
      %p3261 = scmp.le.s32.totalorder 2, %s27
      // Predicated region
      $region97: #{tpu_custom_call.1} parent=5 // pred_check
        %p3262 = pneg %p3261
      $region98: #{tpu_custom_call.1} parent=5 // pred_check_branch
        %3264 = sbr.rel (%p3262) target = $region100
      $region99: #{tpu_custom_call.1} parent=5 // pred_region
        %s3265 = ssub.s32 %s27, 2
        // Predicated region
        $region101: #{tpu_custom_call.1} parent=99 // pred_check
          %p3266 = pneg %p313
        $region102: #{tpu_custom_call.1} parent=99 // pred_check_branch
          %3268 = sbr.rel (%p3266) target = $region104
        $region103: #{tpu_custom_call.1} parent=99 // pred_region
          %s3269 = sand.u32 %s298, 1
          %s3270 = scalar_lea.sflag [#allocation4], %s3269
          %s3271 = sand.u32 %s298, 1
          %s3272 = smul.addr %s3271, 16
          %s3273 = scalar_lea.vmem [#allocation13], %s3272
          %3274 = dma.done %s3270, 256
        $region104: #{tpu_custom_call.1} parent=99 // pred_fallthru
          _
      $region100: #{tpu_custom_call.1} parent=5 // pred_fallthru
        _
    $region6: #{tpu_custom_call.1} parent=1 // loop_footer
      %s31 = sadd.s32 1, %s27
    $region7: #{tpu_custom_call.1} parent=1 // loop_footer_branch
      %26 = sbr.rel target = $region3
    $region8: #{tpu_custom_call.1} parent=1 // loop_exit
      _
    %3275 = vsyncpa [#allocation3], 1
    %s3276 = scalar_lea.sflag [#allocation3], 1
    %3277 = vsyncpa %s3276, 1
    %3278 = vsyncpa [#allocation6], 1
    %3279 = vsyncpa [#allocation9], 1
    %3280 = vsyncpa [#allocation12], 1
    %3281 = vsyncpa [#allocation4], 1
    %s3282 = scalar_lea.sflag [#allocation4], 1
    %3283 = vsyncpa %s3282, 1

</llo_original>
